<compile_context>
chip_gen: v5e
topology: v5e:2x2
jax: 0.10.0
libtpu: 0.0.40
codegen_flags: <defaults>
</compile_context>

<pallas_src>
import functools

import jax
import jax.numpy as jnp
from jax import lax
from jax.experimental import pallas as pl
from jax.experimental.pallas import tpu as pltpu


def _round_up(x, m):
    return ((x + m - 1) // m) * m


# ----------------------------------------------------------------------------
# 'same' padding (TF-style, matching the wrapper's conv_padding_func)
# ----------------------------------------------------------------------------
def same_pads(in_size, kernel_size, dilation, stride):
    out_size = -(-in_size // stride)  # ceil
    eff_k = (kernel_size - 1) * dilation + 1
    pad_total = max((out_size - 1) * stride + eff_k - in_size, 0)
    lo = pad_total // 2
    hi = pad_total - lo
    return lo, hi, out_size


def _pick_cin_block(cinp):
    # Largest divisor of Cinp that is a multiple of 8 and <= 32 (bounds the
    # stacked-patch scratch to K^3*32 rows per dot).
    for c in (32, 24, 16, 8):
        if cinp % c == 0:
            return c
    return 8


# ----------------------------------------------------------------------------
# Pallas kernel: folded-tap conv over a flat tile of output positions
# ----------------------------------------------------------------------------
def _conv_folded_kernel(x_ref, x_hbm, w_ref, b_ref, o_ref,
                        patch_ref, halo_ref, acc_ref, sem, *,
                        offsets, tl, halo_pad, cin_blk, n_cin_blk):
    n = pl.program_id(0)
    j = pl.program_id(1)

    # Start the (small) halo DMA first so it overlaps with the patch build.
    halo_start = pl.multiple_of((j + 1) * tl, 128)
    halo_cp = pltpu.make_async_copy(
        x_hbm.at[n, :, pl.ds(halo_start, halo_pad)], halo_ref, sem)
    halo_cp.start()

    halo_ready = False
    for cb in range(n_cin_blk):
        c0 = cb * cin_blk

        # Patch rows sourced from the auto-pipelined main tile.
        for k, off in enumerate(offsets):
            r0 = k * cin_blk
            mlen = max(0, tl - off)
            if mlen > 0:
                patch_ref[r0:r0 + cin_blk, 0:mlen] = \
                    x_ref[0, c0:c0 + cin_blk, off:off + mlen]

        if not halo_ready:
            halo_cp.wait()
            halo_ready = True

        # Patch tail columns sourced from the halo window.
        for k, off in enumerate(offsets):
            r0 = k * cin_blk
            mlen = max(0, tl - off)
            hlen = tl - mlen
            if hlen > 0:
                h0 = off + mlen - tl       # 0 when off <= tl
                patch_ref[r0:r0 + cin_blk, mlen:tl] = \
                    halo_ref[c0:c0 + cin_blk, h0:h0 + hlen]

        # One deep-contraction MXU matmul per channel block.
        part = jnp.dot(w_ref[cb], patch_ref[...],
                       preferred_element_type=jnp.float32)

        if n_cin_blk == 1:
            o_ref[0, :, :] = (part + b_ref[...]).astype(o_ref.dtype)
        elif cb == 0:
            acc_ref[...] = part
        elif cb < n_cin_blk - 1:
            acc_ref[...] = acc_ref[...] + part
        else:
            o_ref[0, :, :] = (acc_ref[...] + part + b_ref[...]).astype(o_ref.dtype)


# ----------------------------------------------------------------------------
# Conv3d forward (padding='same' or 'valid'), groups=1
# ----------------------------------------------------------------------------
def conv3d_pallas(x, weight, bias=None, *, kernel_size=3, dilation=1, stride=1,
                  padding="same", groups=1, tile_l=4096, compute_dtype=None,
                  out_dtype=None, vmem_budget_bytes=48 * 1024 * 1024):
    """x: (N, Cin, D, H, W); weight: (Cout, Cin, K, K, K); bias: (Cout,) or None."""
    if groups != 1:
        # TODO(synk): grouped conv (groups>1) not implemented in the fused kernel.
        raise NotImplementedError("groups != 1 not supported")
    # TODO(synk): mode='2d' (nn.Conv2d branch of the wrapper) not implemented.

    orig_dtype = x.dtype
    if out_dtype is None:
        out_dtype = orig_dtype

    N, Cin, D, H, W = x.shape
    Cout = weight.shape[0]
    K, dil, s = kernel_size, dilation, stride
    eff = (K - 1) * dil + 1
    KKK = K * K * K

    if padding == "same":
        pd_lo, pd_hi, Do = same_pads(D, K, dil, s)
        ph_lo, ph_hi, Ho = same_pads(H, K, dil, s)
        pw_lo, pw_hi, Wo = same_pads(W, K, dil, s)
    elif padding == "valid":
        pd_lo = pd_hi = ph_lo = ph_hi = pw_lo = pw_hi = 0
        Do = (D - eff) // s + 1
        Ho = (H - eff) // s + 1
        Wo = (W - eff) // s + 1
    else:
        raise ValueError(padding)

    Dp, Hp, Wp = D + pd_lo + pd_hi, H + ph_lo + ph_hi, W + pw_lo + pw_hi
    HpWp = Hp * Wp
    Lp = Dp * HpWp

    # Channel padding to a sublane multiple -> aligned patch-row stores.
    Cinp = _round_up(Cin, 8)
    cin_blk = _pick_cin_block(Cinp)
    n_cin_blk = Cinp // cin_blk

    # Flat tap offsets of the stride-1 conv over the padded grid.
    offsets = tuple((kd * dil) * HpWp + (kh * dil) * Wp + (kw * dil)
                    for kd in range(K) for kh in range(K) for kw in range(K))
    halo = max(offsets)
    halo_pad = _round_up(max(halo, 1), 128)

    cdt = jnp.dtype(compute_dtype) if compute_dtype is not None else jnp.dtype(orig_dtype)
    isz = cdt.itemsize
    osz = jnp.dtype(out_dtype).itemsize

    def est_vmem(tl_):
        return (2 * Cinp * tl_ * isz                          # main input tile, dbl-buffered
                + 2 * Cout * tl_ * osz                        # output tile, dbl-buffered
                + 2 * n_cin_blk * Cout * KKK * cin_blk * isz  # resident weights
                + KKK * cin_blk * tl_ * isz                   # stacked patch scratch
                + Cinp * halo_pad * isz                       # halo scratch
                + Cout * tl_ * 4                              # f32 accumulator scratch
                + (1 << 20))                                  # slack

    # Large lane-dense tiles, shrunk to fit the VMEM budget (v7x-safe default).
    tl = _round_up(max(128, min(tile_l, Lp)), 128)
    while tl > 128 and est_vmem(tl) > vmem_budget_bytes:
        tl = max(128, _round_up(tl // 2, 128))

    n_blk = -(-Lp // tl)
    need = n_blk * tl + halo_pad
    # Extend the D padding so a single jnp.pad also covers the flat tail + halo.
    Dp_ext = -(-need // HpWp)

    # Single host-side pad (channel pad + spatial 'same' pad + D extension),
    # then a free reshape to the channel-major flat layout.
    xc = x.astype(cdt) if cdt != jnp.dtype(orig_dtype) else x
    xp = jnp.pad(xc, ((0, 0), (0, Cinp - Cin),
                      (pd_lo, pd_hi + (Dp_ext - Dp)),
                      (ph_lo, ph_hi), (pw_lo, pw_hi)))
    xf = xp.reshape(N, Cinp, Dp_ext * HpWp)

    # weight (Cout, Cin, K, K, K) -> (n_cin_blk, Cout, KKK*cin_blk); column order
    # is (tap major, channel-in-block minor) to match the patch row layout.
    w_p = jnp.pad(weight, ((0, 0), (0, Cinp - Cin), (0, 0), (0, 0), (0, 0)))
    w_t = w_p.transpose(0, 2, 3, 4, 1).reshape(Cout, KKK, Cinp)
    w_r = (w_t.reshape(Cout, KKK, n_cin_blk, cin_blk)
              .transpose(2, 0, 1, 3)
              .reshape(n_cin_blk, Cout, KKK * cin_blk)).astype(cdt)

    if bias is None:
        b2 = jnp.zeros((Cout, 1), jnp.float32)
    else:
        b2 = bias.astype(jnp.float32).reshape(Cout, 1)

    kernel = functools.partial(
        _conv_folded_kernel, offsets=offsets, tl=tl, halo_pad=halo_pad,
        cin_blk=cin_blk, n_cin_blk=n_cin_blk)

    cost = pl.CostEstimate(
        flops=2 * N * n_blk * tl * KKK * Cinp * Cout,
        transcendentals=0,
        bytes_accessed=(N * Cinp * (Dp_ext * HpWp) * isz
                        + N * Cinp * n_blk * halo_pad * isz
                        + int(w_r.size) * isz
                        + N * Cout * n_blk * tl * osz))

    vmem_limit = int(min(max(2 * est_vmem(tl), 32 * 1024 * 1024),
                         60 * 1024 * 1024))

    out = pl.pallas_call(
        kernel,
        out_shape=jax.ShapeDtypeStruct((N, Cout, n_blk * tl), out_dtype),
        grid_spec=pltpu.PrefetchScalarGridSpec(
            num_scalar_prefetch=0,
            grid=(N, n_blk),
            in_specs=[
                # main flat tile (auto-pipelined, lane-dense)
                pl.BlockSpec((1, Cinp, tl), lambda n, j: (n, 0, j)),
                # same array again as a raw HBM ref for the manual halo DMA
                pl.BlockSpec(memory_space=pl.ANY),
                # full weights, resident in VMEM (K^3 * Cin * Cout is small)
                pl.BlockSpec((n_cin_blk, Cout, KKK * cin_blk),
                             lambda n, j: (0, 0, 0)),
                # bias
                pl.BlockSpec((Cout, 1), lambda n, j: (0, 0)),
            ],
            out_specs=pl.BlockSpec((1, Cout, tl), lambda n, j: (n, 0, j)),
            scratch_shapes=[
                pltpu.VMEM((KKK * cin_blk, tl), cdt),   # stacked patch
                pltpu.VMEM((Cinp, halo_pad), cdt),      # halo window
                pltpu.VMEM((Cout, tl), jnp.float32),    # f32 accumulator
                pltpu.SemaphoreType.DMA,                # halo DMA semaphore
            ],
        ),
        compiler_params=pltpu.CompilerParams(
            dimension_semantics=("parallel", "parallel"),
            vmem_limit_bytes=vmem_limit),
        cost_estimate=cost,
    )(xf, xf, w_r, b2)

    # Output is already channel-major (NC then flat spatial) -> no transpose.
    out = out[:, :, :Lp].reshape(N, Cout, Dp, Hp, Wp)
    out = out[:, :,
              0:(Do - 1) * s + 1:s,
              0:(Ho - 1) * s + 1:s,
              0:(Wo - 1) * s + 1:s]
    return out


# ----------------------------------------------------------------------------
# Reference (pure JAX) for verification
# ----------------------------------------------------------------------------
def conv3d_ref(x, weight, bias, *, kernel_size=3, dilation=1, stride=1,
               padding="same"):
    K, dil, s = kernel_size, dilation, stride
    if padding == "same":
        pads = [same_pads(n, K, dil, s)[:2] for n in x.shape[2:]]
    else:
        pads = [(0, 0)] * 3
    y = lax.conv_general_dilated(
        x, weight,
        window_strides=(s, s, s),
        padding=pads,
        rhs_dilation=(dil, dil, dil),
        dimension_numbers=("NCDHW", "OIDHW", "NCDHW"),
    )
    if bias is not None:
        y = y + bias.reshape(1, -1, 1, 1, 1)
    return y


if __name__ == "__main__":
    # Small shapes consistent with the module: Conv(in=4, out=8, k=3, padding='same', mode='3d')
    N, Cin, Cout, D, H, W, K = 2, 4, 8, 8, 8, 8, 3

    key = jax.random.PRNGKey(0)
    kx, kw, kb = jax.random.split(key, 3)
    x = jax.random.normal(kx, (N, Cin, D, H, W), dtype=jnp.float32)
    weight = jax.random.normal(kw, (Cout, Cin, K, K, K), dtype=jnp.float32) * 0.1
    bias = jax.random.normal(kb, (Cout,), dtype=jnp.float32) * 0.1

    # Primary check: default config (stride=1, dilation=1, 'same', f32 compute).
    fwd = jax.jit(functools.partial(conv3d_pallas, kernel_size=K, dilation=1,
                                    stride=1, padding="same"))
    y = fwd(x, weight, bias)
    jax.block_until_ready(y)
    y_ref = conv3d_ref(x, weight, bias, kernel_size=K)
    assert y.shape == (N, Cout, D, H, W), y.shape
    err = float(jnp.max(jnp.abs(y - y_ref)))
    assert jnp.allclose(y, y_ref, atol=1e-4, rtol=1e-4), err

    # Dilation=2, 'same'
    y2 = jax.jit(functools.partial(conv3d_pallas, kernel_size=K, dilation=2,
                                   stride=1, padding="same"))(x, weight, bias)
    y2_ref = conv3d_ref(x, weight, bias, kernel_size=K, dilation=2)
    assert y2.shape == y2_ref.shape, (y2.shape, y2_ref.shape)
    err2 = float(jnp.max(jnp.abs(y2 - y2_ref)))
    assert jnp.allclose(y2, y2_ref, atol=1e-4, rtol=1e-4), err2

    # Stride=2, 'same'
    y3 = jax.jit(functools.partial(conv3d_pallas, kernel_size=K, dilation=1,
                                   stride=2, padding="same"))(x, weight, bias)
    y3_ref = conv3d_ref(x, weight, bias, kernel_size=K, stride=2)
    assert y3.shape == y3_ref.shape, (y3.shape, y3_ref.shape)
    err3 = float(jnp.max(jnp.abs(y3 - y3_ref)))
    assert jnp.allclose(y3, y3_ref, atol=1e-4, rtol=1e-4), err3

    # 'valid' padding
    y4 = jax.jit(functools.partial(conv3d_pallas, kernel_size=K,
                                   padding="valid"))(x, weight, bias)
    y4_ref = conv3d_ref(x, weight, bias, kernel_size=K, padding="valid")
    assert y4.shape == y4_ref.shape, (y4.shape, y4_ref.shape)
    err4 = float(jnp.max(jnp.abs(y4 - y4_ref)))
    assert jnp.allclose(y4, y4_ref, atol=1e-4, rtol=1e-4), err4

    # bf16 MXU path (recommended on v6e/v7x): bf16 inputs/weights, f32 accumulate.
    y5 = jax.jit(functools.partial(conv3d_pallas, kernel_size=K,
                                   compute_dtype=jnp.bfloat16))(x, weight, bias)
    err5 = float(jnp.max(jnp.abs(y5 - y_ref)))
    assert jnp.allclose(y5, y_ref, atol=1e-1, rtol=1e-1), err5

    print("KERNEL_OK")
</pallas_src>

<mosaic_0001>
module attributes {stable_mosaic.version = 11 : i64} {
  func.func @_conv_folded_kernel(%arg0: i32, %arg1: i32, %arg2: memref<1x8x1024xf32, #tpu.memory_space<vmem>>, %arg3: memref<2x8x1300xf32, #tpu.memory_space<any>>, %arg4: memref<1x8x216xf32, #tpu.memory_space<vmem>>, %arg5: memref<8x1xf32, #tpu.memory_space<vmem>>, %arg6: memref<1x8x1024xf32, #tpu.memory_space<vmem>>, %arg7: memref<216x1024xf32, #tpu.memory_space<vmem>>, %arg8: memref<8x256xf32, #tpu.memory_space<vmem>>, %arg9: memref<8x1024xf32, #tpu.memory_space<vmem>>, %arg10: memref<!tpu.dma_semaphore, #tpu.memory_space<semaphore_mem>>) attributes {dimension_semantics = [#tpu.dimension_semantics<parallel>, #tpu.dimension_semantics<parallel>], iteration_bounds = array<i64: 2, 1>, scalar_prefetch = 0 : i64, scratch_operands = 4 : i64, tpu.core_type = #tpu.core_type<tc>, window_params = [{transform_indices = @transform_0, window_bounds = array<i64: 1, 8, 1024>}, {}, {pipeline_mode = #tpu.pipeline_mode<synchronous>, transform_indices = @transform_2, window_bounds = array<i64: 1, 8, 216>}, {pipeline_mode = #tpu.pipeline_mode<synchronous>, transform_indices = @transform_3, window_bounds = array<i64: 8, 1>}, {transform_indices = @transform_4, window_bounds = array<i64: 1, 8, 1024>}]} {
    %c1_i32 = arith.constant 1 : i32
    %0 = arith.addi %arg1, %c1_i32 : i32
    %c1024_i32 = arith.constant 1024 : i32
    %1 = arith.muli %0, %c1024_i32 : i32
    %2 = tpu.assume_multiple %1, 128 : i32
    %c0_i32 = arith.constant 0 : i32
    %3 = tpu.memref_slice %arg3[%arg0, %c0_i32, %2] : memref<2x8x1300xf32, #tpu.memory_space<any>> -> memref<1x8x256xf32, #tpu.memory_space<any>>
    %4 = tpu.memref_squeeze %3 : memref<1x8x256xf32, #tpu.memory_space<any>> -> memref<8x256xf32, #tpu.memory_space<any>>
    tpu.enqueue_dma source(%4 : memref<8x256xf32, #tpu.memory_space<any>>) target(%arg8 : memref<8x256xf32, #tpu.memory_space<vmem>>) target_semaphore(%arg10 : memref<!tpu.dma_semaphore, #tpu.memory_space<semaphore_mem>>)
    %c0 = arith.constant 0 : index
    %c0_0 = arith.constant 0 : index
    %c0_1 = arith.constant 0 : index
    %5 = vector.load %arg2[%c0, %c0_0, %c0_1] : memref<1x8x1024xf32, #tpu.memory_space<vmem>>, vector<1x8x1024xf32>
    %6 = vector.shape_cast %5 : vector<1x8x1024xf32> to vector<8x1024xf32>
    %c0_2 = arith.constant 0 : index
    %c0_3 = arith.constant 0 : index
    %7 = vector.load %arg7[%c0_2, %c0_3] : memref<216x1024xf32, #tpu.memory_space<vmem>>, vector<8x1024xf32>
    tpu.vector_store %arg7[%c0_2, %c0_3], %6 {strides = array<i32>} : memref<216x1024xf32, #tpu.memory_space<vmem>>, vector<8x1024xf32>,
    %c0_4 = arith.constant 0 : index
    %c0_5 = arith.constant 0 : index
    %c1 = arith.constant 1 : index
    %8 = vector.load %arg2[%c0_4, %c0_5, %c1] : memref<1x8x1024xf32, #tpu.memory_space<vmem>>, vector<1x8x1023xf32>
    %9 = vector.shape_cast %8 : vector<1x8x1023xf32> to vector<8x1023xf32>
    %c8 = arith.constant 8 : index
    %c0_6 = arith.constant 0 : index
    %10 = vector.load %arg7[%c8, %c0_6] : memref<216x1024xf32, #tpu.memory_space<vmem>>, vector<8x1023xf32>
    tpu.vector_store %arg7[%c8, %c0_6], %9 {strides = array<i32>} : memref<216x1024xf32, #tpu.memory_space<vmem>>, vector<8x1023xf32>,
    %c0_7 = arith.constant 0 : index
    %c0_8 = arith.constant 0 : index
    %c2 = arith.constant 2 : index
    %11 = vector.load %arg2[%c0_7, %c0_8, %c2] : memref<1x8x1024xf32, #tpu.memory_space<vmem>>, vector<1x8x1022xf32>
    %12 = vector.shape_cast %11 : vector<1x8x1022xf32> to vector<8x1022xf32>
    %c16 = arith.constant 16 : index
    %c0_9 = arith.constant 0 : index
    %13 = vector.load %arg7[%c16, %c0_9] : memref<216x1024xf32, #tpu.memory_space<vmem>>, vector<8x1022xf32>
    tpu.vector_store %arg7[%c16, %c0_9], %12 {strides = array<i32>} : memref<216x1024xf32, #tpu.memory_space<vmem>>, vector<8x1022xf32>,
    %c0_10 = arith.constant 0 : index
    %c0_11 = arith.constant 0 : index
    %c10 = arith.constant 10 : index
    %14 = vector.load %arg2[%c0_10, %c0_11, %c10] : memref<1x8x1024xf32, #tpu.memory_space<vmem>>, vector<1x8x1014xf32>
    %15 = vector.shape_cast %14 : vector<1x8x1014xf32> to vector<8x1014xf32>
    %c24 = arith.constant 24 : index
    %c0_12 = arith.constant 0 : index
    %16 = vector.load %arg7[%c24, %c0_12] : memref<216x1024xf32, #tpu.memory_space<vmem>>, vector<8x1014xf32>
    tpu.vector_store %arg7[%c24, %c0_12], %15 {strides = array<i32>} : memref<216x1024xf32, #tpu.memory_space<vmem>>, vector<8x1014xf32>,
    %c0_13 = arith.constant 0 : index
    %c0_14 = arith.constant 0 : index
    %c11 = arith.constant 11 : index
    %17 = vector.load %arg2[%c0_13, %c0_14, %c11] : memref<1x8x1024xf32, #tpu.memory_space<vmem>>, vector<1x8x1013xf32>
    %18 = vector.shape_cast %17 : vector<1x8x1013xf32> to vector<8x1013xf32>
    %c32 = arith.constant 32 : index
    %c0_15 = arith.constant 0 : index
    %19 = vector.load %arg7[%c32, %c0_15] : memref<216x1024xf32, #tpu.memory_space<vmem>>, vector<8x1013xf32>
    tpu.vector_store %arg7[%c32, %c0_15], %18 {strides = array<i32>} : memref<216x1024xf32, #tpu.memory_space<vmem>>, vector<8x1013xf32>,
    %c0_16 = arith.constant 0 : index
    %c0_17 = arith.constant 0 : index
    %c12 = arith.constant 12 : index
    %20 = vector.load %arg2[%c0_16, %c0_17, %c12] : memref<1x8x1024xf32, #tpu.memory_space<vmem>>, vector<1x8x1012xf32>
    %21 = vector.shape_cast %20 : vector<1x8x1012xf32> to vector<8x1012xf32>
    %c40 = arith.constant 40 : index
    %c0_18 = arith.constant 0 : index
    %22 = vector.load %arg7[%c40, %c0_18] : memref<216x1024xf32, #tpu.memory_space<vmem>>, vector<8x1012xf32>
    tpu.vector_store %arg7[%c40, %c0_18], %21 {strides = array<i32>} : memref<216x1024xf32, #tpu.memory_space<vmem>>, vector<8x1012xf32>,
    %c0_19 = arith.constant 0 : index
    %c0_20 = arith.constant 0 : index
    %c20 = arith.constant 20 : index
    %23 = vector.load %arg2[%c0_19, %c0_20, %c20] : memref<1x8x1024xf32, #tpu.memory_space<vmem>>, vector<1x8x1004xf32>
    %24 = vector.shape_cast %23 : vector<1x8x1004xf32> to vector<8x1004xf32>
    %c48 = arith.constant 48 : index
    %c0_21 = arith.constant 0 : index
    %25 = vector.load %arg7[%c48, %c0_21] : memref<216x1024xf32, #tpu.memory_space<vmem>>, vector<8x1004xf32>
    tpu.vector_store %arg7[%c48, %c0_21], %24 {strides = array<i32>} : memref<216x1024xf32, #tpu.memory_space<vmem>>, vector<8x1004xf32>,
    %c0_22 = arith.constant 0 : index
    %c0_23 = arith.constant 0 : index
    %c21 = arith.constant 21 : index
    %26 = vector.load %arg2[%c0_22, %c0_23, %c21] : memref<1x8x1024xf32, #tpu.memory_space<vmem>>, vector<1x8x1003xf32>
    %27 = vector.shape_cast %26 : vector<1x8x1003xf32> to vector<8x1003xf32>
    %c56 = arith.constant 56 : index
    %c0_24 = arith.constant 0 : index
    %28 = vector.load %arg7[%c56, %c0_24] : memref<216x1024xf32, #tpu.memory_space<vmem>>, vector<8x1003xf32>
    tpu.vector_store %arg7[%c56, %c0_24], %27 {strides = array<i32>} : memref<216x1024xf32, #tpu.memory_space<vmem>>, vector<8x1003xf32>,
    %c0_25 = arith.constant 0 : index
    %c0_26 = arith.constant 0 : index
    %c22 = arith.constant 22 : index
    %29 = vector.load %arg2[%c0_25, %c0_26, %c22] : memref<1x8x1024xf32, #tpu.memory_space<vmem>>, vector<1x8x1002xf32>
    %30 = vector.shape_cast %29 : vector<1x8x1002xf32> to vector<8x1002xf32>
    %c64 = arith.constant 64 : index
    %c0_27 = arith.constant 0 : index
    %31 = vector.load %arg7[%c64, %c0_27] : memref<216x1024xf32, #tpu.memory_space<vmem>>, vector<8x1002xf32>
    tpu.vector_store %arg7[%c64, %c0_27], %30 {strides = array<i32>} : memref<216x1024xf32, #tpu.memory_space<vmem>>, vector<8x1002xf32>,
    %c0_28 = arith.constant 0 : index
    %c0_29 = arith.constant 0 : index
    %c100 = arith.constant 100 : index
    %32 = vector.load %arg2[%c0_28, %c0_29, %c100] : memref<1x8x1024xf32, #tpu.memory_space<vmem>>, vector<1x8x924xf32>
    %33 = vector.shape_cast %32 : vector<1x8x924xf32> to vector<8x924xf32>
    %c72 = arith.constant 72 : index
    %c0_30 = arith.constant 0 : index
    %34 = vector.load %arg7[%c72, %c0_30] : memref<216x1024xf32, #tpu.memory_space<vmem>>, vector<8x924xf32>
    tpu.vector_store %arg7[%c72, %c0_30], %33 {strides = array<i32>} : memref<216x1024xf32, #tpu.memory_space<vmem>>, vector<8x924xf32>,
    %c0_31 = arith.constant 0 : index
    %c0_32 = arith.constant 0 : index
    %c101 = arith.constant 101 : index
    %35 = vector.load %arg2[%c0_31, %c0_32, %c101] : memref<1x8x1024xf32, #tpu.memory_space<vmem>>, vector<1x8x923xf32>
    %36 = vector.shape_cast %35 : vector<1x8x923xf32> to vector<8x923xf32>
    %c80 = arith.constant 80 : index
    %c0_33 = arith.constant 0 : index
    %37 = vector.load %arg7[%c80, %c0_33] : memref<216x1024xf32, #tpu.memory_space<vmem>>, vector<8x923xf32>
    tpu.vector_store %arg7[%c80, %c0_33], %36 {strides = array<i32>} : memref<216x1024xf32, #tpu.memory_space<vmem>>, vector<8x923xf32>,
    %c0_34 = arith.constant 0 : index
    %c0_35 = arith.constant 0 : index
    %c102 = arith.constant 102 : index
    %38 = vector.load %arg2[%c0_34, %c0_35, %c102] : memref<1x8x1024xf32, #tpu.memory_space<vmem>>, vector<1x8x922xf32>
    %39 = vector.shape_cast %38 : vector<1x8x922xf32> to vector<8x922xf32>
    %c88 = arith.constant 88 : index
    %c0_36 = arith.constant 0 : index
    %40 = vector.load %arg7[%c88, %c0_36] : memref<216x1024xf32, #tpu.memory_space<vmem>>, vector<8x922xf32>
    tpu.vector_store %arg7[%c88, %c0_36], %39 {strides = array<i32>} : memref<216x1024xf32, #tpu.memory_space<vmem>>, vector<8x922xf32>,
    %c0_37 = arith.constant 0 : index
    %c0_38 = arith.constant 0 : index
    %c110 = arith.constant 110 : index
    %41 = vector.load %arg2[%c0_37, %c0_38, %c110] : memref<1x8x1024xf32, #tpu.memory_space<vmem>>, vector<1x8x914xf32>
    %42 = vector.shape_cast %41 : vector<1x8x914xf32> to vector<8x914xf32>
    %c96 = arith.constant 96 : index
    %c0_39 = arith.constant 0 : index
    %43 = vector.load %arg7[%c96, %c0_39] : memref<216x1024xf32, #tpu.memory_space<vmem>>, vector<8x914xf32>
    tpu.vector_store %arg7[%c96, %c0_39], %42 {strides = array<i32>} : memref<216x1024xf32, #tpu.memory_space<vmem>>, vector<8x914xf32>,
    %c0_40 = arith.constant 0 : index
    %c0_41 = arith.constant 0 : index
    %c111 = arith.constant 111 : index
    %44 = vector.load %arg2[%c0_40, %c0_41, %c111] : memref<1x8x1024xf32, #tpu.memory_space<vmem>>, vector<1x8x913xf32>
    %45 = vector.shape_cast %44 : vector<1x8x913xf32> to vector<8x913xf32>
    %c104 = arith.constant 104 : index
    %c0_42 = arith.constant 0 : index
    %46 = vector.load %arg7[%c104, %c0_42] : memref<216x1024xf32, #tpu.memory_space<vmem>>, vector<8x913xf32>
    tpu.vector_store %arg7[%c104, %c0_42], %45 {strides = array<i32>} : memref<216x1024xf32, #tpu.memory_space<vmem>>, vector<8x913xf32>,
    %c0_43 = arith.constant 0 : index
    %c0_44 = arith.constant 0 : index
    %c112 = arith.constant 112 : index
    %47 = vector.load %arg2[%c0_43, %c0_44, %c112] : memref<1x8x1024xf32, #tpu.memory_space<vmem>>, vector<1x8x912xf32>
    %48 = vector.shape_cast %47 : vector<1x8x912xf32> to vector<8x912xf32>
    %c112_45 = arith.constant 112 : index
    %c0_46 = arith.constant 0 : index
    %49 = vector.load %arg7[%c112_45, %c0_46] : memref<216x1024xf32, #tpu.memory_space<vmem>>, vector<8x912xf32>
    tpu.vector_store %arg7[%c112_45, %c0_46], %48 {strides = array<i32>} : memref<216x1024xf32, #tpu.memory_space<vmem>>, vector<8x912xf32>,
    %c0_47 = arith.constant 0 : index
    %c0_48 = arith.constant 0 : index
    %c120 = arith.constant 120 : index
    %50 = vector.load %arg2[%c0_47, %c0_48, %c120] : memref<1x8x1024xf32, #tpu.memory_space<vmem>>, vector<1x8x904xf32>
    %51 = vector.shape_cast %50 : vector<1x8x904xf32> to vector<8x904xf32>
    %c120_49 = arith.constant 120 : index
    %c0_50 = arith.constant 0 : index
    %52 = vector.load %arg7[%c120_49, %c0_50] : memref<216x1024xf32, #tpu.memory_space<vmem>>, vector<8x904xf32>
    tpu.vector_store %arg7[%c120_49, %c0_50], %51 {strides = array<i32>} : memref<216x1024xf32, #tpu.memory_space<vmem>>, vector<8x904xf32>,
    %c0_51 = arith.constant 0 : index
    %c0_52 = arith.constant 0 : index
    %c121 = arith.constant 121 : index
    %53 = vector.load %arg2[%c0_51, %c0_52, %c121] : memref<1x8x1024xf32, #tpu.memory_space<vmem>>, vector<1x8x903xf32>
    %54 = vector.shape_cast %53 : vector<1x8x903xf32> to vector<8x903xf32>
    %c128 = arith.constant 128 : index
    %c0_53 = arith.constant 0 : index
    %55 = vector.load %arg7[%c128, %c0_53] : memref<216x1024xf32, #tpu.memory_space<vmem>>, vector<8x903xf32>
    tpu.vector_store %arg7[%c128, %c0_53], %54 {strides = array<i32>} : memref<216x1024xf32, #tpu.memory_space<vmem>>, vector<8x903xf32>,
    %c0_54 = arith.constant 0 : index
    %c0_55 = arith.constant 0 : index
    %c122 = arith.constant 122 : index
    %56 = vector.load %arg2[%c0_54, %c0_55, %c122] : memref<1x8x1024xf32, #tpu.memory_space<vmem>>, vector<1x8x902xf32>
    %57 = vector.shape_cast %56 : vector<1x8x902xf32> to vector<8x902xf32>
    %c136 = arith.constant 136 : index
    %c0_56 = arith.constant 0 : index
    %58 = vector.load %arg7[%c136, %c0_56] : memref<216x1024xf32, #tpu.memory_space<vmem>>, vector<8x902xf32>
    tpu.vector_store %arg7[%c136, %c0_56], %57 {strides = array<i32>} : memref<216x1024xf32, #tpu.memory_space<vmem>>, vector<8x902xf32>,
    %c0_57 = arith.constant 0 : index
    %c0_58 = arith.constant 0 : index
    %c200 = arith.constant 200 : index
    %59 = vector.load %arg2[%c0_57, %c0_58, %c200] : memref<1x8x1024xf32, #tpu.memory_space<vmem>>, vector<1x8x824xf32>
    %60 = vector.shape_cast %59 : vector<1x8x824xf32> to vector<8x824xf32>
    %c144 = arith.constant 144 : index
    %c0_59 = arith.constant 0 : index
    %61 = vector.load %arg7[%c144, %c0_59] : memref<216x1024xf32, #tpu.memory_space<vmem>>, vector<8x824xf32>
    tpu.vector_store %arg7[%c144, %c0_59], %60 {strides = array<i32>} : memref<216x1024xf32, #tpu.memory_space<vmem>>, vector<8x824xf32>,
    %c0_60 = arith.constant 0 : index
    %c0_61 = arith.constant 0 : index
    %c201 = arith.constant 201 : index
    %62 = vector.load %arg2[%c0_60, %c0_61, %c201] : memref<1x8x1024xf32, #tpu.memory_space<vmem>>, vector<1x8x823xf32>
    %63 = vector.shape_cast %62 : vector<1x8x823xf32> to vector<8x823xf32>
    %c152 = arith.constant 152 : index
    %c0_62 = arith.constant 0 : index
    %64 = vector.load %arg7[%c152, %c0_62] : memref<216x1024xf32, #tpu.memory_space<vmem>>, vector<8x823xf32>
    tpu.vector_store %arg7[%c152, %c0_62], %63 {strides = array<i32>} : memref<216x1024xf32, #tpu.memory_space<vmem>>, vector<8x823xf32>,
    %c0_63 = arith.constant 0 : index
    %c0_64 = arith.constant 0 : index
    %c202 = arith.constant 202 : index
    %65 = vector.load %arg2[%c0_63, %c0_64, %c202] : memref<1x8x1024xf32, #tpu.memory_space<vmem>>, vector<1x8x822xf32>
    %66 = vector.shape_cast %65 : vector<1x8x822xf32> to vector<8x822xf32>
    %c160 = arith.constant 160 : index
    %c0_65 = arith.constant 0 : index
    %67 = vector.load %arg7[%c160, %c0_65] : memref<216x1024xf32, #tpu.memory_space<vmem>>, vector<8x822xf32>
    tpu.vector_store %arg7[%c160, %c0_65], %66 {strides = array<i32>} : memref<216x1024xf32, #tpu.memory_space<vmem>>, vector<8x822xf32>,
    %c0_66 = arith.constant 0 : index
    %c0_67 = arith.constant 0 : index
    %c210 = arith.constant 210 : index
    %68 = vector.load %arg2[%c0_66, %c0_67, %c210] : memref<1x8x1024xf32, #tpu.memory_space<vmem>>, vector<1x8x814xf32>
    %69 = vector.shape_cast %68 : vector<1x8x814xf32> to vector<8x814xf32>
    %c168 = arith.constant 168 : index
    %c0_68 = arith.constant 0 : index
    %70 = vector.load %arg7[%c168, %c0_68] : memref<216x1024xf32, #tpu.memory_space<vmem>>, vector<8x814xf32>
    tpu.vector_store %arg7[%c168, %c0_68], %69 {strides = array<i32>} : memref<216x1024xf32, #tpu.memory_space<vmem>>, vector<8x814xf32>,
    %c0_69 = arith.constant 0 : index
    %c0_70 = arith.constant 0 : index
    %c211 = arith.constant 211 : index
    %71 = vector.load %arg2[%c0_69, %c0_70, %c211] : memref<1x8x1024xf32, #tpu.memory_space<vmem>>, vector<1x8x813xf32>
    %72 = vector.shape_cast %71 : vector<1x8x813xf32> to vector<8x813xf32>
    %c176 = arith.constant 176 : index
    %c0_71 = arith.constant 0 : index
    %73 = vector.load %arg7[%c176, %c0_71] : memref<216x1024xf32, #tpu.memory_space<vmem>>, vector<8x813xf32>
    tpu.vector_store %arg7[%c176, %c0_71], %72 {strides = array<i32>} : memref<216x1024xf32, #tpu.memory_space<vmem>>, vector<8x813xf32>,
    %c0_72 = arith.constant 0 : index
    %c0_73 = arith.constant 0 : index
    %c212 = arith.constant 212 : index
    %74 = vector.load %arg2[%c0_72, %c0_73, %c212] : memref<1x8x1024xf32, #tpu.memory_space<vmem>>, vector<1x8x812xf32>
    %75 = vector.shape_cast %74 : vector<1x8x812xf32> to vector<8x812xf32>
    %c184 = arith.constant 184 : index
    %c0_74 = arith.constant 0 : index
    %76 = vector.load %arg7[%c184, %c0_74] : memref<216x1024xf32, #tpu.memory_space<vmem>>, vector<8x812xf32>
    tpu.vector_store %arg7[%c184, %c0_74], %75 {strides = array<i32>} : memref<216x1024xf32, #tpu.memory_space<vmem>>, vector<8x812xf32>,
    %c0_75 = arith.constant 0 : index
    %c0_76 = arith.constant 0 : index
    %c220 = arith.constant 220 : index
    %77 = vector.load %arg2[%c0_75, %c0_76, %c220] : memref<1x8x1024xf32, #tpu.memory_space<vmem>>, vector<1x8x804xf32>
    %78 = vector.shape_cast %77 : vector<1x8x804xf32> to vector<8x804xf32>
    %c192 = arith.constant 192 : index
    %c0_77 = arith.constant 0 : index
    %79 = vector.load %arg7[%c192, %c0_77] : memref<216x1024xf32, #tpu.memory_space<vmem>>, vector<8x804xf32>
    tpu.vector_store %arg7[%c192, %c0_77], %78 {strides = array<i32>} : memref<216x1024xf32, #tpu.memory_space<vmem>>, vector<8x804xf32>,
    %c0_78 = arith.constant 0 : index
    %c0_79 = arith.constant 0 : index
    %c221 = arith.constant 221 : index
    %80 = vector.load %arg2[%c0_78, %c0_79, %c221] : memref<1x8x1024xf32, #tpu.memory_space<vmem>>, vector<1x8x803xf32>
    %81 = vector.shape_cast %80 : vector<1x8x803xf32> to vector<8x803xf32>
    %c200_80 = arith.constant 200 : index
    %c0_81 = arith.constant 0 : index
    %82 = vector.load %arg7[%c200_80, %c0_81] : memref<216x1024xf32, #tpu.memory_space<vmem>>, vector<8x803xf32>
    tpu.vector_store %arg7[%c200_80, %c0_81], %81 {strides = array<i32>} : memref<216x1024xf32, #tpu.memory_space<vmem>>, vector<8x803xf32>,
    %c0_82 = arith.constant 0 : index
    %c0_83 = arith.constant 0 : index
    %c222 = arith.constant 222 : index
    %83 = vector.load %arg2[%c0_82, %c0_83, %c222] : memref<1x8x1024xf32, #tpu.memory_space<vmem>>, vector<1x8x802xf32>
    %84 = vector.shape_cast %83 : vector<1x8x802xf32> to vector<8x802xf32>
    %c208 = arith.constant 208 : index
    %c0_84 = arith.constant 0 : index
    %85 = vector.load %arg7[%c208, %c0_84] : memref<216x1024xf32, #tpu.memory_space<vmem>>, vector<8x802xf32>
    tpu.vector_store %arg7[%c208, %c0_84], %84 {strides = array<i32>} : memref<216x1024xf32, #tpu.memory_space<vmem>>, vector<8x802xf32>,
    %c0_i32_85 = arith.constant 0 : i32
    %86 = tpu.memref_slice %arg3[%arg0, %c0_i32_85, %2] : memref<2x8x1300xf32, #tpu.memory_space<any>> -> memref<1x8x256xf32, #tpu.memory_space<any>>
    %87 = tpu.memref_squeeze %86 : memref<1x8x256xf32, #tpu.memory_space<any>> -> memref<8x256xf32, #tpu.memory_space<any>>
    tpu.wait_dma2 semaphore(%arg10 : memref<!tpu.dma_semaphore, #tpu.memory_space<semaphore_mem>>) src(%87 : memref<8x256xf32, #tpu.memory_space<any>>) dst(%arg8 : memref<8x256xf32, #tpu.memory_space<vmem>>)
    %c0_86 = arith.constant 0 : index
    %c0_87 = arith.constant 0 : index
    %88 = vector.load %arg8[%c0_86, %c0_87] : memref<8x256xf32, #tpu.memory_space<vmem>>, vector<8x1xf32>
    %c8_88 = arith.constant 8 : index
    %c1023 = arith.constant 1023 : index
    %89 = vector.load %arg7[%c8_88, %c1023] : memref<216x1024xf32, #tpu.memory_space<vmem>>, vector<8x1xf32>
    tpu.vector_store %arg7[%c8_88, %c1023], %88 {strides = array<i32>} : memref<216x1024xf32, #tpu.memory_space<vmem>>, vector<8x1xf32>,
    %c0_89 = arith.constant 0 : index
    %c0_90 = arith.constant 0 : index
    %90 = vector.load %arg8[%c0_89, %c0_90] : memref<8x256xf32, #tpu.memory_space<vmem>>, vector<8x2xf32>
    %c16_91 = arith.constant 16 : index
    %c1022 = arith.constant 1022 : index
    %91 = vector.load %arg7[%c16_91, %c1022] : memref<216x1024xf32, #tpu.memory_space<vmem>>, vector<8x2xf32>
    tpu.vector_store %arg7[%c16_91, %c1022], %90 {strides = array<i32>} : memref<216x1024xf32, #tpu.memory_space<vmem>>, vector<8x2xf32>,
    %c0_92 = arith.constant 0 : index
    %c0_93 = arith.constant 0 : index
    %92 = vector.load %arg8[%c0_92, %c0_93] : memref<8x256xf32, #tpu.memory_space<vmem>>, vector<8x10xf32>
    %c24_94 = arith.constant 24 : index
    %c1014 = arith.constant 1014 : index
    %93 = vector.load %arg7[%c24_94, %c1014] : memref<216x1024xf32, #tpu.memory_space<vmem>>, vector<8x10xf32>
    tpu.vector_store %arg7[%c24_94, %c1014], %92 {strides = array<i32>} : memref<216x1024xf32, #tpu.memory_space<vmem>>, vector<8x10xf32>,
    %c0_95 = arith.constant 0 : index
    %c0_96 = arith.constant 0 : index
    %94 = vector.load %arg8[%c0_95, %c0_96] : memref<8x256xf32, #tpu.memory_space<vmem>>, vector<8x11xf32>
    %c32_97 = arith.constant 32 : index
    %c1013 = arith.constant 1013 : index
    %95 = vector.load %arg7[%c32_97, %c1013] : memref<216x1024xf32, #tpu.memory_space<vmem>>, vector<8x11xf32>
    tpu.vector_store %arg7[%c32_97, %c1013], %94 {strides = array<i32>} : memref<216x1024xf32, #tpu.memory_space<vmem>>, vector<8x11xf32>,
    %c0_98 = arith.constant 0 : index
    %c0_99 = arith.constant 0 : index
    %96 = vector.load %arg8[%c0_98, %c0_99] : memref<8x256xf32, #tpu.memory_space<vmem>>, vector<8x12xf32>
    %c40_100 = arith.constant 40 : index
    %c1012 = arith.constant 1012 : index
    %97 = vector.load %arg7[%c40_100, %c1012] : memref<216x1024xf32, #tpu.memory_space<vmem>>, vector<8x12xf32>
    tpu.vector_store %arg7[%c40_100, %c1012], %96 {strides = array<i32>} : memref<216x1024xf32, #tpu.memory_space<vmem>>, vector<8x12xf32>,
    %c0_101 = arith.constant 0 : index
    %c0_102 = arith.constant 0 : index
    %98 = vector.load %arg8[%c0_101, %c0_102] : memref<8x256xf32, #tpu.memory_space<vmem>>, vector<8x20xf32>
    %c48_103 = arith.constant 48 : index
    %c1004 = arith.constant 1004 : index
    %99 = vector.load %arg7[%c48_103, %c1004] : memref<216x1024xf32, #tpu.memory_space<vmem>>, vector<8x20xf32>
    tpu.vector_store %arg7[%c48_103, %c1004], %98 {strides = array<i32>} : memref<216x1024xf32, #tpu.memory_space<vmem>>, vector<8x20xf32>,
    %c0_104 = arith.constant 0 : index
    %c0_105 = arith.constant 0 : index
    %100 = vector.load %arg8[%c0_104, %c0_105] : memref<8x256xf32, #tpu.memory_space<vmem>>, vector<8x21xf32>
    %c56_106 = arith.constant 56 : index
    %c1003 = arith.constant 1003 : index
    %101 = vector.load %arg7[%c56_106, %c1003] : memref<216x1024xf32, #tpu.memory_space<vmem>>, vector<8x21xf32>
    tpu.vector_store %arg7[%c56_106, %c1003], %100 {strides = array<i32>} : memref<216x1024xf32, #tpu.memory_space<vmem>>, vector<8x21xf32>,
    %c0_107 = arith.constant 0 : index
    %c0_108 = arith.constant 0 : index
    %102 = vector.load %arg8[%c0_107, %c0_108] : memref<8x256xf32, #tpu.memory_space<vmem>>, vector<8x22xf32>
    %c64_109 = arith.constant 64 : index
    %c1002 = arith.constant 1002 : index
    %103 = vector.load %arg7[%c64_109, %c1002] : memref<216x1024xf32, #tpu.memory_space<vmem>>, vector<8x22xf32>
    tpu.vector_store %arg7[%c64_109, %c1002], %102 {strides = array<i32>} : memref<216x1024xf32, #tpu.memory_space<vmem>>, vector<8x22xf32>,
    %c0_110 = arith.constant 0 : index
    %c0_111 = arith.constant 0 : index
    %104 = vector.load %arg8[%c0_110, %c0_111] : memref<8x256xf32, #tpu.memory_space<vmem>>, vector<8x100xf32>
    %c72_112 = arith.constant 72 : index
    %c924 = arith.constant 924 : index
    %105 = vector.load %arg7[%c72_112, %c924] : memref<216x1024xf32, #tpu.memory_space<vmem>>, vector<8x100xf32>
    tpu.vector_store %arg7[%c72_112, %c924], %104 {strides = array<i32>} : memref<216x1024xf32, #tpu.memory_space<vmem>>, vector<8x100xf32>,
    %c0_113 = arith.constant 0 : index
    %c0_114 = arith.constant 0 : index
    %106 = vector.load %arg8[%c0_113, %c0_114] : memref<8x256xf32, #tpu.memory_space<vmem>>, vector<8x101xf32>
    %c80_115 = arith.constant 80 : index
    %c923 = arith.constant 923 : index
    %107 = vector.load %arg7[%c80_115, %c923] : memref<216x1024xf32, #tpu.memory_space<vmem>>, vector<8x101xf32>
    tpu.vector_store %arg7[%c80_115, %c923], %106 {strides = array<i32>} : memref<216x1024xf32, #tpu.memory_space<vmem>>, vector<8x101xf32>,
    %c0_116 = arith.constant 0 : index
    %c0_117 = arith.constant 0 : index
    %108 = vector.load %arg8[%c0_116, %c0_117] : memref<8x256xf32, #tpu.memory_space<vmem>>, vector<8x102xf32>
    %c88_118 = arith.constant 88 : index
    %c922 = arith.constant 922 : index
    %109 = vector.load %arg7[%c88_118, %c922] : memref<216x1024xf32, #tpu.memory_space<vmem>>, vector<8x102xf32>
    tpu.vector_store %arg7[%c88_118, %c922], %108 {strides = array<i32>} : memref<216x1024xf32, #tpu.memory_space<vmem>>, vector<8x102xf32>,
    %c0_119 = arith.constant 0 : index
    %c0_120 = arith.constant 0 : index
    %110 = vector.load %arg8[%c0_119, %c0_120] : memref<8x256xf32, #tpu.memory_space<vmem>>, vector<8x110xf32>
    %c96_121 = arith.constant 96 : index
    %c914 = arith.constant 914 : index
    %111 = vector.load %arg7[%c96_121, %c914] : memref<216x1024xf32, #tpu.memory_space<vmem>>, vector<8x110xf32>
    tpu.vector_store %arg7[%c96_121, %c914], %110 {strides = array<i32>} : memref<216x1024xf32, #tpu.memory_space<vmem>>, vector<8x110xf32>,
    %c0_122 = arith.constant 0 : index
    %c0_123 = arith.constant 0 : index
    %112 = vector.load %arg8[%c0_122, %c0_123] : memref<8x256xf32, #tpu.memory_space<vmem>>, vector<8x111xf32>
    %c104_124 = arith.constant 104 : index
    %c913 = arith.constant 913 : index
    %113 = vector.load %arg7[%c104_124, %c913] : memref<216x1024xf32, #tpu.memory_space<vmem>>, vector<8x111xf32>
    tpu.vector_store %arg7[%c104_124, %c913], %112 {strides = array<i32>} : memref<216x1024xf32, #tpu.memory_space<vmem>>, vector<8x111xf32>,
    %c0_125 = arith.constant 0 : index
    %c0_126 = arith.constant 0 : index
    %114 = vector.load %arg8[%c0_125, %c0_126] : memref<8x256xf32, #tpu.memory_space<vmem>>, vector<8x112xf32>
    %c112_127 = arith.constant 112 : index
    %c912 = arith.constant 912 : index
    %115 = vector.load %arg7[%c112_127, %c912] : memref<216x1024xf32, #tpu.memory_space<vmem>>, vector<8x112xf32>
    tpu.vector_store %arg7[%c112_127, %c912], %114 {strides = array<i32>} : memref<216x1024xf32, #tpu.memory_space<vmem>>, vector<8x112xf32>,
    %c0_128 = arith.constant 0 : index
    %c0_129 = arith.constant 0 : index
    %116 = vector.load %arg8[%c0_128, %c0_129] : memref<8x256xf32, #tpu.memory_space<vmem>>, vector<8x120xf32>
    %c120_130 = arith.constant 120 : index
    %c904 = arith.constant 904 : index
    %117 = vector.load %arg7[%c120_130, %c904] : memref<216x1024xf32, #tpu.memory_space<vmem>>, vector<8x120xf32>
    tpu.vector_store %arg7[%c120_130, %c904], %116 {strides = array<i32>} : memref<216x1024xf32, #tpu.memory_space<vmem>>, vector<8x120xf32>,
    %c0_131 = arith.constant 0 : index
    %c0_132 = arith.constant 0 : index
    %118 = vector.load %arg8[%c0_131, %c0_132] : memref<8x256xf32, #tpu.memory_space<vmem>>, vector<8x121xf32>
    %c128_133 = arith.constant 128 : index
    %c903 = arith.constant 903 : index
    %119 = vector.load %arg7[%c128_133, %c903] : memref<216x1024xf32, #tpu.memory_space<vmem>>, vector<8x121xf32>
    tpu.vector_store %arg7[%c128_133, %c903], %118 {strides = array<i32>} : memref<216x1024xf32, #tpu.memory_space<vmem>>, vector<8x121xf32>,
    %c0_134 = arith.constant 0 : index
    %c0_135 = arith.constant 0 : index
    %120 = vector.load %arg8[%c0_134, %c0_135] : memref<8x256xf32, #tpu.memory_space<vmem>>, vector<8x122xf32>
    %c136_136 = arith.constant 136 : index
    %c902 = arith.constant 902 : index
    %121 = vector.load %arg7[%c136_136, %c902] : memref<216x1024xf32, #tpu.memory_space<vmem>>, vector<8x122xf32>
    tpu.vector_store %arg7[%c136_136, %c902], %120 {strides = array<i32>} : memref<216x1024xf32, #tpu.memory_space<vmem>>, vector<8x122xf32>,
    %c0_137 = arith.constant 0 : index
    %c0_138 = arith.constant 0 : index
    %122 = vector.load %arg8[%c0_137, %c0_138] : memref<8x256xf32, #tpu.memory_space<vmem>>, vector<8x200xf32>
    %c144_139 = arith.constant 144 : index
    %c824 = arith.constant 824 : index
    %123 = vector.load %arg7[%c144_139, %c824] : memref<216x1024xf32, #tpu.memory_space<vmem>>, vector<8x200xf32>
    tpu.vector_store %arg7[%c144_139, %c824], %122 {strides = array<i32>} : memref<216x1024xf32, #tpu.memory_space<vmem>>, vector<8x200xf32>,
    %c0_140 = arith.constant 0 : index
    %c0_141 = arith.constant 0 : index
    %124 = vector.load %arg8[%c0_140, %c0_141] : memref<8x256xf32, #tpu.memory_space<vmem>>, vector<8x201xf32>
    %c152_142 = arith.constant 152 : index
    %c823 = arith.constant 823 : index
    %125 = vector.load %arg7[%c152_142, %c823] : memref<216x1024xf32, #tpu.memory_space<vmem>>, vector<8x201xf32>
    tpu.vector_store %arg7[%c152_142, %c823], %124 {strides = array<i32>} : memref<216x1024xf32, #tpu.memory_space<vmem>>, vector<8x201xf32>,
    %c0_143 = arith.constant 0 : index
    %c0_144 = arith.constant 0 : index
    %126 = vector.load %arg8[%c0_143, %c0_144] : memref<8x256xf32, #tpu.memory_space<vmem>>, vector<8x202xf32>
    %c160_145 = arith.constant 160 : index
    %c822 = arith.constant 822 : index
    %127 = vector.load %arg7[%c160_145, %c822] : memref<216x1024xf32, #tpu.memory_space<vmem>>, vector<8x202xf32>
    tpu.vector_store %arg7[%c160_145, %c822], %126 {strides = array<i32>} : memref<216x1024xf32, #tpu.memory_space<vmem>>, vector<8x202xf32>,
    %c0_146 = arith.constant 0 : index
    %c0_147 = arith.constant 0 : index
    %128 = vector.load %arg8[%c0_146, %c0_147] : memref<8x256xf32, #tpu.memory_space<vmem>>, vector<8x210xf32>
    %c168_148 = arith.constant 168 : index
    %c814 = arith.constant 814 : index
    %129 = vector.load %arg7[%c168_148, %c814] : memref<216x1024xf32, #tpu.memory_space<vmem>>, vector<8x210xf32>
    tpu.vector_store %arg7[%c168_148, %c814], %128 {strides = array<i32>} : memref<216x1024xf32, #tpu.memory_space<vmem>>, vector<8x210xf32>,
    %c0_149 = arith.constant 0 : index
    %c0_150 = arith.constant 0 : index
    %130 = vector.load %arg8[%c0_149, %c0_150] : memref<8x256xf32, #tpu.memory_space<vmem>>, vector<8x211xf32>
    %c176_151 = arith.constant 176 : index
    %c813 = arith.constant 813 : index
    %131 = vector.load %arg7[%c176_151, %c813] : memref<216x1024xf32, #tpu.memory_space<vmem>>, vector<8x211xf32>
    tpu.vector_store %arg7[%c176_151, %c813], %130 {strides = array<i32>} : memref<216x1024xf32, #tpu.memory_space<vmem>>, vector<8x211xf32>,
    %c0_152 = arith.constant 0 : index
    %c0_153 = arith.constant 0 : index
    %132 = vector.load %arg8[%c0_152, %c0_153] : memref<8x256xf32, #tpu.memory_space<vmem>>, vector<8x212xf32>
    %c184_154 = arith.constant 184 : index
    %c812 = arith.constant 812 : index
    %133 = vector.load %arg7[%c184_154, %c812] : memref<216x1024xf32, #tpu.memory_space<vmem>>, vector<8x212xf32>
    tpu.vector_store %arg7[%c184_154, %c812], %132 {strides = array<i32>} : memref<216x1024xf32, #tpu.memory_space<vmem>>, vector<8x212xf32>,
    %c0_155 = arith.constant 0 : index
    %c0_156 = arith.constant 0 : index
    %134 = vector.load %arg8[%c0_155, %c0_156] : memref<8x256xf32, #tpu.memory_space<vmem>>, vector<8x220xf32>
    %c192_157 = arith.constant 192 : index
    %c804 = arith.constant 804 : index
    %135 = vector.load %arg7[%c192_157, %c804] : memref<216x1024xf32, #tpu.memory_space<vmem>>, vector<8x220xf32>
    tpu.vector_store %arg7[%c192_157, %c804], %134 {strides = array<i32>} : memref<216x1024xf32, #tpu.memory_space<vmem>>, vector<8x220xf32>,
    %c0_158 = arith.constant 0 : index
    %c0_159 = arith.constant 0 : index
    %136 = vector.load %arg8[%c0_158, %c0_159] : memref<8x256xf32, #tpu.memory_space<vmem>>, vector<8x221xf32>
    %c200_160 = arith.constant 200 : index
    %c803 = arith.constant 803 : index
    %137 = vector.load %arg7[%c200_160, %c803] : memref<216x1024xf32, #tpu.memory_space<vmem>>, vector<8x221xf32>
    tpu.vector_store %arg7[%c200_160, %c803], %136 {strides = array<i32>} : memref<216x1024xf32, #tpu.memory_space<vmem>>, vector<8x221xf32>,
    %c0_161 = arith.constant 0 : index
    %c0_162 = arith.constant 0 : index
    %138 = vector.load %arg8[%c0_161, %c0_162] : memref<8x256xf32, #tpu.memory_space<vmem>>, vector<8x222xf32>
    %c208_163 = arith.constant 208 : index
    %c802 = arith.constant 802 : index
    %139 = vector.load %arg7[%c208_163, %c802] : memref<216x1024xf32, #tpu.memory_space<vmem>>, vector<8x222xf32>
    tpu.vector_store %arg7[%c208_163, %c802], %138 {strides = array<i32>} : memref<216x1024xf32, #tpu.memory_space<vmem>>, vector<8x222xf32>,
    %c0_164 = arith.constant 0 : index
    %c0_165 = arith.constant 0 : index
    %c0_166 = arith.constant 0 : index
    %140 = vector.load %arg4[%c0_164, %c0_165, %c0_166] : memref<1x8x216xf32, #tpu.memory_space<vmem>>, vector<1x8x216xf32>
    %141 = vector.shape_cast %140 : vector<1x8x216xf32> to vector<8x216xf32>
    %c0_167 = arith.constant 0 : index
    %c0_168 = arith.constant 0 : index
    %142 = vector.load %arg7[%c0_167, %c0_168] : memref<216x1024xf32, #tpu.memory_space<vmem>>, vector<216x1024xf32>
    %cst = arith.constant dense<0.000000e+00> : vector<8x1024xf32>
    %143 = tpu.matmul %141, %142, %cst {dimension_numbers = #tpu.dot_dimension_numbers<[1], [0], [0], [1], [0, 0, 1, 1], [], []>} : vector<8x216xf32>, vector<216x1024xf32>, vector<8x1024xf32> -> vector<8x1024xf32>
    %c0_169 = arith.constant 0 : index
    %c0_170 = arith.constant 0 : index
    %144 = vector.load %arg5[%c0_169, %c0_170] : memref<8x1xf32, #tpu.memory_space<vmem>>, vector<8x1xf32>
    %145 = vector.broadcast %144 : vector<8x1xf32> to vector<8x1024xf32>
    %146 = arith.addf %143, %145 : vector<8x1024xf32>
    %c0_171 = arith.constant 0 : index
    %c0_172 = arith.constant 0 : index
    %c0_173 = arith.constant 0 : index
    %147 = vector.load %arg6[%c0_171, %c0_172, %c0_173] : memref<1x8x1024xf32, #tpu.memory_space<vmem>>, vector<1x8x1024xf32>
    %148 = vector.shape_cast %147 : vector<1x8x1024xf32> to vector<8x1024xf32>
    %149 = vector.shape_cast %146 : vector<8x1024xf32> to vector<1x8x1024xf32>
    tpu.vector_store %arg6[%c0_171, %c0_172, %c0_173], %149 {strides = array<i32>} : memref<1x8x1024xf32, #tpu.memory_space<vmem>>, vector<1x8x1024xf32>,
    return
  }
  func.func @transform_0(%arg0: i32, %arg1: i32) -> (i32, i32, i32) {
    %c0_i32 = arith.constant 0 : i32
    %c0_i32_0 = arith.constant 0 : i32
    return %arg0, %c0_i32, %arg1 : i32, i32, i32
  }
  func.func @transform_2(%arg0: i32, %arg1: i32) -> (i32, i32, i32) {
    %c0_i32 = arith.constant 0 : i32
    %c0_i32_0 = arith.constant 0 : i32
    %c0_i32_1 = arith.constant 0 : i32
    %c0_i32_2 = arith.constant 0 : i32
    return %c0_i32, %c0_i32_0, %c0_i32_1 : i32, i32, i32
  }
  func.func @transform_3(%arg0: i32, %arg1: i32) -> (i32, i32) {
    %c0_i32 = arith.constant 0 : i32
    %c0_i32_0 = arith.constant 0 : i32
    %c0_i32_1 = arith.constant 0 : i32
    return %c0_i32, %c0_i32_0 : i32, i32
  }
  func.func @transform_4(%arg0: i32, %arg1: i32) -> (i32, i32, i32) {
    %c0_i32 = arith.constant 0 : i32
    %c0_i32_0 = arith.constant 0 : i32
    return %arg0, %c0_i32, %arg1 : i32, i32, i32
  }
}

</mosaic_0001>

<llo_original>
// kernel: conv3d_pallas.1
$region0: #{conv3d_pallas.1}
  #allocation0 [shape = 'u32[]', space=smem, size = 0x4, offset = 0x4, fixed_abs, tag = 'smem constant byte address 0x4 - core index']
  #allocation1 [shape = 'u32[72,128]{1,0:T(1,128)}', space=vmem, size = 0x9000, scoped, tag = 'internal scratch']
  #allocation2 [shape = 'f32[216,1024]{1,0:T(8,128)}', space=vmem, size = 0xd8000, scoped, tag = 'scratch operand']
  #allocation3 [shape = 'f32[8,256]{1,0:T(8,128)}', space=vmem, size = 0x2000, scoped, tag = 'scratch operand']
  #allocation4 [shape = 'f32[8,1024]{1,0:T(8,128)}', space=vmem, size = 0x8000, scoped, tag = 'scratch operand']
  #allocation5 [shape = 's32[1]{0}', space=sflag, size = 0x4, scoped, tag = 'scratch operand']
  #allocation6 [shape = 's32[]', space=sflag, size = 0x4, offset = 0, fixed_abs, tag = 'sflag constant byte address 0x0 - dummy sync flag']
  %s0 = inlined_call_operand.vmem [shape: f32[2,8,1300], index: 0, kind: input, shape index: {}, may-alias: {0,1}]
  %s1 = inlined_call_operand.vmem [shape: f32[2,8,1300], index: 1, kind: input, shape index: {}, may-alias: {0,1}]
  %s2 = inlined_call_operand.vmem [shape: f32[1,8,216], index: 2, kind: input, shape index: {}]
  %s3 = inlined_call_operand.vmem [shape: f32[8,1], index: 3, kind: input, shape index: {}]
  %s4 = inlined_call_operand.vmem [shape: f32[2,8,1024], index: 4, kind: output, shape index: {}]
  %s5 = sld [smem:[#allocation0]]
  $region64: #{conv3d_pallas.1} parent=0
    _
  %s7 = ssub.s32 1, %s5
  %s8 = scalar_select 0, %s7, %s5
  loop: start=0, step=1, limit=4
  $region2: #{conv3d_pallas.1} parent=0 // loop_pre_header
    _
  $region3: #{conv3d_pallas.1} parent=0 // loop_header
    %s10 = sphi 0, %s14
    %p11 = scmp.ge.s32.totalorder %s10, 4
    %s17 = sphi 0, %s29
    %s18 = sphi 0, %s25
    %s19 = sphi 0, %s17
    %s20 = sphi 0, %s18
    %s21 = sphi 0, %s19
    %s22 = sphi 0, %s20
    %s34 = sphi 0, %s36
    %s37 = sphi 0, %s34
    %s38 = sphi 0, %s37
    %s54 = sphi 0, %s38
    %s58 = sphi 0, %s58
    %s60 = sphi 0, %s58
    %s61 = sphi 0, %s60
    %s75 = sphi 0, %s61
    %s79 = sphi 0, %s79
    %s81 = sphi 0, %s79
    %s82 = sphi 0, %s81
    %s96 = sphi 0, %s82
    %s104 = sphi 0, %s106
    %s107 = sphi 0, %s104
    %s108 = sphi 0, %s107
    %s124 = sphi 0, %s108
  $region4: #{conv3d_pallas.1} parent=0 // loop_header_branch
    %13 = sbr.rel (%p11) target = $region8
  $region5: #{conv3d_pallas.1} parent=0 // loop_body
    %s15 = ssub.s32 %s10, 1
    %s16 = ssub.s32 %s10, 2
    %s23 = sadd.s32 1, %s18
    %p24 = scmp.ge.s32.totalorder %s23, 1
    %s25 = scalar_select %p24, 0, %s23
    %s26 = sadd.s32 1, %s17
    %s27 = scalar_select %p24, %s26, %s17
    %p28 = scmp.ge.s32.totalorder %s27, 2
    %s29 = scalar_select %p28, 0, %s27
    %s30 = ssub.s32 %s17, %s29
    %s31 = ssub.s32 %s18, %s25
    %s32 = sor.u32 %s30, %s31
    %p33 = scmp.eq.s32.totalorder %s32, 0
    %s35 = sadd.s32 %s34, 1
    %s36 = scalar_select %p33, %s34, %s35
    %p39 = pneg %p33
    %p40 = scmp.eq.s32.totalorder %s10, 1
    %p41 = por %p39, %p40
    %p42 = scmp.ne.s32.totalorder %s34, %s37
    %p43 = scmp.eq.s32.totalorder %s10, 0
    %p44 = por %p42, %p43
    %p45 = scmp.ne.s32.totalorder %s34, %s37
    %p46 = scmp.eq.s32.totalorder %s15, 1
    %p47 = por %p45, %p46
    %p48 = scmp.ne.s32.totalorder %s37, %s38
    %p49 = scmp.eq.s32.totalorder %s15, 0
    %p50 = por %p48, %p49
    %p51 = scmp.ne.s32.totalorder %s37, %s38
    %p52 = scmp.eq.s32.totalorder %s16, 1
    %p53 = por %p51, %p52
    %p55 = scmp.ne.s32.totalorder %s38, %s54
    %p56 = scmp.eq.s32.totalorder %s16, 0
    %p57 = por %p55, %p56
    %s59 = sadd.s32 %s58, 1
    %p62 = scmp.eq.s32.totalorder %s10, 1
    %p63 = scmp.ne.s32.totalorder %s58, %s60
    %p64 = scmp.eq.s32.totalorder %s10, 0
    %p65 = por %p63, %p64
    %p66 = scmp.ne.s32.totalorder %s58, %s60
    %p67 = scmp.eq.s32.totalorder %s15, 1
    %p68 = por %p66, %p67
    %p69 = scmp.ne.s32.totalorder %s60, %s61
    %p70 = scmp.eq.s32.totalorder %s15, 0
    %p71 = por %p69, %p70
    %p72 = scmp.ne.s32.totalorder %s60, %s61
    %p73 = scmp.eq.s32.totalorder %s16, 1
    %p74 = por %p72, %p73
    %p76 = scmp.ne.s32.totalorder %s61, %s75
    %p77 = scmp.eq.s32.totalorder %s16, 0
    %p78 = por %p76, %p77
    %s80 = sadd.s32 %s79, 1
    %p83 = scmp.eq.s32.totalorder %s10, 1
    %p84 = scmp.ne.s32.totalorder %s79, %s81
    %p85 = scmp.eq.s32.totalorder %s10, 0
    %p86 = por %p84, %p85
    %p87 = scmp.ne.s32.totalorder %s79, %s81
    %p88 = scmp.eq.s32.totalorder %s15, 1
    %p89 = por %p87, %p88
    %p90 = scmp.ne.s32.totalorder %s81, %s82
    %p91 = scmp.eq.s32.totalorder %s15, 0
    %p92 = por %p90, %p91
    %p93 = scmp.ne.s32.totalorder %s81, %s82
    %p94 = scmp.eq.s32.totalorder %s16, 1
    %p95 = por %p93, %p94
    %p97 = scmp.ne.s32.totalorder %s82, %s96
    %p98 = scmp.eq.s32.totalorder %s16, 0
    %p99 = por %p97, %p98
    %s100 = ssub.s32 %s17, %s29
    %s101 = ssub.s32 %s18, %s25
    %s102 = sor.u32 %s100, %s101
    %p103 = scmp.eq.s32.totalorder %s102, 0
    %s105 = sadd.s32 %s104, 1
    %s106 = scalar_select %p103, %s104, %s105
    %p109 = pneg %p103
    %p110 = scmp.eq.s32.totalorder %s10, 1
    %p111 = por %p109, %p110
    %p112 = scmp.ne.s32.totalorder %s104, %s107
    %p113 = scmp.eq.s32.totalorder %s10, 0
    %p114 = por %p112, %p113
    %p115 = scmp.ne.s32.totalorder %s104, %s107
    %p116 = scmp.eq.s32.totalorder %s15, 1
    %p117 = por %p115, %p116
    %p118 = scmp.ne.s32.totalorder %s107, %s108
    %p119 = scmp.eq.s32.totalorder %s15, 0
    %p120 = por %p118, %p119
    %p121 = scmp.ne.s32.totalorder %s107, %s108
    %p122 = scmp.eq.s32.totalorder %s16, 1
    %p123 = por %p121, %p122
    %p125 = scmp.ne.s32.totalorder %s108, %s124
    %p126 = scmp.eq.s32.totalorder %s16, 0
    %p127 = por %p125, %p126
    %p128 = scmp.le.s32.totalorder 1, %s10
    %p129 = scmp.lt.s32.totalorder %s10, 3
    %p130 = pnand %p128, %p129
    %p131 = pneg %p130
    // Predicated region
    $region9: #{conv3d_pallas.1} parent=5 // pred_check
      _
    $region10: #{conv3d_pallas.1} parent=5 // pred_check_branch
      %133 = sbr.rel (%p130) target = $region12
    $region11: #{conv3d_pallas.1} parent=5 // pred_region
      %s134 = ssub.s32 %s10, 1
      // Predicated region
      $region13: #{conv3d_pallas.1} parent=11 // pred_check
        %p135 = pneg %p71
      $region14: #{conv3d_pallas.1} parent=11 // pred_check_branch
        %137 = sbr.rel (%p135) target = $region16
      $region15: #{conv3d_pallas.1} parent=11 // pred_region
        _
      $region16: #{conv3d_pallas.1} parent=11 // pred_fallthru
        _
      // Predicated region
      $region17: #{conv3d_pallas.1} parent=11 // pred_check
        %p138 = pneg %p92
      $region18: #{conv3d_pallas.1} parent=11 // pred_check_branch
        %140 = sbr.rel (%p138) target = $region20
      $region19: #{conv3d_pallas.1} parent=11 // pred_region
        _
      $region20: #{conv3d_pallas.1} parent=11 // pred_fallthru
        _
    $region12: #{conv3d_pallas.1} parent=5 // pred_fallthru
      _
    %p141 = scmp.lt.s32.totalorder %s10, 2
    // Predicated region
    $region21: #{conv3d_pallas.1} parent=5 // pred_check
      %p142 = pneg %p141
    $region22: #{conv3d_pallas.1} parent=5 // pred_check_branch
      %144 = sbr.rel (%p142) target = $region24
    $region23: #{conv3d_pallas.1} parent=5 // pred_region
      // Predicated region
      $region25: #{conv3d_pallas.1} parent=23 // pred_check
        %p145 = pneg %p44
      $region26: #{conv3d_pallas.1} parent=23 // pred_check_branch
        %147 = sbr.rel (%p145) target = $region28
      $region27: #{conv3d_pallas.1} parent=23 // pred_region
        %s148 = smul.u32 8, %s18
        %s149 = ssub.s32 11, %s148
        %p150 = scmp.lt.s32.totalorder %s149, 8
        %s151 = scalar_select %p150, %s149, 8
        %s152 = smul.u32 8, %s151
        %p153 = scmp.lt.s32.totalorder %s17, 1
        %s154 = scalar_select %p153, %s17, 1
        %p155 = scmp.lt.s32.totalorder %s148, 10
        %s156 = scalar_select %p155, %s148, 10
        %s157 = smul.addr %s154, 11
        %s158 = sadd.s32 %s156, %s157
        %s159 = smul.addr %s158, 8
        %s160 = scalar_lea.vmem %s0, %s159
        %s161 = smul.u32 8, %s18
        %s162 = ssub.s32 11, %s161
        %p163 = scmp.lt.s32.totalorder %s162, 8
        %s164 = scalar_select %p163, %s162, 8
        %s165 = smul.u32 8, %s164
      $region28: #{conv3d_pallas.1} parent=23 // pred_fallthru
        _
    $region24: #{conv3d_pallas.1} parent=5 // pred_fallthru
      _
    %p166 = scmp.le.s32.totalorder 1, %s10
    %p167 = scmp.lt.s32.totalorder %s10, 3
    %p168 = pnand %p166, %p167
    %p169 = pneg %p168
    // Predicated region
    $region29: #{conv3d_pallas.1} parent=5 // pred_check
      _
    $region30: #{conv3d_pallas.1} parent=5 // pred_check_branch
      %171 = sbr.rel (%p168) target = $region32
    $region31: #{conv3d_pallas.1} parent=5 // pred_region
      %s172 = ssub.s32 %s10, 1
      %s173 = smul.u32 8, %s20
      %s174 = ssub.s32 11, %s173
      %p175 = scmp.lt.s32.totalorder %s174, 8
      %s176 = scalar_select %p175, %s174, 8
      %s177 = smul.u32 8, %s176
      %p178 = scmp.lt.s32.totalorder %s19, 1
      %s179 = scalar_select %p178, %s19, 1
      %p180 = scmp.lt.s32.totalorder %s173, 10
      %s181 = scalar_select %p180, %s173, 10
      %s182 = smul.addr %s179, 11
      %s183 = sadd.s32 %s181, %s182
      %s184 = smul.addr %s183, 8
      %s185 = scalar_lea.vmem %s0, %s184
      %p186 = pneg %p50
      %p187 = pneg %p47
      %p188 = pneg %p71
      %p189 = pneg %p68
      %p190 = pneg %p92
      %p191 = pneg %p89
      %p192 = pneg %p120
      %p193 = pneg %p117
      %s194 = smul.u32 8, %s20
      %p195 = scmp.lt.s32.totalorder %s19, 1
      %s196 = scalar_select %p195, %s19, 1
      %p197 = scmp.lt.s32.totalorder %s194, 7
      %s198 = scalar_select %p197, %s194, 7
      %s199 = smul.addr %s196, 8
      %s200 = sadd.s32 %s198, %s199
      %s201 = smul.addr %s200, 8
      %s202 = scalar_lea.vmem %s4, %s201
      %s203 = smul.u32 8, %s20
      %s204 = ssub.s32 11, %s203
      %p205 = scmp.lt.s32.totalorder %s204, 8
      %s206 = scalar_select %p205, %s204, 8
      %s207 = smul.u32 8, %s206
      %p208 = scmp.lt.s32.totalorder %s19, 1
      %s209 = scalar_select %p208, %s19, 1
      %p210 = scmp.lt.s32.totalorder %s203, 10
      %s211 = scalar_select %p210, %s203, 10
      %s212 = smul.addr %s209, 11
      %s213 = sadd.s32 %s211, %s212
      %s214 = smul.addr %s213, 8
      %s215 = scalar_lea.vmem %s0, %s214
      %s216 = smul.u32 8, %s20
      %s217 = ssub.s32 11, %s216
      %p218 = scmp.lt.s32.totalorder %s217, 8
      %s219 = scalar_select %p218, %s217, 8
      %s220 = smul.u32 8, %s219
      %s221 = smul.u32 8, %s20
      %p222 = scmp.lt.s32.totalorder %s19, 1
      %s223 = scalar_select %p222, %s19, 1
      %p224 = scmp.lt.s32.totalorder %s221, 7
      %s225 = scalar_select %p224, %s221, 7
      %s226 = smul.addr %s223, 8
      %s227 = sadd.s32 %s225, %s226
      %s228 = smul.addr %s227, 8
      %s229 = scalar_lea.vmem %s4, %s228
      %s230 = smul.u32 8, %s20
      %s231 = sadd.s32 %s20, 1
      %s232 = smul.u32 %s231, 1024
      %s233 = sshra.s32 %s232, 7
      %s234 = sand.u32 %s232, 127
      %s235 = smul.u32 %s19, 11
      %s236 = sadd.s32 %s233, %s235
      %s237 = smul.addr %s236, 8
      %s238 = scalar_lea.vmem %s1, %s237
      // Predicated region
      $region33: #{conv3d_pallas.1} parent=31 // pred_check
        _
      $region34: #{conv3d_pallas.1} parent=31 // pred_check_branch
        %240 = sbr.rel (0) target = $region36
      $region35: #{conv3d_pallas.1} parent=31 // pred_region
        loop: start=0, step=1, limit=1
        $region37: #{conv3d_pallas.1} parent=35 // loop_pre_header
          _
        $region38: #{conv3d_pallas.1} parent=35 // loop_header
          %s242 = sphi 0, %s246
          %p243 = scmp.ge.s32.totalorder %s242, 1
          %s247 = sphi %s238, %s238
          %s248 = sphi [#allocation3], [#allocation3]
        $region39: #{conv3d_pallas.1} parent=35 // loop_header_branch
          %245 = sbr.rel (%p243) target = $region43
        $region40: #{conv3d_pallas.1} parent=35 // loop_body
          %v249 = vld [vmem:[%s247] sm:$0xff]
          %250 = vst [vmem:[%s248] sm:$0xff] %v249
          %v251 = vld [vmem:[%s247 + $0x8] sm:$0xff]
          %252 = vst [vmem:[%s248 + $0x8] sm:$0xff] %v251
        $region41: #{conv3d_pallas.1} parent=35 // loop_footer
          %s246 = sadd.s32 1, %s242
        $region42: #{conv3d_pallas.1} parent=35 // loop_footer_branch
          %241 = sbr.rel target = $region38
        $region43: #{conv3d_pallas.1} parent=35 // loop_exit
          _
      $region36: #{conv3d_pallas.1} parent=31 // pred_fallthru
        _
      // Predicated region
      $region44: #{conv3d_pallas.1} parent=31 // pred_check
        _
      $region45: #{conv3d_pallas.1} parent=31 // pred_check_branch
        %254 = sbr.rel target = $region47
      $region46: #{conv3d_pallas.1} parent=31 // pred_region
        _
      $region47: #{conv3d_pallas.1} parent=31 // pred_fallthru
        _
      // Predicated region
      $region48: #{conv3d_pallas.1} parent=31 // pred_check
        _
      $region49: #{conv3d_pallas.1} parent=31 // pred_check_branch
        %257 = sbr.rel (0) target = $region51
      $region50: #{conv3d_pallas.1} parent=31 // pred_region
        %258 = vsyncadd [#allocation5], 256
      $region51: #{conv3d_pallas.1} parent=31 // pred_fallthru
        _
      %v259 = vld [vmem:[%s215] sm:$0xff]
      %v260 = vld [vmem:[%s215 + $0x8] sm:$0xff]
      %v261 = vld [vmem:[%s215 + $0x10] sm:$0xff]
      %v262 = vld [vmem:[%s215 + $0x18] sm:$0xff]
      %v263 = vld [vmem:[%s215 + $0x20] sm:$0xff]
      %v264 = vld [vmem:[%s215 + $0x28] sm:$0xff]
      %v265 = vld [vmem:[%s215 + $0x30] sm:$0xff]
      %v266 = vld [vmem:[%s215 + $0x38] sm:$0xff]
      %267 = vst [vmem:[#allocation2] sm:$0xff] %v259
      %268 = vst [vmem:[#allocation2 + $0x8] sm:$0xff] %v260
      %269 = vst [vmem:[#allocation2 + $0x10] sm:$0xff] %v261
      %270 = vst [vmem:[#allocation2 + $0x18] sm:$0xff] %v262
      %271 = vst [vmem:[#allocation2 + $0x20] sm:$0xff] %v263
      %272 = vst [vmem:[#allocation2 + $0x28] sm:$0xff] %v264
      %273 = vst [vmem:[#allocation2 + $0x30] sm:$0xff] %v265
      %274 = vst [vmem:[#allocation2 + $0x38] sm:$0xff] %v266
      %v275 = vld [vmem:[%s215] sm:$0xff]
      %v276 = vld [vmem:[%s215 + $0x8] sm:$0xff]
      %v277 = vld [vmem:[%s215 + $0x10] sm:$0xff]
      %v278 = vld [vmem:[%s215 + $0x18] sm:$0xff]
      %v279 = vld [vmem:[%s215 + $0x20] sm:$0xff]
      %v280 = vld [vmem:[%s215 + $0x28] sm:$0xff]
      %v281 = vld [vmem:[%s215 + $0x30] sm:$0xff]
      %v282 = vld [vmem:[%s215 + $0x38] sm:$0xff]
      %291 = vrot.lane.b32.xlu0 %v275, 127
      %v292 = vpop.permute.xlu0 %291
      %293 = vrot.lane.b32.xlu0 %v276, 127
      %v294 = vpop.permute.xlu0 %293
      %295 = vrot.lane.b32.xlu0 %v277, 127
      %v296 = vpop.permute.xlu0 %295
      %297 = vrot.lane.b32.xlu0 %v278, 127
      %v298 = vpop.permute.xlu0 %297
      %299 = vrot.lane.b32.xlu0 %v279, 127
      %v300 = vpop.permute.xlu0 %299
      %301 = vrot.lane.b32.xlu0 %v280, 127
      %v302 = vpop.permute.xlu0 %301
      %303 = vrot.lane.b32.xlu0 %v281, 127
      %v304 = vpop.permute.xlu0 %303
      %305 = vrot.lane.b32.xlu0 %v282, 127
      %v306 = vpop.permute.xlu0 %305
      %vm307 = vcmask 1039360
      %v308 = vsel %vm307, %v292, %v294
      %v309 = vsel %vm307, %v294, %v296
      %v310 = vsel %vm307, %v296, %v298
      %v311 = vsel %vm307, %v298, %v300
      %v312 = vsel %vm307, %v300, %v302
      %v313 = vsel %vm307, %v302, %v304
      %v314 = vsel %vm307, %v304, %v306
      %323 = vst [vmem:[#allocation2 + $0x40] sm:$0xff] %v308
      %324 = vst [vmem:[#allocation2 + $0x48] sm:$0xff] %v309
      %325 = vst [vmem:[#allocation2 + $0x50] sm:$0xff] %v310
      %326 = vst [vmem:[#allocation2 + $0x58] sm:$0xff] %v311
      %327 = vst [vmem:[#allocation2 + $0x60] sm:$0xff] %v312
      %328 = vst [vmem:[#allocation2 + $0x68] sm:$0xff] %v313
      %329 = vst [vmem:[#allocation2 + $0x70] sm:$0xff] %v314
      %330 = vst.msk [vmem:[#allocation2 + $0x78] sm:$0xff] %vm307, %v306
      %v331 = vld [vmem:[%s215] sm:$0xff]
      %v332 = vld [vmem:[%s215 + $0x8] sm:$0xff]
      %v333 = vld [vmem:[%s215 + $0x10] sm:$0xff]
      %v334 = vld [vmem:[%s215 + $0x18] sm:$0xff]
      %v335 = vld [vmem:[%s215 + $0x20] sm:$0xff]
      %v336 = vld [vmem:[%s215 + $0x28] sm:$0xff]
      %v337 = vld [vmem:[%s215 + $0x30] sm:$0xff]
      %v338 = vld [vmem:[%s215 + $0x38] sm:$0xff]
      %347 = vrot.lane.b32.xlu0 %v331, 126
      %v348 = vpop.permute.xlu0 %347
      %349 = vrot.lane.b32.xlu0 %v332, 126
      %v350 = vpop.permute.xlu0 %349
      %351 = vrot.lane.b32.xlu0 %v333, 126
      %v352 = vpop.permute.xlu0 %351
      %353 = vrot.lane.b32.xlu0 %v334, 126
      %v354 = vpop.permute.xlu0 %353
      %355 = vrot.lane.b32.xlu0 %v335, 126
      %v356 = vpop.permute.xlu0 %355
      %357 = vrot.lane.b32.xlu0 %v336, 126
      %v358 = vpop.permute.xlu0 %357
      %359 = vrot.lane.b32.xlu0 %v337, 126
      %v360 = vpop.permute.xlu0 %359
      %361 = vrot.lane.b32.xlu0 %v338, 126
      %v362 = vpop.permute.xlu0 %361
      %vm363 = vcmask 1031168
      %v364 = vsel %vm363, %v348, %v350
      %v365 = vsel %vm363, %v350, %v352
      %v366 = vsel %vm363, %v352, %v354
      %v367 = vsel %vm363, %v354, %v356
      %v368 = vsel %vm363, %v356, %v358
      %v369 = vsel %vm363, %v358, %v360
      %v370 = vsel %vm363, %v360, %v362
      %379 = vst [vmem:[#allocation2 + $0x80] sm:$0xff] %v364
      %380 = vst [vmem:[#allocation2 + $0x88] sm:$0xff] %v365
      %381 = vst [vmem:[#allocation2 + $0x90] sm:$0xff] %v366
      %382 = vst [vmem:[#allocation2 + $0x98] sm:$0xff] %v367
      %383 = vst [vmem:[#allocation2 + $0xa0] sm:$0xff] %v368
      %384 = vst [vmem:[#allocation2 + $0xa8] sm:$0xff] %v369
      %385 = vst [vmem:[#allocation2 + $0xb0] sm:$0xff] %v370
      %386 = vst.msk [vmem:[#allocation2 + $0xb8] sm:$0xff] %vm363, %v362
      %v387 = vld [vmem:[%s215] sm:$0xff]
      %v388 = vld [vmem:[%s215 + $0x8] sm:$0xff]
      %v389 = vld [vmem:[%s215 + $0x10] sm:$0xff]
      %v390 = vld [vmem:[%s215 + $0x18] sm:$0xff]
      %v391 = vld [vmem:[%s215 + $0x20] sm:$0xff]
      %v392 = vld [vmem:[%s215 + $0x28] sm:$0xff]
      %v393 = vld [vmem:[%s215 + $0x30] sm:$0xff]
      %v394 = vld [vmem:[%s215 + $0x38] sm:$0xff]
      %403 = vrot.lane.b32.xlu0 %v387, 118
      %v404 = vpop.permute.xlu0 %403
      %405 = vrot.lane.b32.xlu0 %v388, 118
      %v406 = vpop.permute.xlu0 %405
      %407 = vrot.lane.b32.xlu0 %v389, 118
      %v408 = vpop.permute.xlu0 %407
      %409 = vrot.lane.b32.xlu0 %v390, 118
      %v410 = vpop.permute.xlu0 %409
      %411 = vrot.lane.b32.xlu0 %v391, 118
      %v412 = vpop.permute.xlu0 %411
      %413 = vrot.lane.b32.xlu0 %v392, 118
      %v414 = vpop.permute.xlu0 %413
      %415 = vrot.lane.b32.xlu0 %v393, 118
      %v416 = vpop.permute.xlu0 %415
      %417 = vrot.lane.b32.xlu0 %v394, 118
      %v418 = vpop.permute.xlu0 %417
      %vm419 = vcmask 965632
      %v420 = vsel %vm419, %v404, %v406
      %v421 = vsel %vm419, %v406, %v408
      %v422 = vsel %vm419, %v408, %v410
      %v423 = vsel %vm419, %v410, %v412
      %v424 = vsel %vm419, %v412, %v414
      %v425 = vsel %vm419, %v414, %v416
      %v426 = vsel %vm419, %v416, %v418
      %435 = vst [vmem:[#allocation2 + $0xc0] sm:$0xff] %v420
      %436 = vst [vmem:[#allocation2 + $0xc8] sm:$0xff] %v421
      %437 = vst [vmem:[#allocation2 + $0xd0] sm:$0xff] %v422
      %438 = vst [vmem:[#allocation2 + $0xd8] sm:$0xff] %v423
      %439 = vst [vmem:[#allocation2 + $0xe0] sm:$0xff] %v424
      %440 = vst [vmem:[#allocation2 + $0xe8] sm:$0xff] %v425
      %441 = vst [vmem:[#allocation2 + $0xf0] sm:$0xff] %v426
      %442 = vst.msk [vmem:[#allocation2 + $0xf8] sm:$0xff] %vm419, %v418
      %v443 = vld [vmem:[%s215] sm:$0xff]
      %v444 = vld [vmem:[%s215 + $0x8] sm:$0xff]
      %v445 = vld [vmem:[%s215 + $0x10] sm:$0xff]
      %v446 = vld [vmem:[%s215 + $0x18] sm:$0xff]
      %v447 = vld [vmem:[%s215 + $0x20] sm:$0xff]
      %v448 = vld [vmem:[%s215 + $0x28] sm:$0xff]
      %v449 = vld [vmem:[%s215 + $0x30] sm:$0xff]
      %v450 = vld [vmem:[%s215 + $0x38] sm:$0xff]
      %459 = vrot.lane.b32.xlu0 %v443, 117
      %v460 = vpop.permute.xlu0 %459
      %461 = vrot.lane.b32.xlu0 %v444, 117
      %v462 = vpop.permute.xlu0 %461
      %463 = vrot.lane.b32.xlu0 %v445, 117
      %v464 = vpop.permute.xlu0 %463
      %465 = vrot.lane.b32.xlu0 %v446, 117
      %v466 = vpop.permute.xlu0 %465
      %467 = vrot.lane.b32.xlu0 %v447, 117
      %v468 = vpop.permute.xlu0 %467
      %469 = vrot.lane.b32.xlu0 %v448, 117
      %v470 = vpop.permute.xlu0 %469
      %471 = vrot.lane.b32.xlu0 %v449, 117
      %v472 = vpop.permute.xlu0 %471
      %473 = vrot.lane.b32.xlu0 %v450, 117
      %v474 = vpop.permute.xlu0 %473
      %vm475 = vcmask 957440
      %v476 = vsel %vm475, %v460, %v462
      %v477 = vsel %vm475, %v462, %v464
      %v478 = vsel %vm475, %v464, %v466
      %v479 = vsel %vm475, %v466, %v468
      %v480 = vsel %vm475, %v468, %v470
      %v481 = vsel %vm475, %v470, %v472
      %v482 = vsel %vm475, %v472, %v474
      %491 = vst [vmem:[#allocation2 + $0x100] sm:$0xff] %v476
      %492 = vst [vmem:[#allocation2 + $0x108] sm:$0xff] %v477
      %493 = vst [vmem:[#allocation2 + $0x110] sm:$0xff] %v478
      %494 = vst [vmem:[#allocation2 + $0x118] sm:$0xff] %v479
      %495 = vst [vmem:[#allocation2 + $0x120] sm:$0xff] %v480
      %496 = vst [vmem:[#allocation2 + $0x128] sm:$0xff] %v481
      %497 = vst [vmem:[#allocation2 + $0x130] sm:$0xff] %v482
      %498 = vst.msk [vmem:[#allocation2 + $0x138] sm:$0xff] %vm475, %v474
      %v499 = vld [vmem:[%s215] sm:$0xff]
      %v500 = vld [vmem:[%s215 + $0x8] sm:$0xff]
      %v501 = vld [vmem:[%s215 + $0x10] sm:$0xff]
      %v502 = vld [vmem:[%s215 + $0x18] sm:$0xff]
      %v503 = vld [vmem:[%s215 + $0x20] sm:$0xff]
      %v504 = vld [vmem:[%s215 + $0x28] sm:$0xff]
      %v505 = vld [vmem:[%s215 + $0x30] sm:$0xff]
      %v506 = vld [vmem:[%s215 + $0x38] sm:$0xff]
      %515 = vrot.lane.b32.xlu0 %v499, 116
      %v516 = vpop.permute.xlu0 %515
      %517 = vrot.lane.b32.xlu0 %v500, 116
      %v518 = vpop.permute.xlu0 %517
      %519 = vrot.lane.b32.xlu0 %v501, 116
      %v520 = vpop.permute.xlu0 %519
      %521 = vrot.lane.b32.xlu0 %v502, 116
      %v522 = vpop.permute.xlu0 %521
      %523 = vrot.lane.b32.xlu0 %v503, 116
      %v524 = vpop.permute.xlu0 %523
      %525 = vrot.lane.b32.xlu0 %v504, 116
      %v526 = vpop.permute.xlu0 %525
      %527 = vrot.lane.b32.xlu0 %v505, 116
      %v528 = vpop.permute.xlu0 %527
      %529 = vrot.lane.b32.xlu0 %v506, 116
      %v530 = vpop.permute.xlu0 %529
      %vm531 = vcmask 949248
      %v532 = vsel %vm531, %v516, %v518
      %v533 = vsel %vm531, %v518, %v520
      %v534 = vsel %vm531, %v520, %v522
      %v535 = vsel %vm531, %v522, %v524
      %v536 = vsel %vm531, %v524, %v526
      %v537 = vsel %vm531, %v526, %v528
      %v538 = vsel %vm531, %v528, %v530
      %547 = vst [vmem:[#allocation2 + $0x140] sm:$0xff] %v532
      %548 = vst [vmem:[#allocation2 + $0x148] sm:$0xff] %v533
      %549 = vst [vmem:[#allocation2 + $0x150] sm:$0xff] %v534
      %550 = vst [vmem:[#allocation2 + $0x158] sm:$0xff] %v535
      %551 = vst [vmem:[#allocation2 + $0x160] sm:$0xff] %v536
      %552 = vst [vmem:[#allocation2 + $0x168] sm:$0xff] %v537
      %553 = vst [vmem:[#allocation2 + $0x170] sm:$0xff] %v538
      %554 = vst.msk [vmem:[#allocation2 + $0x178] sm:$0xff] %vm531, %v530
      %v555 = vld [vmem:[%s215] sm:$0xff]
      %v556 = vld [vmem:[%s215 + $0x8] sm:$0xff]
      %v557 = vld [vmem:[%s215 + $0x10] sm:$0xff]
      %v558 = vld [vmem:[%s215 + $0x18] sm:$0xff]
      %v559 = vld [vmem:[%s215 + $0x20] sm:$0xff]
      %v560 = vld [vmem:[%s215 + $0x28] sm:$0xff]
      %v561 = vld [vmem:[%s215 + $0x30] sm:$0xff]
      %v562 = vld [vmem:[%s215 + $0x38] sm:$0xff]
      %571 = vrot.lane.b32.xlu0 %v555, 108
      %v572 = vpop.permute.xlu0 %571
      %573 = vrot.lane.b32.xlu0 %v556, 108
      %v574 = vpop.permute.xlu0 %573
      %575 = vrot.lane.b32.xlu0 %v557, 108
      %v576 = vpop.permute.xlu0 %575
      %577 = vrot.lane.b32.xlu0 %v558, 108
      %v578 = vpop.permute.xlu0 %577
      %579 = vrot.lane.b32.xlu0 %v559, 108
      %v580 = vpop.permute.xlu0 %579
      %581 = vrot.lane.b32.xlu0 %v560, 108
      %v582 = vpop.permute.xlu0 %581
      %583 = vrot.lane.b32.xlu0 %v561, 108
      %v584 = vpop.permute.xlu0 %583
      %585 = vrot.lane.b32.xlu0 %v562, 108
      %v586 = vpop.permute.xlu0 %585
      %vm587 = vcmask 883712
      %v588 = vsel %vm587, %v572, %v574
      %v589 = vsel %vm587, %v574, %v576
      %v590 = vsel %vm587, %v576, %v578
      %v591 = vsel %vm587, %v578, %v580
      %v592 = vsel %vm587, %v580, %v582
      %v593 = vsel %vm587, %v582, %v584
      %v594 = vsel %vm587, %v584, %v586
      %603 = vst [vmem:[#allocation2 + $0x180] sm:$0xff] %v588
      %604 = vst [vmem:[#allocation2 + $0x188] sm:$0xff] %v589
      %605 = vst [vmem:[#allocation2 + $0x190] sm:$0xff] %v590
      %606 = vst [vmem:[#allocation2 + $0x198] sm:$0xff] %v591
      %607 = vst [vmem:[#allocation2 + $0x1a0] sm:$0xff] %v592
      %608 = vst [vmem:[#allocation2 + $0x1a8] sm:$0xff] %v593
      %609 = vst [vmem:[#allocation2 + $0x1b0] sm:$0xff] %v594
      %610 = vst.msk [vmem:[#allocation2 + $0x1b8] sm:$0xff] %vm587, %v586
      %v611 = vld [vmem:[%s215] sm:$0xff]
      %v612 = vld [vmem:[%s215 + $0x8] sm:$0xff]
      %v613 = vld [vmem:[%s215 + $0x10] sm:$0xff]
      %v614 = vld [vmem:[%s215 + $0x18] sm:$0xff]
      %v615 = vld [vmem:[%s215 + $0x20] sm:$0xff]
      %v616 = vld [vmem:[%s215 + $0x28] sm:$0xff]
      %v617 = vld [vmem:[%s215 + $0x30] sm:$0xff]
      %v618 = vld [vmem:[%s215 + $0x38] sm:$0xff]
      %627 = vrot.lane.b32.xlu0 %v611, 107
      %v628 = vpop.permute.xlu0 %627
      %629 = vrot.lane.b32.xlu0 %v612, 107
      %v630 = vpop.permute.xlu0 %629
      %631 = vrot.lane.b32.xlu0 %v613, 107
      %v632 = vpop.permute.xlu0 %631
      %633 = vrot.lane.b32.xlu0 %v614, 107
      %v634 = vpop.permute.xlu0 %633
      %635 = vrot.lane.b32.xlu0 %v615, 107
      %v636 = vpop.permute.xlu0 %635
      %637 = vrot.lane.b32.xlu0 %v616, 107
      %v638 = vpop.permute.xlu0 %637
      %639 = vrot.lane.b32.xlu0 %v617, 107
      %v640 = vpop.permute.xlu0 %639
      %641 = vrot.lane.b32.xlu0 %v618, 107
      %v642 = vpop.permute.xlu0 %641
      %vm643 = vcmask 875520
      %v644 = vsel %vm643, %v628, %v630
      %v645 = vsel %vm643, %v630, %v632
      %v646 = vsel %vm643, %v632, %v634
      %v647 = vsel %vm643, %v634, %v636
      %v648 = vsel %vm643, %v636, %v638
      %v649 = vsel %vm643, %v638, %v640
      %v650 = vsel %vm643, %v640, %v642
      %659 = vst [vmem:[#allocation2 + $0x1c0] sm:$0xff] %v644
      %660 = vst [vmem:[#allocation2 + $0x1c8] sm:$0xff] %v645
      %661 = vst [vmem:[#allocation2 + $0x1d0] sm:$0xff] %v646
      %662 = vst [vmem:[#allocation2 + $0x1d8] sm:$0xff] %v647
      %663 = vst [vmem:[#allocation2 + $0x1e0] sm:$0xff] %v648
      %664 = vst [vmem:[#allocation2 + $0x1e8] sm:$0xff] %v649
      %665 = vst [vmem:[#allocation2 + $0x1f0] sm:$0xff] %v650
      %666 = vst.msk [vmem:[#allocation2 + $0x1f8] sm:$0xff] %vm643, %v642
      %v667 = vld [vmem:[%s215] sm:$0xff]
      %v668 = vld [vmem:[%s215 + $0x8] sm:$0xff]
      %v669 = vld [vmem:[%s215 + $0x10] sm:$0xff]
      %v670 = vld [vmem:[%s215 + $0x18] sm:$0xff]
      %v671 = vld [vmem:[%s215 + $0x20] sm:$0xff]
      %v672 = vld [vmem:[%s215 + $0x28] sm:$0xff]
      %v673 = vld [vmem:[%s215 + $0x30] sm:$0xff]
      %v674 = vld [vmem:[%s215 + $0x38] sm:$0xff]
      %683 = vrot.lane.b32.xlu0 %v667, 106
      %v684 = vpop.permute.xlu0 %683
      %685 = vrot.lane.b32.xlu0 %v668, 106
      %v686 = vpop.permute.xlu0 %685
      %687 = vrot.lane.b32.xlu0 %v669, 106
      %v688 = vpop.permute.xlu0 %687
      %689 = vrot.lane.b32.xlu0 %v670, 106
      %v690 = vpop.permute.xlu0 %689
      %691 = vrot.lane.b32.xlu0 %v671, 106
      %v692 = vpop.permute.xlu0 %691
      %693 = vrot.lane.b32.xlu0 %v672, 106
      %v694 = vpop.permute.xlu0 %693
      %695 = vrot.lane.b32.xlu0 %v673, 106
      %v696 = vpop.permute.xlu0 %695
      %697 = vrot.lane.b32.xlu0 %v674, 106
      %v698 = vpop.permute.xlu0 %697
      %vm699 = vcmask 867328
      %v700 = vsel %vm699, %v684, %v686
      %v701 = vsel %vm699, %v686, %v688
      %v702 = vsel %vm699, %v688, %v690
      %v703 = vsel %vm699, %v690, %v692
      %v704 = vsel %vm699, %v692, %v694
      %v705 = vsel %vm699, %v694, %v696
      %v706 = vsel %vm699, %v696, %v698
      %715 = vst [vmem:[#allocation2 + $0x200] sm:$0xff] %v700
      %716 = vst [vmem:[#allocation2 + $0x208] sm:$0xff] %v701
      %717 = vst [vmem:[#allocation2 + $0x210] sm:$0xff] %v702
      %718 = vst [vmem:[#allocation2 + $0x218] sm:$0xff] %v703
      %719 = vst [vmem:[#allocation2 + $0x220] sm:$0xff] %v704
      %720 = vst [vmem:[#allocation2 + $0x228] sm:$0xff] %v705
      %721 = vst [vmem:[#allocation2 + $0x230] sm:$0xff] %v706
      %722 = vst.msk [vmem:[#allocation2 + $0x238] sm:$0xff] %vm699, %v698
      %v723 = vld [vmem:[%s215] sm:$0xff]
      %v724 = vld [vmem:[%s215 + $0x8] sm:$0xff]
      %v725 = vld [vmem:[%s215 + $0x10] sm:$0xff]
      %v726 = vld [vmem:[%s215 + $0x18] sm:$0xff]
      %v727 = vld [vmem:[%s215 + $0x20] sm:$0xff]
      %v728 = vld [vmem:[%s215 + $0x28] sm:$0xff]
      %v729 = vld [vmem:[%s215 + $0x30] sm:$0xff]
      %v730 = vld [vmem:[%s215 + $0x38] sm:$0xff]
      %739 = vrot.lane.b32.xlu0 %v723, 28
      %v740 = vpop.permute.xlu0 %739
      %741 = vrot.lane.b32.xlu0 %v724, 28
      %v742 = vpop.permute.xlu0 %741
      %743 = vrot.lane.b32.xlu0 %v725, 28
      %v744 = vpop.permute.xlu0 %743
      %745 = vrot.lane.b32.xlu0 %v726, 28
      %v746 = vpop.permute.xlu0 %745
      %747 = vrot.lane.b32.xlu0 %v727, 28
      %v748 = vpop.permute.xlu0 %747
      %749 = vrot.lane.b32.xlu0 %v728, 28
      %v750 = vpop.permute.xlu0 %749
      %751 = vrot.lane.b32.xlu0 %v729, 28
      %v752 = vpop.permute.xlu0 %751
      %753 = vrot.lane.b32.xlu0 %v730, 28
      %v754 = vpop.permute.xlu0 %753
      %vm755 = vcmask 228352
      %v756 = vsel %vm755, %v740, %v742
      %v757 = vsel %vm755, %v742, %v744
      %v758 = vsel %vm755, %v744, %v746
      %v759 = vsel %vm755, %v746, %v748
      %v760 = vsel %vm755, %v748, %v750
      %v761 = vsel %vm755, %v750, %v752
      %v762 = vsel %vm755, %v752, %v754
      %771 = vst [vmem:[#allocation2 + $0x240] sm:$0xff] %v756
      %772 = vst [vmem:[#allocation2 + $0x248] sm:$0xff] %v757
      %773 = vst [vmem:[#allocation2 + $0x250] sm:$0xff] %v758
      %774 = vst [vmem:[#allocation2 + $0x258] sm:$0xff] %v759
      %775 = vst [vmem:[#allocation2 + $0x260] sm:$0xff] %v760
      %776 = vst [vmem:[#allocation2 + $0x268] sm:$0xff] %v761
      %777 = vst [vmem:[#allocation2 + $0x270] sm:$0xff] %v762
      %778 = vst.msk [vmem:[#allocation2 + $0x278] sm:$0xff] %vm755, %v754
      %v779 = vld [vmem:[%s215] sm:$0xff]
      %v780 = vld [vmem:[%s215 + $0x8] sm:$0xff]
      %v781 = vld [vmem:[%s215 + $0x10] sm:$0xff]
      %v782 = vld [vmem:[%s215 + $0x18] sm:$0xff]
      %v783 = vld [vmem:[%s215 + $0x20] sm:$0xff]
      %v784 = vld [vmem:[%s215 + $0x28] sm:$0xff]
      %v785 = vld [vmem:[%s215 + $0x30] sm:$0xff]
      %v786 = vld [vmem:[%s215 + $0x38] sm:$0xff]
      %795 = vrot.lane.b32.xlu0 %v779, 27
      %v796 = vpop.permute.xlu0 %795
      %797 = vrot.lane.b32.xlu0 %v780, 27
      %v798 = vpop.permute.xlu0 %797
      %799 = vrot.lane.b32.xlu0 %v781, 27
      %v800 = vpop.permute.xlu0 %799
      %801 = vrot.lane.b32.xlu0 %v782, 27
      %v802 = vpop.permute.xlu0 %801
      %803 = vrot.lane.b32.xlu0 %v783, 27
      %v804 = vpop.permute.xlu0 %803
      %805 = vrot.lane.b32.xlu0 %v784, 27
      %v806 = vpop.permute.xlu0 %805
      %807 = vrot.lane.b32.xlu0 %v785, 27
      %v808 = vpop.permute.xlu0 %807
      %809 = vrot.lane.b32.xlu0 %v786, 27
      %v810 = vpop.permute.xlu0 %809
      %vm811 = vcmask 220160
      %v812 = vsel %vm811, %v796, %v798
      %v813 = vsel %vm811, %v798, %v800
      %v814 = vsel %vm811, %v800, %v802
      %v815 = vsel %vm811, %v802, %v804
      %v816 = vsel %vm811, %v804, %v806
      %v817 = vsel %vm811, %v806, %v808
      %v818 = vsel %vm811, %v808, %v810
      %827 = vst [vmem:[#allocation2 + $0x280] sm:$0xff] %v812
      %828 = vst [vmem:[#allocation2 + $0x288] sm:$0xff] %v813
      %829 = vst [vmem:[#allocation2 + $0x290] sm:$0xff] %v814
      %830 = vst [vmem:[#allocation2 + $0x298] sm:$0xff] %v815
      %831 = vst [vmem:[#allocation2 + $0x2a0] sm:$0xff] %v816
      %832 = vst [vmem:[#allocation2 + $0x2a8] sm:$0xff] %v817
      %833 = vst [vmem:[#allocation2 + $0x2b0] sm:$0xff] %v818
      %834 = vst.msk [vmem:[#allocation2 + $0x2b8] sm:$0xff] %vm811, %v810
      %v835 = vld [vmem:[%s215] sm:$0xff]
      %v836 = vld [vmem:[%s215 + $0x8] sm:$0xff]
      %v837 = vld [vmem:[%s215 + $0x10] sm:$0xff]
      %v838 = vld [vmem:[%s215 + $0x18] sm:$0xff]
      %v839 = vld [vmem:[%s215 + $0x20] sm:$0xff]
      %v840 = vld [vmem:[%s215 + $0x28] sm:$0xff]
      %v841 = vld [vmem:[%s215 + $0x30] sm:$0xff]
      %v842 = vld [vmem:[%s215 + $0x38] sm:$0xff]
      %851 = vrot.lane.b32.xlu0 %v835, 26
      %v852 = vpop.permute.xlu0 %851
      %853 = vrot.lane.b32.xlu0 %v836, 26
      %v854 = vpop.permute.xlu0 %853
      %855 = vrot.lane.b32.xlu0 %v837, 26
      %v856 = vpop.permute.xlu0 %855
      %857 = vrot.lane.b32.xlu0 %v838, 26
      %v858 = vpop.permute.xlu0 %857
      %859 = vrot.lane.b32.xlu0 %v839, 26
      %v860 = vpop.permute.xlu0 %859
      %861 = vrot.lane.b32.xlu0 %v840, 26
      %v862 = vpop.permute.xlu0 %861
      %863 = vrot.lane.b32.xlu0 %v841, 26
      %v864 = vpop.permute.xlu0 %863
      %865 = vrot.lane.b32.xlu0 %v842, 26
      %v866 = vpop.permute.xlu0 %865
      %vm867 = vcmask 211968
      %v868 = vsel %vm867, %v852, %v854
      %v869 = vsel %vm867, %v854, %v856
      %v870 = vsel %vm867, %v856, %v858
      %v871 = vsel %vm867, %v858, %v860
      %v872 = vsel %vm867, %v860, %v862
      %v873 = vsel %vm867, %v862, %v864
      %v874 = vsel %vm867, %v864, %v866
      %883 = vst [vmem:[#allocation2 + $0x2c0] sm:$0xff] %v868
      %884 = vst [vmem:[#allocation2 + $0x2c8] sm:$0xff] %v869
      %885 = vst [vmem:[#allocation2 + $0x2d0] sm:$0xff] %v870
      %886 = vst [vmem:[#allocation2 + $0x2d8] sm:$0xff] %v871
      %887 = vst [vmem:[#allocation2 + $0x2e0] sm:$0xff] %v872
      %888 = vst [vmem:[#allocation2 + $0x2e8] sm:$0xff] %v873
      %889 = vst [vmem:[#allocation2 + $0x2f0] sm:$0xff] %v874
      %890 = vst.msk [vmem:[#allocation2 + $0x2f8] sm:$0xff] %vm867, %v866
      %v891 = vld [vmem:[%s215] sm:$0xff]
      %v892 = vld [vmem:[%s215 + $0x8] sm:$0xff]
      %v893 = vld [vmem:[%s215 + $0x10] sm:$0xff]
      %v894 = vld [vmem:[%s215 + $0x18] sm:$0xff]
      %v895 = vld [vmem:[%s215 + $0x20] sm:$0xff]
      %v896 = vld [vmem:[%s215 + $0x28] sm:$0xff]
      %v897 = vld [vmem:[%s215 + $0x30] sm:$0xff]
      %v898 = vld [vmem:[%s215 + $0x38] sm:$0xff]
      %907 = vrot.lane.b32.xlu0 %v891, 18
      %v908 = vpop.permute.xlu0 %907
      %909 = vrot.lane.b32.xlu0 %v892, 18
      %v910 = vpop.permute.xlu0 %909
      %911 = vrot.lane.b32.xlu0 %v893, 18
      %v912 = vpop.permute.xlu0 %911
      %913 = vrot.lane.b32.xlu0 %v894, 18
      %v914 = vpop.permute.xlu0 %913
      %915 = vrot.lane.b32.xlu0 %v895, 18
      %v916 = vpop.permute.xlu0 %915
      %917 = vrot.lane.b32.xlu0 %v896, 18
      %v918 = vpop.permute.xlu0 %917
      %919 = vrot.lane.b32.xlu0 %v897, 18
      %v920 = vpop.permute.xlu0 %919
      %921 = vrot.lane.b32.xlu0 %v898, 18
      %v922 = vpop.permute.xlu0 %921
      %vm923 = vcmask 146432
      %v924 = vsel %vm923, %v908, %v910
      %v925 = vsel %vm923, %v910, %v912
      %v926 = vsel %vm923, %v912, %v914
      %v927 = vsel %vm923, %v914, %v916
      %v928 = vsel %vm923, %v916, %v918
      %v929 = vsel %vm923, %v918, %v920
      %v930 = vsel %vm923, %v920, %v922
      %939 = vst [vmem:[#allocation2 + $0x300] sm:$0xff] %v924
      %940 = vst [vmem:[#allocation2 + $0x308] sm:$0xff] %v925
      %941 = vst [vmem:[#allocation2 + $0x310] sm:$0xff] %v926
      %942 = vst [vmem:[#allocation2 + $0x318] sm:$0xff] %v927
      %943 = vst [vmem:[#allocation2 + $0x320] sm:$0xff] %v928
      %944 = vst [vmem:[#allocation2 + $0x328] sm:$0xff] %v929
      %945 = vst [vmem:[#allocation2 + $0x330] sm:$0xff] %v930
      %946 = vst.msk [vmem:[#allocation2 + $0x338] sm:$0xff] %vm923, %v922
      %v947 = vld [vmem:[%s215] sm:$0xff]
      %v948 = vld [vmem:[%s215 + $0x8] sm:$0xff]
      %v949 = vld [vmem:[%s215 + $0x10] sm:$0xff]
      %v950 = vld [vmem:[%s215 + $0x18] sm:$0xff]
      %v951 = vld [vmem:[%s215 + $0x20] sm:$0xff]
      %v952 = vld [vmem:[%s215 + $0x28] sm:$0xff]
      %v953 = vld [vmem:[%s215 + $0x30] sm:$0xff]
      %v954 = vld [vmem:[%s215 + $0x38] sm:$0xff]
      %963 = vrot.lane.b32.xlu0 %v947, 17
      %v964 = vpop.permute.xlu0 %963
      %965 = vrot.lane.b32.xlu0 %v948, 17
      %v966 = vpop.permute.xlu0 %965
      %967 = vrot.lane.b32.xlu0 %v949, 17
      %v968 = vpop.permute.xlu0 %967
      %969 = vrot.lane.b32.xlu0 %v950, 17
      %v970 = vpop.permute.xlu0 %969
      %971 = vrot.lane.b32.xlu0 %v951, 17
      %v972 = vpop.permute.xlu0 %971
      %973 = vrot.lane.b32.xlu0 %v952, 17
      %v974 = vpop.permute.xlu0 %973
      %975 = vrot.lane.b32.xlu0 %v953, 17
      %v976 = vpop.permute.xlu0 %975
      %977 = vrot.lane.b32.xlu0 %v954, 17
      %v978 = vpop.permute.xlu0 %977
      %vm979 = vcmask 138240
      %v980 = vsel %vm979, %v964, %v966
      %v981 = vsel %vm979, %v966, %v968
      %v982 = vsel %vm979, %v968, %v970
      %v983 = vsel %vm979, %v970, %v972
      %v984 = vsel %vm979, %v972, %v974
      %v985 = vsel %vm979, %v974, %v976
      %v986 = vsel %vm979, %v976, %v978
      %995 = vst [vmem:[#allocation2 + $0x340] sm:$0xff] %v980
      %996 = vst [vmem:[#allocation2 + $0x348] sm:$0xff] %v981
      %997 = vst [vmem:[#allocation2 + $0x350] sm:$0xff] %v982
      %998 = vst [vmem:[#allocation2 + $0x358] sm:$0xff] %v983
      %999 = vst [vmem:[#allocation2 + $0x360] sm:$0xff] %v984
      %1000 = vst [vmem:[#allocation2 + $0x368] sm:$0xff] %v985
      %1001 = vst [vmem:[#allocation2 + $0x370] sm:$0xff] %v986
      %1002 = vst.msk [vmem:[#allocation2 + $0x378] sm:$0xff] %vm979, %v978
      %v1003 = vld [vmem:[%s215] sm:$0xff]
      %v1004 = vld [vmem:[%s215 + $0x8] sm:$0xff]
      %v1005 = vld [vmem:[%s215 + $0x10] sm:$0xff]
      %v1006 = vld [vmem:[%s215 + $0x18] sm:$0xff]
      %v1007 = vld [vmem:[%s215 + $0x20] sm:$0xff]
      %v1008 = vld [vmem:[%s215 + $0x28] sm:$0xff]
      %v1009 = vld [vmem:[%s215 + $0x30] sm:$0xff]
      %v1010 = vld [vmem:[%s215 + $0x38] sm:$0xff]
      %1019 = vrot.lane.b32.xlu0 %v1003, 16
      %v1020 = vpop.permute.xlu0 %1019
      %1021 = vrot.lane.b32.xlu0 %v1004, 16
      %v1022 = vpop.permute.xlu0 %1021
      %1023 = vrot.lane.b32.xlu0 %v1005, 16
      %v1024 = vpop.permute.xlu0 %1023
      %1025 = vrot.lane.b32.xlu0 %v1006, 16
      %v1026 = vpop.permute.xlu0 %1025
      %1027 = vrot.lane.b32.xlu0 %v1007, 16
      %v1028 = vpop.permute.xlu0 %1027
      %1029 = vrot.lane.b32.xlu0 %v1008, 16
      %v1030 = vpop.permute.xlu0 %1029
      %1031 = vrot.lane.b32.xlu0 %v1009, 16
      %v1032 = vpop.permute.xlu0 %1031
      %1033 = vrot.lane.b32.xlu0 %v1010, 16
      %v1034 = vpop.permute.xlu0 %1033
      %vm1035 = vcmask 130048
      %v1036 = vsel %vm1035, %v1020, %v1022
      %v1037 = vsel %vm1035, %v1022, %v1024
      %v1038 = vsel %vm1035, %v1024, %v1026
      %v1039 = vsel %vm1035, %v1026, %v1028
      %v1040 = vsel %vm1035, %v1028, %v1030
      %v1041 = vsel %vm1035, %v1030, %v1032
      %v1042 = vsel %vm1035, %v1032, %v1034
      %1051 = vst [vmem:[#allocation2 + $0x380] sm:$0xff] %v1036
      %1052 = vst [vmem:[#allocation2 + $0x388] sm:$0xff] %v1037
      %1053 = vst [vmem:[#allocation2 + $0x390] sm:$0xff] %v1038
      %1054 = vst [vmem:[#allocation2 + $0x398] sm:$0xff] %v1039
      %1055 = vst [vmem:[#allocation2 + $0x3a0] sm:$0xff] %v1040
      %1056 = vst [vmem:[#allocation2 + $0x3a8] sm:$0xff] %v1041
      %1057 = vst [vmem:[#allocation2 + $0x3b0] sm:$0xff] %v1042
      %1058 = vst.msk [vmem:[#allocation2 + $0x3b8] sm:$0xff] %vm1035, %v1034
      %v1059 = vld [vmem:[%s215] sm:$0xff]
      %v1060 = vld [vmem:[%s215 + $0x8] sm:$0xff]
      %v1061 = vld [vmem:[%s215 + $0x10] sm:$0xff]
      %v1062 = vld [vmem:[%s215 + $0x18] sm:$0xff]
      %v1063 = vld [vmem:[%s215 + $0x20] sm:$0xff]
      %v1064 = vld [vmem:[%s215 + $0x28] sm:$0xff]
      %v1065 = vld [vmem:[%s215 + $0x30] sm:$0xff]
      %v1066 = vld [vmem:[%s215 + $0x38] sm:$0xff]
      %1075 = vrot.lane.b32.xlu0 %v1059, 8
      %v1076 = vpop.permute.xlu0 %1075
      %1077 = vrot.lane.b32.xlu0 %v1060, 8
      %v1078 = vpop.permute.xlu0 %1077
      %1079 = vrot.lane.b32.xlu0 %v1061, 8
      %v1080 = vpop.permute.xlu0 %1079
      %1081 = vrot.lane.b32.xlu0 %v1062, 8
      %v1082 = vpop.permute.xlu0 %1081
      %1083 = vrot.lane.b32.xlu0 %v1063, 8
      %v1084 = vpop.permute.xlu0 %1083
      %1085 = vrot.lane.b32.xlu0 %v1064, 8
      %v1086 = vpop.permute.xlu0 %1085
      %1087 = vrot.lane.b32.xlu0 %v1065, 8
      %v1088 = vpop.permute.xlu0 %1087
      %1089 = vrot.lane.b32.xlu0 %v1066, 8
      %v1090 = vpop.permute.xlu0 %1089
      %vm1091 = vcmask 64512
      %v1092 = vsel %vm1091, %v1076, %v1078
      %v1093 = vsel %vm1091, %v1078, %v1080
      %v1094 = vsel %vm1091, %v1080, %v1082
      %v1095 = vsel %vm1091, %v1082, %v1084
      %v1096 = vsel %vm1091, %v1084, %v1086
      %v1097 = vsel %vm1091, %v1086, %v1088
      %v1098 = vsel %vm1091, %v1088, %v1090
      %1107 = vst [vmem:[#allocation2 + $0x3c0] sm:$0xff] %v1092
      %1108 = vst [vmem:[#allocation2 + $0x3c8] sm:$0xff] %v1093
      %1109 = vst [vmem:[#allocation2 + $0x3d0] sm:$0xff] %v1094
      %1110 = vst [vmem:[#allocation2 + $0x3d8] sm:$0xff] %v1095
      %1111 = vst [vmem:[#allocation2 + $0x3e0] sm:$0xff] %v1096
      %1112 = vst [vmem:[#allocation2 + $0x3e8] sm:$0xff] %v1097
      %1113 = vst [vmem:[#allocation2 + $0x3f0] sm:$0xff] %v1098
      %1114 = vst.msk [vmem:[#allocation2 + $0x3f8] sm:$0xff] %vm1091, %v1090
      %v1115 = vld [vmem:[%s215] sm:$0xff]
      %v1116 = vld [vmem:[%s215 + $0x8] sm:$0xff]
      %v1117 = vld [vmem:[%s215 + $0x10] sm:$0xff]
      %v1118 = vld [vmem:[%s215 + $0x18] sm:$0xff]
      %v1119 = vld [vmem:[%s215 + $0x20] sm:$0xff]
      %v1120 = vld [vmem:[%s215 + $0x28] sm:$0xff]
      %v1121 = vld [vmem:[%s215 + $0x30] sm:$0xff]
      %v1122 = vld [vmem:[%s215 + $0x38] sm:$0xff]
      %1131 = vrot.lane.b32.xlu0 %v1115, 7
      %v1132 = vpop.permute.xlu0 %1131
      %1133 = vrot.lane.b32.xlu0 %v1116, 7
      %v1134 = vpop.permute.xlu0 %1133
      %1135 = vrot.lane.b32.xlu0 %v1117, 7
      %v1136 = vpop.permute.xlu0 %1135
      %1137 = vrot.lane.b32.xlu0 %v1118, 7
      %v1138 = vpop.permute.xlu0 %1137
      %1139 = vrot.lane.b32.xlu0 %v1119, 7
      %v1140 = vpop.permute.xlu0 %1139
      %1141 = vrot.lane.b32.xlu0 %v1120, 7
      %v1142 = vpop.permute.xlu0 %1141
      %1143 = vrot.lane.b32.xlu0 %v1121, 7
      %v1144 = vpop.permute.xlu0 %1143
      %1145 = vrot.lane.b32.xlu0 %v1122, 7
      %v1146 = vpop.permute.xlu0 %1145
      %vm1147 = vcmask 56320
      %v1148 = vsel %vm1147, %v1132, %v1134
      %v1149 = vsel %vm1147, %v1134, %v1136
      %v1150 = vsel %vm1147, %v1136, %v1138
      %v1151 = vsel %vm1147, %v1138, %v1140
      %v1152 = vsel %vm1147, %v1140, %v1142
      %v1153 = vsel %vm1147, %v1142, %v1144
      %v1154 = vsel %vm1147, %v1144, %v1146
      %1163 = vst [vmem:[#allocation2 + $0x400] sm:$0xff] %v1148
      %1164 = vst [vmem:[#allocation2 + $0x408] sm:$0xff] %v1149
      %1165 = vst [vmem:[#allocation2 + $0x410] sm:$0xff] %v1150
      %1166 = vst [vmem:[#allocation2 + $0x418] sm:$0xff] %v1151
      %1167 = vst [vmem:[#allocation2 + $0x420] sm:$0xff] %v1152
      %1168 = vst [vmem:[#allocation2 + $0x428] sm:$0xff] %v1153
      %1169 = vst [vmem:[#allocation2 + $0x430] sm:$0xff] %v1154
      %1170 = vst.msk [vmem:[#allocation2 + $0x438] sm:$0xff] %vm1147, %v1146
      %v1171 = vld [vmem:[%s215] sm:$0xff]
      %v1172 = vld [vmem:[%s215 + $0x8] sm:$0xff]
      %v1173 = vld [vmem:[%s215 + $0x10] sm:$0xff]
      %v1174 = vld [vmem:[%s215 + $0x18] sm:$0xff]
      %v1175 = vld [vmem:[%s215 + $0x20] sm:$0xff]
      %v1176 = vld [vmem:[%s215 + $0x28] sm:$0xff]
      %v1177 = vld [vmem:[%s215 + $0x30] sm:$0xff]
      %v1178 = vld [vmem:[%s215 + $0x38] sm:$0xff]
      %1187 = vrot.lane.b32.xlu0 %v1171, 6
      %v1188 = vpop.permute.xlu0 %1187
      %1189 = vrot.lane.b32.xlu0 %v1172, 6
      %v1190 = vpop.permute.xlu0 %1189
      %1191 = vrot.lane.b32.xlu0 %v1173, 6
      %v1192 = vpop.permute.xlu0 %1191
      %1193 = vrot.lane.b32.xlu0 %v1174, 6
      %v1194 = vpop.permute.xlu0 %1193
      %1195 = vrot.lane.b32.xlu0 %v1175, 6
      %v1196 = vpop.permute.xlu0 %1195
      %1197 = vrot.lane.b32.xlu0 %v1176, 6
      %v1198 = vpop.permute.xlu0 %1197
      %1199 = vrot.lane.b32.xlu0 %v1177, 6
      %v1200 = vpop.permute.xlu0 %1199
      %1201 = vrot.lane.b32.xlu0 %v1178, 6
      %v1202 = vpop.permute.xlu0 %1201
      %vm1203 = vcmask 48128
      %v1204 = vsel %vm1203, %v1188, %v1190
      %v1205 = vsel %vm1203, %v1190, %v1192
      %v1206 = vsel %vm1203, %v1192, %v1194
      %v1207 = vsel %vm1203, %v1194, %v1196
      %v1208 = vsel %vm1203, %v1196, %v1198
      %v1209 = vsel %vm1203, %v1198, %v1200
      %v1210 = vsel %vm1203, %v1200, %v1202
      %1219 = vst [vmem:[#allocation2 + $0x440] sm:$0xff] %v1204
      %1220 = vst [vmem:[#allocation2 + $0x448] sm:$0xff] %v1205
      %1221 = vst [vmem:[#allocation2 + $0x450] sm:$0xff] %v1206
      %1222 = vst [vmem:[#allocation2 + $0x458] sm:$0xff] %v1207
      %1223 = vst [vmem:[#allocation2 + $0x460] sm:$0xff] %v1208
      %1224 = vst [vmem:[#allocation2 + $0x468] sm:$0xff] %v1209
      %1225 = vst [vmem:[#allocation2 + $0x470] sm:$0xff] %v1210
      %1226 = vst.msk [vmem:[#allocation2 + $0x478] sm:$0xff] %vm1203, %v1202
      %v1227 = vld [vmem:[%s215 + $0x8] sm:$0xff]
      %v1228 = vld [vmem:[%s215 + $0x10] sm:$0xff]
      %v1229 = vld [vmem:[%s215 + $0x18] sm:$0xff]
      %v1230 = vld [vmem:[%s215 + $0x20] sm:$0xff]
      %v1231 = vld [vmem:[%s215 + $0x28] sm:$0xff]
      %v1232 = vld [vmem:[%s215 + $0x30] sm:$0xff]
      %v1233 = vld [vmem:[%s215 + $0x38] sm:$0xff]
      %1241 = vrot.lane.b32.xlu0 %v1227, 56
      %v1242 = vpop.permute.xlu0 %1241
      %1243 = vrot.lane.b32.xlu0 %v1228, 56
      %v1244 = vpop.permute.xlu0 %1243
      %1245 = vrot.lane.b32.xlu0 %v1229, 56
      %v1246 = vpop.permute.xlu0 %1245
      %1247 = vrot.lane.b32.xlu0 %v1230, 56
      %v1248 = vpop.permute.xlu0 %1247
      %1249 = vrot.lane.b32.xlu0 %v1231, 56
      %v1250 = vpop.permute.xlu0 %1249
      %1251 = vrot.lane.b32.xlu0 %v1232, 56
      %v1252 = vpop.permute.xlu0 %1251
      %1253 = vrot.lane.b32.xlu0 %v1233, 56
      %v1254 = vpop.permute.xlu0 %1253
      %vm1255 = vcmask 457728
      %v1256 = vsel %vm1255, %v1242, %v1244
      %v1257 = vsel %vm1255, %v1244, %v1246
      %v1258 = vsel %vm1255, %v1246, %v1248
      %v1259 = vsel %vm1255, %v1248, %v1250
      %v1260 = vsel %vm1255, %v1250, %v1252
      %v1261 = vsel %vm1255, %v1252, %v1254
      %1269 = vst [vmem:[#allocation2 + $0x480] sm:$0xff] %v1256
      %1270 = vst [vmem:[#allocation2 + $0x488] sm:$0xff] %v1257
      %1271 = vst [vmem:[#allocation2 + $0x490] sm:$0xff] %v1258
      %1272 = vst [vmem:[#allocation2 + $0x498] sm:$0xff] %v1259
      %1273 = vst [vmem:[#allocation2 + $0x4a0] sm:$0xff] %v1260
      %1274 = vst [vmem:[#allocation2 + $0x4a8] sm:$0xff] %v1261
      %1275 = vst.msk [vmem:[#allocation2 + $0x4b0] sm:$0xff] %vm1255, %v1254
      %v1276 = vld [vmem:[%s215 + $0x8] sm:$0xff]
      %v1277 = vld [vmem:[%s215 + $0x10] sm:$0xff]
      %v1278 = vld [vmem:[%s215 + $0x18] sm:$0xff]
      %v1279 = vld [vmem:[%s215 + $0x20] sm:$0xff]
      %v1280 = vld [vmem:[%s215 + $0x28] sm:$0xff]
      %v1281 = vld [vmem:[%s215 + $0x30] sm:$0xff]
      %v1282 = vld [vmem:[%s215 + $0x38] sm:$0xff]
      %1290 = vrot.lane.b32.xlu0 %v1276, 55
      %v1291 = vpop.permute.xlu0 %1290
      %1292 = vrot.lane.b32.xlu0 %v1277, 55
      %v1293 = vpop.permute.xlu0 %1292
      %1294 = vrot.lane.b32.xlu0 %v1278, 55
      %v1295 = vpop.permute.xlu0 %1294
      %1296 = vrot.lane.b32.xlu0 %v1279, 55
      %v1297 = vpop.permute.xlu0 %1296
      %1298 = vrot.lane.b32.xlu0 %v1280, 55
      %v1299 = vpop.permute.xlu0 %1298
      %1300 = vrot.lane.b32.xlu0 %v1281, 55
      %v1301 = vpop.permute.xlu0 %1300
      %1302 = vrot.lane.b32.xlu0 %v1282, 55
      %v1303 = vpop.permute.xlu0 %1302
      %vm1304 = vcmask 449536
      %v1305 = vsel %vm1304, %v1291, %v1293
      %v1306 = vsel %vm1304, %v1293, %v1295
      %v1307 = vsel %vm1304, %v1295, %v1297
      %v1308 = vsel %vm1304, %v1297, %v1299
      %v1309 = vsel %vm1304, %v1299, %v1301
      %v1310 = vsel %vm1304, %v1301, %v1303
      %1318 = vst [vmem:[#allocation2 + $0x4c0] sm:$0xff] %v1305
      %1319 = vst [vmem:[#allocation2 + $0x4c8] sm:$0xff] %v1306
      %1320 = vst [vmem:[#allocation2 + $0x4d0] sm:$0xff] %v1307
      %1321 = vst [vmem:[#allocation2 + $0x4d8] sm:$0xff] %v1308
      %1322 = vst [vmem:[#allocation2 + $0x4e0] sm:$0xff] %v1309
      %1323 = vst [vmem:[#allocation2 + $0x4e8] sm:$0xff] %v1310
      %1324 = vst.msk [vmem:[#allocation2 + $0x4f0] sm:$0xff] %vm1304, %v1303
      %v1325 = vld [vmem:[%s215 + $0x8] sm:$0xff]
      %v1326 = vld [vmem:[%s215 + $0x10] sm:$0xff]
      %v1327 = vld [vmem:[%s215 + $0x18] sm:$0xff]
      %v1328 = vld [vmem:[%s215 + $0x20] sm:$0xff]
      %v1329 = vld [vmem:[%s215 + $0x28] sm:$0xff]
      %v1330 = vld [vmem:[%s215 + $0x30] sm:$0xff]
      %v1331 = vld [vmem:[%s215 + $0x38] sm:$0xff]
      %1339 = vrot.lane.b32.xlu0 %v1325, 54
      %v1340 = vpop.permute.xlu0 %1339
      %1341 = vrot.lane.b32.xlu0 %v1326, 54
      %v1342 = vpop.permute.xlu0 %1341
      %1343 = vrot.lane.b32.xlu0 %v1327, 54
      %v1344 = vpop.permute.xlu0 %1343
      %1345 = vrot.lane.b32.xlu0 %v1328, 54
      %v1346 = vpop.permute.xlu0 %1345
      %1347 = vrot.lane.b32.xlu0 %v1329, 54
      %v1348 = vpop.permute.xlu0 %1347
      %1349 = vrot.lane.b32.xlu0 %v1330, 54
      %v1350 = vpop.permute.xlu0 %1349
      %1351 = vrot.lane.b32.xlu0 %v1331, 54
      %v1352 = vpop.permute.xlu0 %1351
      %vm1353 = vcmask 441344
      %v1354 = vsel %vm1353, %v1340, %v1342
      %v1355 = vsel %vm1353, %v1342, %v1344
      %v1356 = vsel %vm1353, %v1344, %v1346
      %v1357 = vsel %vm1353, %v1346, %v1348
      %v1358 = vsel %vm1353, %v1348, %v1350
      %v1359 = vsel %vm1353, %v1350, %v1352
      %1367 = vst [vmem:[#allocation2 + $0x500] sm:$0xff] %v1354
      %1368 = vst [vmem:[#allocation2 + $0x508] sm:$0xff] %v1355
      %1369 = vst [vmem:[#allocation2 + $0x510] sm:$0xff] %v1356
      %1370 = vst [vmem:[#allocation2 + $0x518] sm:$0xff] %v1357
      %1371 = vst [vmem:[#allocation2 + $0x520] sm:$0xff] %v1358
      %1372 = vst [vmem:[#allocation2 + $0x528] sm:$0xff] %v1359
      %1373 = vst.msk [vmem:[#allocation2 + $0x530] sm:$0xff] %vm1353, %v1352
      %v1374 = vld [vmem:[%s215 + $0x8] sm:$0xff]
      %v1375 = vld [vmem:[%s215 + $0x10] sm:$0xff]
      %v1376 = vld [vmem:[%s215 + $0x18] sm:$0xff]
      %v1377 = vld [vmem:[%s215 + $0x20] sm:$0xff]
      %v1378 = vld [vmem:[%s215 + $0x28] sm:$0xff]
      %v1379 = vld [vmem:[%s215 + $0x30] sm:$0xff]
      %v1380 = vld [vmem:[%s215 + $0x38] sm:$0xff]
      %1388 = vrot.lane.b32.xlu0 %v1374, 46
      %v1389 = vpop.permute.xlu0 %1388
      %1390 = vrot.lane.b32.xlu0 %v1375, 46
      %v1391 = vpop.permute.xlu0 %1390
      %1392 = vrot.lane.b32.xlu0 %v1376, 46
      %v1393 = vpop.permute.xlu0 %1392
      %1394 = vrot.lane.b32.xlu0 %v1377, 46
      %v1395 = vpop.permute.xlu0 %1394
      %1396 = vrot.lane.b32.xlu0 %v1378, 46
      %v1397 = vpop.permute.xlu0 %1396
      %1398 = vrot.lane.b32.xlu0 %v1379, 46
      %v1399 = vpop.permute.xlu0 %1398
      %1400 = vrot.lane.b32.xlu0 %v1380, 46
      %v1401 = vpop.permute.xlu0 %1400
      %vm1402 = vcmask 375808
      %v1403 = vsel %vm1402, %v1389, %v1391
      %v1404 = vsel %vm1402, %v1391, %v1393
      %v1405 = vsel %vm1402, %v1393, %v1395
      %v1406 = vsel %vm1402, %v1395, %v1397
      %v1407 = vsel %vm1402, %v1397, %v1399
      %v1408 = vsel %vm1402, %v1399, %v1401
      %1416 = vst [vmem:[#allocation2 + $0x540] sm:$0xff] %v1403
      %1417 = vst [vmem:[#allocation2 + $0x548] sm:$0xff] %v1404
      %1418 = vst [vmem:[#allocation2 + $0x550] sm:$0xff] %v1405
      %1419 = vst [vmem:[#allocation2 + $0x558] sm:$0xff] %v1406
      %1420 = vst [vmem:[#allocation2 + $0x560] sm:$0xff] %v1407
      %1421 = vst [vmem:[#allocation2 + $0x568] sm:$0xff] %v1408
      %1422 = vst.msk [vmem:[#allocation2 + $0x570] sm:$0xff] %vm1402, %v1401
      %v1423 = vld [vmem:[%s215 + $0x8] sm:$0xff]
      %v1424 = vld [vmem:[%s215 + $0x10] sm:$0xff]
      %v1425 = vld [vmem:[%s215 + $0x18] sm:$0xff]
      %v1426 = vld [vmem:[%s215 + $0x20] sm:$0xff]
      %v1427 = vld [vmem:[%s215 + $0x28] sm:$0xff]
      %v1428 = vld [vmem:[%s215 + $0x30] sm:$0xff]
      %v1429 = vld [vmem:[%s215 + $0x38] sm:$0xff]
      %1437 = vrot.lane.b32.xlu0 %v1423, 45
      %v1438 = vpop.permute.xlu0 %1437
      %1439 = vrot.lane.b32.xlu0 %v1424, 45
      %v1440 = vpop.permute.xlu0 %1439
      %1441 = vrot.lane.b32.xlu0 %v1425, 45
      %v1442 = vpop.permute.xlu0 %1441
      %1443 = vrot.lane.b32.xlu0 %v1426, 45
      %v1444 = vpop.permute.xlu0 %1443
      %1445 = vrot.lane.b32.xlu0 %v1427, 45
      %v1446 = vpop.permute.xlu0 %1445
      %1447 = vrot.lane.b32.xlu0 %v1428, 45
      %v1448 = vpop.permute.xlu0 %1447
      %1449 = vrot.lane.b32.xlu0 %v1429, 45
      %v1450 = vpop.permute.xlu0 %1449
      %vm1451 = vcmask 367616
      %v1452 = vsel %vm1451, %v1438, %v1440
      %v1453 = vsel %vm1451, %v1440, %v1442
      %v1454 = vsel %vm1451, %v1442, %v1444
      %v1455 = vsel %vm1451, %v1444, %v1446
      %v1456 = vsel %vm1451, %v1446, %v1448
      %v1457 = vsel %vm1451, %v1448, %v1450
      %1465 = vst [vmem:[#allocation2 + $0x580] sm:$0xff] %v1452
      %1466 = vst [vmem:[#allocation2 + $0x588] sm:$0xff] %v1453
      %1467 = vst [vmem:[#allocation2 + $0x590] sm:$0xff] %v1454
      %1468 = vst [vmem:[#allocation2 + $0x598] sm:$0xff] %v1455
      %1469 = vst [vmem:[#allocation2 + $0x5a0] sm:$0xff] %v1456
      %1470 = vst [vmem:[#allocation2 + $0x5a8] sm:$0xff] %v1457
      %1471 = vst.msk [vmem:[#allocation2 + $0x5b0] sm:$0xff] %vm1451, %v1450
      %v1472 = vld [vmem:[%s215 + $0x8] sm:$0xff]
      %v1473 = vld [vmem:[%s215 + $0x10] sm:$0xff]
      %v1474 = vld [vmem:[%s215 + $0x18] sm:$0xff]
      %v1475 = vld [vmem:[%s215 + $0x20] sm:$0xff]
      %v1476 = vld [vmem:[%s215 + $0x28] sm:$0xff]
      %v1477 = vld [vmem:[%s215 + $0x30] sm:$0xff]
      %v1478 = vld [vmem:[%s215 + $0x38] sm:$0xff]
      %1486 = vrot.lane.b32.xlu0 %v1472, 44
      %v1487 = vpop.permute.xlu0 %1486
      %1488 = vrot.lane.b32.xlu0 %v1473, 44
      %v1489 = vpop.permute.xlu0 %1488
      %1490 = vrot.lane.b32.xlu0 %v1474, 44
      %v1491 = vpop.permute.xlu0 %1490
      %1492 = vrot.lane.b32.xlu0 %v1475, 44
      %v1493 = vpop.permute.xlu0 %1492
      %1494 = vrot.lane.b32.xlu0 %v1476, 44
      %v1495 = vpop.permute.xlu0 %1494
      %1496 = vrot.lane.b32.xlu0 %v1477, 44
      %v1497 = vpop.permute.xlu0 %1496
      %1498 = vrot.lane.b32.xlu0 %v1478, 44
      %v1499 = vpop.permute.xlu0 %1498
      %vm1500 = vcmask 359424
      %v1501 = vsel %vm1500, %v1487, %v1489
      %v1502 = vsel %vm1500, %v1489, %v1491
      %v1503 = vsel %vm1500, %v1491, %v1493
      %v1504 = vsel %vm1500, %v1493, %v1495
      %v1505 = vsel %vm1500, %v1495, %v1497
      %v1506 = vsel %vm1500, %v1497, %v1499
      %1514 = vst [vmem:[#allocation2 + $0x5c0] sm:$0xff] %v1501
      %1515 = vst [vmem:[#allocation2 + $0x5c8] sm:$0xff] %v1502
      %1516 = vst [vmem:[#allocation2 + $0x5d0] sm:$0xff] %v1503
      %1517 = vst [vmem:[#allocation2 + $0x5d8] sm:$0xff] %v1504
      %1518 = vst [vmem:[#allocation2 + $0x5e0] sm:$0xff] %v1505
      %1519 = vst [vmem:[#allocation2 + $0x5e8] sm:$0xff] %v1506
      %1520 = vst.msk [vmem:[#allocation2 + $0x5f0] sm:$0xff] %vm1500, %v1499
      %v1521 = vld [vmem:[%s215 + $0x8] sm:$0xff]
      %v1522 = vld [vmem:[%s215 + $0x10] sm:$0xff]
      %v1523 = vld [vmem:[%s215 + $0x18] sm:$0xff]
      %v1524 = vld [vmem:[%s215 + $0x20] sm:$0xff]
      %v1525 = vld [vmem:[%s215 + $0x28] sm:$0xff]
      %v1526 = vld [vmem:[%s215 + $0x30] sm:$0xff]
      %v1527 = vld [vmem:[%s215 + $0x38] sm:$0xff]
      %1535 = vrot.lane.b32.xlu0 %v1521, 36
      %v1536 = vpop.permute.xlu0 %1535
      %1537 = vrot.lane.b32.xlu0 %v1522, 36
      %v1538 = vpop.permute.xlu0 %1537
      %1539 = vrot.lane.b32.xlu0 %v1523, 36
      %v1540 = vpop.permute.xlu0 %1539
      %1541 = vrot.lane.b32.xlu0 %v1524, 36
      %v1542 = vpop.permute.xlu0 %1541
      %1543 = vrot.lane.b32.xlu0 %v1525, 36
      %v1544 = vpop.permute.xlu0 %1543
      %1545 = vrot.lane.b32.xlu0 %v1526, 36
      %v1546 = vpop.permute.xlu0 %1545
      %1547 = vrot.lane.b32.xlu0 %v1527, 36
      %v1548 = vpop.permute.xlu0 %1547
      %vm1549 = vcmask 293888
      %v1550 = vsel %vm1549, %v1536, %v1538
      %v1551 = vsel %vm1549, %v1538, %v1540
      %v1552 = vsel %vm1549, %v1540, %v1542
      %v1553 = vsel %vm1549, %v1542, %v1544
      %v1554 = vsel %vm1549, %v1544, %v1546
      %v1555 = vsel %vm1549, %v1546, %v1548
      %1563 = vst [vmem:[#allocation2 + $0x600] sm:$0xff] %v1550
      %1564 = vst [vmem:[#allocation2 + $0x608] sm:$0xff] %v1551
      %1565 = vst [vmem:[#allocation2 + $0x610] sm:$0xff] %v1552
      %1566 = vst [vmem:[#allocation2 + $0x618] sm:$0xff] %v1553
      %1567 = vst [vmem:[#allocation2 + $0x620] sm:$0xff] %v1554
      %1568 = vst [vmem:[#allocation2 + $0x628] sm:$0xff] %v1555
      %1569 = vst.msk [vmem:[#allocation2 + $0x630] sm:$0xff] %vm1549, %v1548
      %v1570 = vld [vmem:[%s215 + $0x8] sm:$0xff]
      %v1571 = vld [vmem:[%s215 + $0x10] sm:$0xff]
      %v1572 = vld [vmem:[%s215 + $0x18] sm:$0xff]
      %v1573 = vld [vmem:[%s215 + $0x20] sm:$0xff]
      %v1574 = vld [vmem:[%s215 + $0x28] sm:$0xff]
      %v1575 = vld [vmem:[%s215 + $0x30] sm:$0xff]
      %v1576 = vld [vmem:[%s215 + $0x38] sm:$0xff]
      %1584 = vrot.lane.b32.xlu0 %v1570, 35
      %v1585 = vpop.permute.xlu0 %1584
      %1586 = vrot.lane.b32.xlu0 %v1571, 35
      %v1587 = vpop.permute.xlu0 %1586
      %1588 = vrot.lane.b32.xlu0 %v1572, 35
      %v1589 = vpop.permute.xlu0 %1588
      %1590 = vrot.lane.b32.xlu0 %v1573, 35
      %v1591 = vpop.permute.xlu0 %1590
      %1592 = vrot.lane.b32.xlu0 %v1574, 35
      %v1593 = vpop.permute.xlu0 %1592
      %1594 = vrot.lane.b32.xlu0 %v1575, 35
      %v1595 = vpop.permute.xlu0 %1594
      %1596 = vrot.lane.b32.xlu0 %v1576, 35
      %v1597 = vpop.permute.xlu0 %1596
      %vm1598 = vcmask 285696
      %v1599 = vsel %vm1598, %v1585, %v1587
      %v1600 = vsel %vm1598, %v1587, %v1589
      %v1601 = vsel %vm1598, %v1589, %v1591
      %v1602 = vsel %vm1598, %v1591, %v1593
      %v1603 = vsel %vm1598, %v1593, %v1595
      %v1604 = vsel %vm1598, %v1595, %v1597
      %1612 = vst [vmem:[#allocation2 + $0x640] sm:$0xff] %v1599
      %1613 = vst [vmem:[#allocation2 + $0x648] sm:$0xff] %v1600
      %1614 = vst [vmem:[#allocation2 + $0x650] sm:$0xff] %v1601
      %1615 = vst [vmem:[#allocation2 + $0x658] sm:$0xff] %v1602
      %1616 = vst [vmem:[#allocation2 + $0x660] sm:$0xff] %v1603
      %1617 = vst [vmem:[#allocation2 + $0x668] sm:$0xff] %v1604
      %1618 = vst.msk [vmem:[#allocation2 + $0x670] sm:$0xff] %vm1598, %v1597
      %v1619 = vld [vmem:[%s215 + $0x8] sm:$0xff]
      %v1620 = vld [vmem:[%s215 + $0x10] sm:$0xff]
      %v1621 = vld [vmem:[%s215 + $0x18] sm:$0xff]
      %v1622 = vld [vmem:[%s215 + $0x20] sm:$0xff]
      %v1623 = vld [vmem:[%s215 + $0x28] sm:$0xff]
      %v1624 = vld [vmem:[%s215 + $0x30] sm:$0xff]
      %v1625 = vld [vmem:[%s215 + $0x38] sm:$0xff]
      %1633 = vrot.lane.b32.xlu0 %v1619, 34
      %v1634 = vpop.permute.xlu0 %1633
      %1635 = vrot.lane.b32.xlu0 %v1620, 34
      %v1636 = vpop.permute.xlu0 %1635
      %1637 = vrot.lane.b32.xlu0 %v1621, 34
      %v1638 = vpop.permute.xlu0 %1637
      %1639 = vrot.lane.b32.xlu0 %v1622, 34
      %v1640 = vpop.permute.xlu0 %1639
      %1641 = vrot.lane.b32.xlu0 %v1623, 34
      %v1642 = vpop.permute.xlu0 %1641
      %1643 = vrot.lane.b32.xlu0 %v1624, 34
      %v1644 = vpop.permute.xlu0 %1643
      %1645 = vrot.lane.b32.xlu0 %v1625, 34
      %v1646 = vpop.permute.xlu0 %1645
      %vm1647 = vcmask 277504
      %v1648 = vsel %vm1647, %v1634, %v1636
      %v1649 = vsel %vm1647, %v1636, %v1638
      %v1650 = vsel %vm1647, %v1638, %v1640
      %v1651 = vsel %vm1647, %v1640, %v1642
      %v1652 = vsel %vm1647, %v1642, %v1644
      %v1653 = vsel %vm1647, %v1644, %v1646
      %1661 = vst [vmem:[#allocation2 + $0x680] sm:$0xff] %v1648
      %1662 = vst [vmem:[#allocation2 + $0x688] sm:$0xff] %v1649
      %1663 = vst [vmem:[#allocation2 + $0x690] sm:$0xff] %v1650
      %1664 = vst [vmem:[#allocation2 + $0x698] sm:$0xff] %v1651
      %1665 = vst [vmem:[#allocation2 + $0x6a0] sm:$0xff] %v1652
      %1666 = vst [vmem:[#allocation2 + $0x6a8] sm:$0xff] %v1653
      %1667 = vst.msk [vmem:[#allocation2 + $0x6b0] sm:$0xff] %vm1647, %v1646
      %s1668 = smul.u32 8, 1
      %s1669 = smul.u32 %s1668, 2
      %s1670 = sshll.u32 %s1669, 4
      %1671 = dma.done [#allocation5], %s1670
      %v1672 = vld [vmem:[#allocation3] sm:$0xff]
      %1674 = vrot.lane.b32.xlu0 %v1672, 127
      %v1675 = vpop.permute.xlu0 %1674
      %vm1677 = vcmask 1048568
      %1678 = vst.msk [vmem:[#allocation2 + $0x78] sm:$0xff] %vm1677, %v1675
      %v1679 = vld [vmem:[#allocation3] sm:$0xff]
      %1681 = vrot.lane.b32.xlu0 %v1679, 126
      %v1682 = vpop.permute.xlu0 %1681
      %vm1684 = vcmask 1048560
      %1685 = vst.msk [vmem:[#allocation2 + $0xb8] sm:$0xff] %vm1684, %v1682
      %v1686 = vld [vmem:[#allocation3] sm:$0xff]
      %1688 = vrot.lane.b32.xlu0 %v1686, 118
      %v1689 = vpop.permute.xlu0 %1688
      %vm1691 = vcmask 1048496
      %1692 = vst.msk [vmem:[#allocation2 + $0xf8] sm:$0xff] %vm1691, %v1689
      %v1693 = vld [vmem:[#allocation3] sm:$0xff]
      %1695 = vrot.lane.b32.xlu0 %v1693, 117
      %v1696 = vpop.permute.xlu0 %1695
      %vm1698 = vcmask 1048488
      %1699 = vst.msk [vmem:[#allocation2 + $0x138] sm:$0xff] %vm1698, %v1696
      %v1700 = vld [vmem:[#allocation3] sm:$0xff]
      %1702 = vrot.lane.b32.xlu0 %v1700, 116
      %v1703 = vpop.permute.xlu0 %1702
      %vm1705 = vcmask 1048480
      %1706 = vst.msk [vmem:[#allocation2 + $0x178] sm:$0xff] %vm1705, %v1703
      %v1707 = vld [vmem:[#allocation3] sm:$0xff]
      %1709 = vrot.lane.b32.xlu0 %v1707, 108
      %v1710 = vpop.permute.xlu0 %1709
      %vm1712 = vcmask 1048416
      %1713 = vst.msk [vmem:[#allocation2 + $0x1b8] sm:$0xff] %vm1712, %v1710
      %v1714 = vld [vmem:[#allocation3] sm:$0xff]
      %1716 = vrot.lane.b32.xlu0 %v1714, 107
      %v1717 = vpop.permute.xlu0 %1716
      %vm1719 = vcmask 1048408
      %1720 = vst.msk [vmem:[#allocation2 + $0x1f8] sm:$0xff] %vm1719, %v1717
      %v1721 = vld [vmem:[#allocation3] sm:$0xff]
      %1723 = vrot.lane.b32.xlu0 %v1721, 106
      %v1724 = vpop.permute.xlu0 %1723
      %vm1726 = vcmask 1048400
      %1727 = vst.msk [vmem:[#allocation2 + $0x238] sm:$0xff] %vm1726, %v1724
      %v1728 = vld [vmem:[#allocation3] sm:$0xff]
      %1730 = vrot.lane.b32.xlu0 %v1728, 28
      %v1731 = vpop.permute.xlu0 %1730
      %vm1733 = vcmask 1047776
      %1734 = vst.msk [vmem:[#allocation2 + $0x278] sm:$0xff] %vm1733, %v1731
      %v1735 = vld [vmem:[#allocation3] sm:$0xff]
      %1737 = vrot.lane.b32.xlu0 %v1735, 27
      %v1738 = vpop.permute.xlu0 %1737
      %vm1740 = vcmask 1047768
      %1741 = vst.msk [vmem:[#allocation2 + $0x2b8] sm:$0xff] %vm1740, %v1738
      %v1742 = vld [vmem:[#allocation3] sm:$0xff]
      %1744 = vrot.lane.b32.xlu0 %v1742, 26
      %v1745 = vpop.permute.xlu0 %1744
      %vm1747 = vcmask 1047760
      %1748 = vst.msk [vmem:[#allocation2 + $0x2f8] sm:$0xff] %vm1747, %v1745
      %v1749 = vld [vmem:[#allocation3] sm:$0xff]
      %1751 = vrot.lane.b32.xlu0 %v1749, 18
      %v1752 = vpop.permute.xlu0 %1751
      %vm1754 = vcmask 1047696
      %1755 = vst.msk [vmem:[#allocation2 + $0x338] sm:$0xff] %vm1754, %v1752
      %v1756 = vld [vmem:[#allocation3] sm:$0xff]
      %1758 = vrot.lane.b32.xlu0 %v1756, 17
      %v1759 = vpop.permute.xlu0 %1758
      %vm1761 = vcmask 1047688
      %1762 = vst.msk [vmem:[#allocation2 + $0x378] sm:$0xff] %vm1761, %v1759
      %v1763 = vld [vmem:[#allocation3] sm:$0xff]
      %1765 = vrot.lane.b32.xlu0 %v1763, 16
      %v1766 = vpop.permute.xlu0 %1765
      %vm1768 = vcmask 1047680
      %1769 = vst.msk [vmem:[#allocation2 + $0x3b8] sm:$0xff] %vm1768, %v1766
      %v1770 = vld [vmem:[#allocation3] sm:$0xff]
      %1772 = vrot.lane.b32.xlu0 %v1770, 8
      %v1773 = vpop.permute.xlu0 %1772
      %vm1775 = vcmask 1047616
      %1776 = vst.msk [vmem:[#allocation2 + $0x3f8] sm:$0xff] %vm1775, %v1773
      %v1777 = vld [vmem:[#allocation3] sm:$0xff]
      %1779 = vrot.lane.b32.xlu0 %v1777, 7
      %v1780 = vpop.permute.xlu0 %1779
      %vm1782 = vcmask 1047608
      %1783 = vst.msk [vmem:[#allocation2 + $0x438] sm:$0xff] %vm1782, %v1780
      %v1784 = vld [vmem:[#allocation3] sm:$0xff]
      %1786 = vrot.lane.b32.xlu0 %v1784, 6
      %v1787 = vpop.permute.xlu0 %1786
      %vm1789 = vcmask 1047600
      %1790 = vst.msk [vmem:[#allocation2 + $0x478] sm:$0xff] %vm1789, %v1787
      %v1791 = vld [vmem:[#allocation3] sm:$0xff]
      %v1792 = vld [vmem:[#allocation3 + $0x8] sm:$0xff]
      %1795 = vrot.lane.b32.xlu0 %v1791, 56
      %v1796 = vpop.permute.xlu0 %1795
      %1797 = vrot.lane.b32.xlu0 %v1792, 56
      %v1798 = vpop.permute.xlu0 %1797
      %v1799 = vsel %vm1255, %v1796, %v1798
      %vm1802 = vcmask 1048000
      %1803 = vst.msk [vmem:[#allocation2 + $0x4b0] sm:$0xff] %vm1802, %v1796
      %1804 = vst [vmem:[#allocation2 + $0x4b8] sm:$0xff] %v1799
      %v1805 = vld [vmem:[#allocation3] sm:$0xff]
      %v1806 = vld [vmem:[#allocation3 + $0x8] sm:$0xff]
      %1809 = vrot.lane.b32.xlu0 %v1805, 55
      %v1810 = vpop.permute.xlu0 %1809
      %1811 = vrot.lane.b32.xlu0 %v1806, 55
      %v1812 = vpop.permute.xlu0 %1811
      %v1813 = vsel %vm1304, %v1810, %v1812
      %vm1816 = vcmask 1047992
      %1817 = vst.msk [vmem:[#allocation2 + $0x4f0] sm:$0xff] %vm1816, %v1810
      %1818 = vst [vmem:[#allocation2 + $0x4f8] sm:$0xff] %v1813
      %v1819 = vld [vmem:[#allocation3] sm:$0xff]
      %v1820 = vld [vmem:[#allocation3 + $0x8] sm:$0xff]
      %1823 = vrot.lane.b32.xlu0 %v1819, 54
      %v1824 = vpop.permute.xlu0 %1823
      %1825 = vrot.lane.b32.xlu0 %v1820, 54
      %v1826 = vpop.permute.xlu0 %1825
      %v1827 = vsel %vm1353, %v1824, %v1826
      %vm1830 = vcmask 1047984
      %1831 = vst.msk [vmem:[#allocation2 + $0x530] sm:$0xff] %vm1830, %v1824
      %1832 = vst [vmem:[#allocation2 + $0x538] sm:$0xff] %v1827
      %v1833 = vld [vmem:[#allocation3] sm:$0xff]
      %v1834 = vld [vmem:[#allocation3 + $0x8] sm:$0xff]
      %1837 = vrot.lane.b32.xlu0 %v1833, 46
      %v1838 = vpop.permute.xlu0 %1837
      %1839 = vrot.lane.b32.xlu0 %v1834, 46
      %v1840 = vpop.permute.xlu0 %1839
      %v1841 = vsel %vm1402, %v1838, %v1840
      %vm1844 = vcmask 1047920
      %1845 = vst.msk [vmem:[#allocation2 + $0x570] sm:$0xff] %vm1844, %v1838
      %1846 = vst [vmem:[#allocation2 + $0x578] sm:$0xff] %v1841
      %v1847 = vld [vmem:[#allocation3] sm:$0xff]
      %v1848 = vld [vmem:[#allocation3 + $0x8] sm:$0xff]
      %1851 = vrot.lane.b32.xlu0 %v1847, 45
      %v1852 = vpop.permute.xlu0 %1851
      %1853 = vrot.lane.b32.xlu0 %v1848, 45
      %v1854 = vpop.permute.xlu0 %1853
      %v1855 = vsel %vm1451, %v1852, %v1854
      %vm1858 = vcmask 1047912
      %1859 = vst.msk [vmem:[#allocation2 + $0x5b0] sm:$0xff] %vm1858, %v1852
      %1860 = vst [vmem:[#allocation2 + $0x5b8] sm:$0xff] %v1855
      %v1861 = vld [vmem:[#allocation3] sm:$0xff]
      %v1862 = vld [vmem:[#allocation3 + $0x8] sm:$0xff]
      %1865 = vrot.lane.b32.xlu0 %v1861, 44
      %v1866 = vpop.permute.xlu0 %1865
      %1867 = vrot.lane.b32.xlu0 %v1862, 44
      %v1868 = vpop.permute.xlu0 %1867
      %v1869 = vsel %vm1500, %v1866, %v1868
      %vm1872 = vcmask 1047904
      %1873 = vst.msk [vmem:[#allocation2 + $0x5f0] sm:$0xff] %vm1872, %v1866
      %1874 = vst [vmem:[#allocation2 + $0x5f8] sm:$0xff] %v1869
      %v1875 = vld [vmem:[#allocation3] sm:$0xff]
      %v1876 = vld [vmem:[#allocation3 + $0x8] sm:$0xff]
      %1879 = vrot.lane.b32.xlu0 %v1875, 36
      %v1880 = vpop.permute.xlu0 %1879
      %1881 = vrot.lane.b32.xlu0 %v1876, 36
      %v1882 = vpop.permute.xlu0 %1881
      %v1883 = vsel %vm1549, %v1880, %v1882
      %vm1886 = vcmask 1047840
      %1887 = vst.msk [vmem:[#allocation2 + $0x630] sm:$0xff] %vm1886, %v1880
      %1888 = vst [vmem:[#allocation2 + $0x638] sm:$0xff] %v1883
      %v1889 = vld [vmem:[#allocation3] sm:$0xff]
      %v1890 = vld [vmem:[#allocation3 + $0x8] sm:$0xff]
      %1893 = vrot.lane.b32.xlu0 %v1889, 35
      %v1894 = vpop.permute.xlu0 %1893
      %1895 = vrot.lane.b32.xlu0 %v1890, 35
      %v1896 = vpop.permute.xlu0 %1895
      %v1897 = vsel %vm1598, %v1894, %v1896
      %vm1900 = vcmask 1047832
      %1901 = vst.msk [vmem:[#allocation2 + $0x670] sm:$0xff] %vm1900, %v1894
      %1902 = vst [vmem:[#allocation2 + $0x678] sm:$0xff] %v1897
      %v1903 = vld [vmem:[#allocation3] sm:$0xff]
      %v1904 = vld [vmem:[#allocation3 + $0x8] sm:$0xff]
      %1907 = vrot.lane.b32.xlu0 %v1903, 34
      %v1908 = vpop.permute.xlu0 %1907
      %1909 = vrot.lane.b32.xlu0 %v1904, 34
      %v1910 = vpop.permute.xlu0 %1909
      %v1911 = vsel %vm1647, %v1908, %v1910
      %vm1914 = vcmask 1047824
      %1915 = vst.msk [vmem:[#allocation2 + $0x6b0] sm:$0xff] %vm1914, %v1908
      %1916 = vst [vmem:[#allocation2 + $0x6b8] sm:$0xff] %v1911
      %v1917 = vld [vmem:[%s2] sm:$0xff]
      %v1918 = vld [vmem:[%s2 + $0x8] sm:$0xff]
      %v1919 = vld [vmem:[#allocation2] sm:$0xff]
      %v1920 = vld [vmem:[#allocation2 + $0x8] sm:$0xff]
      %v1921 = vld [vmem:[#allocation2 + $0x10] sm:$0xff]
      %v1922 = vld [vmem:[#allocation2 + $0x18] sm:$0xff]
      %v1923 = vld [vmem:[#allocation2 + $0x20] sm:$0xff]
      %v1924 = vld [vmem:[#allocation2 + $0x28] sm:$0xff]
      %v1925 = vld [vmem:[#allocation2 + $0x30] sm:$0xff]
      %v1926 = vld [vmem:[#allocation2 + $0x38] sm:$0xff]
      %v1927 = vld [vmem:[#allocation2 + $0x40] sm:$0xff]
      %v1928 = vld [vmem:[#allocation2 + $0x48] sm:$0xff]
      %v1929 = vld [vmem:[#allocation2 + $0x50] sm:$0xff]
      %v1930 = vld [vmem:[#allocation2 + $0x58] sm:$0xff]
      %v1931 = vld [vmem:[#allocation2 + $0x60] sm:$0xff]
      %v1932 = vld [vmem:[#allocation2 + $0x68] sm:$0xff]
      %v1933 = vld [vmem:[#allocation2 + $0x70] sm:$0xff]
      %v1934 = vld [vmem:[#allocation2 + $0x78] sm:$0xff]
      %v1935 = vld [vmem:[#allocation2 + $0x80] sm:$0xff]
      %v1936 = vld [vmem:[#allocation2 + $0x88] sm:$0xff]
      %v1937 = vld [vmem:[#allocation2 + $0x90] sm:$0xff]
      %v1938 = vld [vmem:[#allocation2 + $0x98] sm:$0xff]
      %v1939 = vld [vmem:[#allocation2 + $0xa0] sm:$0xff]
      %v1940 = vld [vmem:[#allocation2 + $0xa8] sm:$0xff]
      %v1941 = vld [vmem:[#allocation2 + $0xb0] sm:$0xff]
      %v1942 = vld [vmem:[#allocation2 + $0xb8] sm:$0xff]
      %v1943 = vld [vmem:[#allocation2 + $0xc0] sm:$0xff]
      %v1944 = vld [vmem:[#allocation2 + $0xc8] sm:$0xff]
      %v1945 = vld [vmem:[#allocation2 + $0xd0] sm:$0xff]
      %v1946 = vld [vmem:[#allocation2 + $0xd8] sm:$0xff]
      %v1947 = vld [vmem:[#allocation2 + $0xe0] sm:$0xff]
      %v1948 = vld [vmem:[#allocation2 + $0xe8] sm:$0xff]
      %v1949 = vld [vmem:[#allocation2 + $0xf0] sm:$0xff]
      %v1950 = vld [vmem:[#allocation2 + $0xf8] sm:$0xff]
      %v1951 = vld [vmem:[#allocation2 + $0x100] sm:$0xff]
      %v1952 = vld [vmem:[#allocation2 + $0x108] sm:$0xff]
      %v1953 = vld [vmem:[#allocation2 + $0x110] sm:$0xff]
      %v1954 = vld [vmem:[#allocation2 + $0x118] sm:$0xff]
      %v1955 = vld [vmem:[#allocation2 + $0x120] sm:$0xff]
      %v1956 = vld [vmem:[#allocation2 + $0x128] sm:$0xff]
      %v1957 = vld [vmem:[#allocation2 + $0x130] sm:$0xff]
      %v1958 = vld [vmem:[#allocation2 + $0x138] sm:$0xff]
      %v1959 = vld [vmem:[#allocation2 + $0x140] sm:$0xff]
      %v1960 = vld [vmem:[#allocation2 + $0x148] sm:$0xff]
      %v1961 = vld [vmem:[#allocation2 + $0x150] sm:$0xff]
      %v1962 = vld [vmem:[#allocation2 + $0x158] sm:$0xff]
      %v1963 = vld [vmem:[#allocation2 + $0x160] sm:$0xff]
      %v1964 = vld [vmem:[#allocation2 + $0x168] sm:$0xff]
      %v1965 = vld [vmem:[#allocation2 + $0x170] sm:$0xff]
      %v1966 = vld [vmem:[#allocation2 + $0x178] sm:$0xff]
      %v1967 = vld [vmem:[#allocation2 + $0x180] sm:$0xff]
      %v1968 = vld [vmem:[#allocation2 + $0x188] sm:$0xff]
      %v1969 = vld [vmem:[#allocation2 + $0x190] sm:$0xff]
      %v1970 = vld [vmem:[#allocation2 + $0x198] sm:$0xff]
      %v1971 = vld [vmem:[#allocation2 + $0x1a0] sm:$0xff]
      %v1972 = vld [vmem:[#allocation2 + $0x1a8] sm:$0xff]
      %v1973 = vld [vmem:[#allocation2 + $0x1b0] sm:$0xff]
      %v1974 = vld [vmem:[#allocation2 + $0x1b8] sm:$0xff]
      %v1975 = vld [vmem:[#allocation2 + $0x1c0] sm:$0xff]
      %v1976 = vld [vmem:[#allocation2 + $0x1c8] sm:$0xff]
      %v1977 = vld [vmem:[#allocation2 + $0x1d0] sm:$0xff]
      %v1978 = vld [vmem:[#allocation2 + $0x1d8] sm:$0xff]
      %v1979 = vld [vmem:[#allocation2 + $0x1e0] sm:$0xff]
      %v1980 = vld [vmem:[#allocation2 + $0x1e8] sm:$0xff]
      %v1981 = vld [vmem:[#allocation2 + $0x1f0] sm:$0xff]
      %v1982 = vld [vmem:[#allocation2 + $0x1f8] sm:$0xff]
      %v1983 = vld [vmem:[#allocation2 + $0x200] sm:$0xff]
      %v1984 = vld [vmem:[#allocation2 + $0x208] sm:$0xff]
      %v1985 = vld [vmem:[#allocation2 + $0x210] sm:$0xff]
      %v1986 = vld [vmem:[#allocation2 + $0x218] sm:$0xff]
      %v1987 = vld [vmem:[#allocation2 + $0x220] sm:$0xff]
      %v1988 = vld [vmem:[#allocation2 + $0x228] sm:$0xff]
      %v1989 = vld [vmem:[#allocation2 + $0x230] sm:$0xff]
      %v1990 = vld [vmem:[#allocation2 + $0x238] sm:$0xff]
      %v1991 = vld [vmem:[#allocation2 + $0x240] sm:$0xff]
      %v1992 = vld [vmem:[#allocation2 + $0x248] sm:$0xff]
      %v1993 = vld [vmem:[#allocation2 + $0x250] sm:$0xff]
      %v1994 = vld [vmem:[#allocation2 + $0x258] sm:$0xff]
      %v1995 = vld [vmem:[#allocation2 + $0x260] sm:$0xff]
      %v1996 = vld [vmem:[#allocation2 + $0x268] sm:$0xff]
      %v1997 = vld [vmem:[#allocation2 + $0x270] sm:$0xff]
      %v1998 = vld [vmem:[#allocation2 + $0x278] sm:$0xff]
      %v1999 = vld [vmem:[#allocation2 + $0x280] sm:$0xff]
      %v2000 = vld [vmem:[#allocation2 + $0x288] sm:$0xff]
      %v2001 = vld [vmem:[#allocation2 + $0x290] sm:$0xff]
      %v2002 = vld [vmem:[#allocation2 + $0x298] sm:$0xff]
      %v2003 = vld [vmem:[#allocation2 + $0x2a0] sm:$0xff]
      %v2004 = vld [vmem:[#allocation2 + $0x2a8] sm:$0xff]
      %v2005 = vld [vmem:[#allocation2 + $0x2b0] sm:$0xff]
      %v2006 = vld [vmem:[#allocation2 + $0x2b8] sm:$0xff]
      %v2007 = vld [vmem:[#allocation2 + $0x2c0] sm:$0xff]
      %v2008 = vld [vmem:[#allocation2 + $0x2c8] sm:$0xff]
      %v2009 = vld [vmem:[#allocation2 + $0x2d0] sm:$0xff]
      %v2010 = vld [vmem:[#allocation2 + $0x2d8] sm:$0xff]
      %v2011 = vld [vmem:[#allocation2 + $0x2e0] sm:$0xff]
      %v2012 = vld [vmem:[#allocation2 + $0x2e8] sm:$0xff]
      %v2013 = vld [vmem:[#allocation2 + $0x2f0] sm:$0xff]
      %v2014 = vld [vmem:[#allocation2 + $0x2f8] sm:$0xff]
      %v2015 = vld [vmem:[#allocation2 + $0x300] sm:$0xff]
      %v2016 = vld [vmem:[#allocation2 + $0x308] sm:$0xff]
      %v2017 = vld [vmem:[#allocation2 + $0x310] sm:$0xff]
      %v2018 = vld [vmem:[#allocation2 + $0x318] sm:$0xff]
      %v2019 = vld [vmem:[#allocation2 + $0x320] sm:$0xff]
      %v2020 = vld [vmem:[#allocation2 + $0x328] sm:$0xff]
      %v2021 = vld [vmem:[#allocation2 + $0x330] sm:$0xff]
      %v2022 = vld [vmem:[#allocation2 + $0x338] sm:$0xff]
      %v2023 = vld [vmem:[#allocation2 + $0x340] sm:$0xff]
      %v2024 = vld [vmem:[#allocation2 + $0x348] sm:$0xff]
      %v2025 = vld [vmem:[#allocation2 + $0x350] sm:$0xff]
      %v2026 = vld [vmem:[#allocation2 + $0x358] sm:$0xff]
      %v2027 = vld [vmem:[#allocation2 + $0x360] sm:$0xff]
      %v2028 = vld [vmem:[#allocation2 + $0x368] sm:$0xff]
      %v2029 = vld [vmem:[#allocation2 + $0x370] sm:$0xff]
      %v2030 = vld [vmem:[#allocation2 + $0x378] sm:$0xff]
      %v2031 = vld [vmem:[#allocation2 + $0x380] sm:$0xff]
      %v2032 = vld [vmem:[#allocation2 + $0x388] sm:$0xff]
      %v2033 = vld [vmem:[#allocation2 + $0x390] sm:$0xff]
      %v2034 = vld [vmem:[#allocation2 + $0x398] sm:$0xff]
      %v2035 = vld [vmem:[#allocation2 + $0x3a0] sm:$0xff]
      %v2036 = vld [vmem:[#allocation2 + $0x3a8] sm:$0xff]
      %v2037 = vld [vmem:[#allocation2 + $0x3b0] sm:$0xff]
      %v2038 = vld [vmem:[#allocation2 + $0x3b8] sm:$0xff]
      %v2039 = vld [vmem:[#allocation2 + $0x3c0] sm:$0xff]
      %v2040 = vld [vmem:[#allocation2 + $0x3c8] sm:$0xff]
      %v2041 = vld [vmem:[#allocation2 + $0x3d0] sm:$0xff]
      %v2042 = vld [vmem:[#allocation2 + $0x3d8] sm:$0xff]
      %v2043 = vld [vmem:[#allocation2 + $0x3e0] sm:$0xff]
      %v2044 = vld [vmem:[#allocation2 + $0x3e8] sm:$0xff]
      %v2045 = vld [vmem:[#allocation2 + $0x3f0] sm:$0xff]
      %v2046 = vld [vmem:[#allocation2 + $0x3f8] sm:$0xff]
      %v2047 = vld [vmem:[#allocation2 + $0x400] sm:$0xff]
      %v2048 = vld [vmem:[#allocation2 + $0x408] sm:$0xff]
      %v2049 = vld [vmem:[#allocation2 + $0x410] sm:$0xff]
      %v2050 = vld [vmem:[#allocation2 + $0x418] sm:$0xff]
      %v2051 = vld [vmem:[#allocation2 + $0x420] sm:$0xff]
      %v2052 = vld [vmem:[#allocation2 + $0x428] sm:$0xff]
      %v2053 = vld [vmem:[#allocation2 + $0x430] sm:$0xff]
      %v2054 = vld [vmem:[#allocation2 + $0x438] sm:$0xff]
      %v2055 = vld [vmem:[#allocation2 + $0x440] sm:$0xff]
      %v2056 = vld [vmem:[#allocation2 + $0x448] sm:$0xff]
      %v2057 = vld [vmem:[#allocation2 + $0x450] sm:$0xff]
      %v2058 = vld [vmem:[#allocation2 + $0x458] sm:$0xff]
      %v2059 = vld [vmem:[#allocation2 + $0x460] sm:$0xff]
      %v2060 = vld [vmem:[#allocation2 + $0x468] sm:$0xff]
      %v2061 = vld [vmem:[#allocation2 + $0x470] sm:$0xff]
      %v2062 = vld [vmem:[#allocation2 + $0x478] sm:$0xff]
      %v2063 = vld [vmem:[#allocation2 + $0x480] sm:$0xff]
      %v2064 = vld [vmem:[#allocation2 + $0x488] sm:$0xff]
      %v2065 = vld [vmem:[#allocation2 + $0x490] sm:$0xff]
      %v2066 = vld [vmem:[#allocation2 + $0x498] sm:$0xff]
      %v2067 = vld [vmem:[#allocation2 + $0x4a0] sm:$0xff]
      %v2068 = vld [vmem:[#allocation2 + $0x4a8] sm:$0xff]
      %v2069 = vld [vmem:[#allocation2 + $0x4b0] sm:$0xff]
      %v2070 = vld [vmem:[#allocation2 + $0x4b8] sm:$0xff]
      %v2071 = vld [vmem:[#allocation2 + $0x4c0] sm:$0xff]
      %v2072 = vld [vmem:[#allocation2 + $0x4c8] sm:$0xff]
      %v2073 = vld [vmem:[#allocation2 + $0x4d0] sm:$0xff]
      %v2074 = vld [vmem:[#allocation2 + $0x4d8] sm:$0xff]
      %v2075 = vld [vmem:[#allocation2 + $0x4e0] sm:$0xff]
      %v2076 = vld [vmem:[#allocation2 + $0x4e8] sm:$0xff]
      %v2077 = vld [vmem:[#allocation2 + $0x4f0] sm:$0xff]
      %v2078 = vld [vmem:[#allocation2 + $0x4f8] sm:$0xff]
      %v2079 = vld [vmem:[#allocation2 + $0x500] sm:$0xff]
      %v2080 = vld [vmem:[#allocation2 + $0x508] sm:$0xff]
      %v2081 = vld [vmem:[#allocation2 + $0x510] sm:$0xff]
      %v2082 = vld [vmem:[#allocation2 + $0x518] sm:$0xff]
      %v2083 = vld [vmem:[#allocation2 + $0x520] sm:$0xff]
      %v2084 = vld [vmem:[#allocation2 + $0x528] sm:$0xff]
      %v2085 = vld [vmem:[#allocation2 + $0x530] sm:$0xff]
      %v2086 = vld [vmem:[#allocation2 + $0x538] sm:$0xff]
      %v2087 = vld [vmem:[#allocation2 + $0x540] sm:$0xff]
      %v2088 = vld [vmem:[#allocation2 + $0x548] sm:$0xff]
      %v2089 = vld [vmem:[#allocation2 + $0x550] sm:$0xff]
      %v2090 = vld [vmem:[#allocation2 + $0x558] sm:$0xff]
      %v2091 = vld [vmem:[#allocation2 + $0x560] sm:$0xff]
      %v2092 = vld [vmem:[#allocation2 + $0x568] sm:$0xff]
      %v2093 = vld [vmem:[#allocation2 + $0x570] sm:$0xff]
      %v2094 = vld [vmem:[#allocation2 + $0x578] sm:$0xff]
      %v2095 = vld [vmem:[#allocation2 + $0x580] sm:$0xff]
      %v2096 = vld [vmem:[#allocation2 + $0x588] sm:$0xff]
      %v2097 = vld [vmem:[#allocation2 + $0x590] sm:$0xff]
      %v2098 = vld [vmem:[#allocation2 + $0x598] sm:$0xff]
      %v2099 = vld [vmem:[#allocation2 + $0x5a0] sm:$0xff]
      %v2100 = vld [vmem:[#allocation2 + $0x5a8] sm:$0xff]
      %v2101 = vld [vmem:[#allocation2 + $0x5b0] sm:$0xff]
      %v2102 = vld [vmem:[#allocation2 + $0x5b8] sm:$0xff]
      %v2103 = vld [vmem:[#allocation2 + $0x5c0] sm:$0xff]
      %v2104 = vld [vmem:[#allocation2 + $0x5c8] sm:$0xff]
      %v2105 = vld [vmem:[#allocation2 + $0x5d0] sm:$0xff]
      %v2106 = vld [vmem:[#allocation2 + $0x5d8] sm:$0xff]
      %v2107 = vld [vmem:[#allocation2 + $0x5e0] sm:$0xff]
      %v2108 = vld [vmem:[#allocation2 + $0x5e8] sm:$0xff]
      %v2109 = vld [vmem:[#allocation2 + $0x5f0] sm:$0xff]
      %v2110 = vld [vmem:[#allocation2 + $0x5f8] sm:$0xff]
      %v2111 = vld [vmem:[#allocation2 + $0x600] sm:$0xff]
      %v2112 = vld [vmem:[#allocation2 + $0x608] sm:$0xff]
      %v2113 = vld [vmem:[#allocation2 + $0x610] sm:$0xff]
      %v2114 = vld [vmem:[#allocation2 + $0x618] sm:$0xff]
      %v2115 = vld [vmem:[#allocation2 + $0x620] sm:$0xff]
      %v2116 = vld [vmem:[#allocation2 + $0x628] sm:$0xff]
      %v2117 = vld [vmem:[#allocation2 + $0x630] sm:$0xff]
      %v2118 = vld [vmem:[#allocation2 + $0x638] sm:$0xff]
      %v2119 = vld [vmem:[#allocation2 + $0x640] sm:$0xff]
      %v2120 = vld [vmem:[#allocation2 + $0x648] sm:$0xff]
      %v2121 = vld [vmem:[#allocation2 + $0x650] sm:$0xff]
      %v2122 = vld [vmem:[#allocation2 + $0x658] sm:$0xff]
      %v2123 = vld [vmem:[#allocation2 + $0x660] sm:$0xff]
      %v2124 = vld [vmem:[#allocation2 + $0x668] sm:$0xff]
      %v2125 = vld [vmem:[#allocation2 + $0x670] sm:$0xff]
      %v2126 = vld [vmem:[#allocation2 + $0x678] sm:$0xff]
      %v2127 = vld [vmem:[#allocation2 + $0x680] sm:$0xff]
      %v2128 = vld [vmem:[#allocation2 + $0x688] sm:$0xff]
      %v2129 = vld [vmem:[#allocation2 + $0x690] sm:$0xff]
      %v2130 = vld [vmem:[#allocation2 + $0x698] sm:$0xff]
      %v2131 = vld [vmem:[#allocation2 + $0x6a0] sm:$0xff]
      %v2132 = vld [vmem:[#allocation2 + $0x6a8] sm:$0xff]
      %v2133 = vld [vmem:[#allocation2 + $0x6b0] sm:$0xff]
      %v2134 = vld [vmem:[#allocation2 + $0x6b8] sm:$0xff]
      %v2135 = vld [vmem:[%s3] sm:$0xff]
      %2137 = vset.pattern.permute.xlu0 0
      %2138 = vperm.xlu0 %2137, %v2135
      %v2139 = vpop.permute.xlu0 %2138
      %vm2141 = vcmask 719872
      %v2143 = vsel %vm2141, %v1918, 0
      %2145 = vmatpush.msra.mxu0 %v2039
      %2146 = vmatpush.msra.mxu0 %v2031
      %2147 = vmatpush.msra.mxu0 %v2023
      %2148 = vmatpush.msra.mxu0 %v2015
      %2149 = vmatpush.msra.mxu0 %v2007
      %2150 = vmatpush.msra.mxu0 %v1999
      %2151 = vmatpush.msra.mxu0 %v1991
      %2152 = vmatpush.msra.mxu0 %v1983
      %2153 = vmatpush.msra.mxu0 %v1975
      %2154 = vmatpush.msra.mxu0 %v1967
      %2155 = vmatpush.msra.mxu0 %v1959
      %2156 = vmatpush.msra.mxu0 %v1951
      %2157 = vmatpush.msra.mxu0 %v1943
      %2158 = vmatpush.msra.mxu0 %v1935
      %2159 = vmatpush.msra.mxu0 %v1927
      %2160 = vmatpush.msra.mxu0 %v1919
      %2161 = vmatmul.f32.gmra.mxu0 %v1917
      %v2162 = vpop.f32.mrf.mxu0
      %v2163 = vadd.f32 %v2139, %v2162
      %2164 = vdwg.mxu0
      %2165 = vmatpush.msra.mxu0 0.0
      %2166 = vmatpush.msra.mxu0 0.0
      %2167 = vmatpush.msra.mxu0 0.0
      %2168 = vmatpush.msra.mxu0 0.0
      %2169 = vmatpush.msra.mxu0 0.0
      %2170 = vmatpush.msra.mxu0 %v2127
      %2171 = vmatpush.msra.mxu0 %v2119
      %2172 = vmatpush.msra.mxu0 %v2111
      %2173 = vmatpush.msra.mxu0 %v2103
      %2174 = vmatpush.msra.mxu0 %v2095
      %2175 = vmatpush.msra.mxu0 %v2087
      %2176 = vmatpush.msra.mxu0 %v2079
      %2177 = vmatpush.msra.mxu0 %v2071
      %2178 = vmatpush.msra.mxu0 %v2063
      %2179 = vmatpush.msra.mxu0 %v2055
      %2180 = vmatpush.msra.mxu0 %v2047
      %2181 = vmatmul.f32.gmra.mxu0 %v2143
      %v2182 = vpop.f32.mrf.mxu0
      %v2183 = vadd.f32 %v2163, %v2182
      %2184 = vdwg.mxu0
      %2185 = vmatpush.msra.mxu0 %v2040
      %2186 = vmatpush.msra.mxu0 %v2032
      %2187 = vmatpush.msra.mxu0 %v2024
      %2188 = vmatpush.msra.mxu0 %v2016
      %2189 = vmatpush.msra.mxu0 %v2008
      %2190 = vmatpush.msra.mxu0 %v2000
      %2191 = vmatpush.msra.mxu0 %v1992
      %2192 = vmatpush.msra.mxu0 %v1984
      %2193 = vmatpush.msra.mxu0 %v1976
      %2194 = vmatpush.msra.mxu0 %v1968
      %2195 = vmatpush.msra.mxu0 %v1960
      %2196 = vmatpush.msra.mxu0 %v1952
      %2197 = vmatpush.msra.mxu0 %v1944
      %2198 = vmatpush.msra.mxu0 %v1936
      %2199 = vmatpush.msra.mxu0 %v1928
      %2200 = vmatpush.msra.mxu0 %v1920
      %2201 = vmatmul.f32.gmra.mxu0 %v1917
      %v2202 = vpop.f32.mrf.mxu0
      %v2203 = vadd.f32 %v2139, %v2202
      %2204 = vdwg.mxu0
      %2205 = vmatpush.msra.mxu0 0.0
      %2206 = vmatpush.msra.mxu0 0.0
      %2207 = vmatpush.msra.mxu0 0.0
      %2208 = vmatpush.msra.mxu0 0.0
      %2209 = vmatpush.msra.mxu0 0.0
      %2210 = vmatpush.msra.mxu0 %v2128
      %2211 = vmatpush.msra.mxu0 %v2120
      %2212 = vmatpush.msra.mxu0 %v2112
      %2213 = vmatpush.msra.mxu0 %v2104
      %2214 = vmatpush.msra.mxu0 %v2096
      %2215 = vmatpush.msra.mxu0 %v2088
      %2216 = vmatpush.msra.mxu0 %v2080
      %2217 = vmatpush.msra.mxu0 %v2072
      %2218 = vmatpush.msra.mxu0 %v2064
      %2219 = vmatpush.msra.mxu0 %v2056
      %2220 = vmatpush.msra.mxu0 %v2048
      %2221 = vmatmul.f32.gmra.mxu0 %v2143
      %v2222 = vpop.f32.mrf.mxu0
      %v2223 = vadd.f32 %v2203, %v2222
      %2224 = vdwg.mxu0
      %2225 = vmatpush.msra.mxu0 %v2041
      %2226 = vmatpush.msra.mxu0 %v2033
      %2227 = vmatpush.msra.mxu0 %v2025
      %2228 = vmatpush.msra.mxu0 %v2017
      %2229 = vmatpush.msra.mxu0 %v2009
      %2230 = vmatpush.msra.mxu0 %v2001
      %2231 = vmatpush.msra.mxu0 %v1993
      %2232 = vmatpush.msra.mxu0 %v1985
      %2233 = vmatpush.msra.mxu0 %v1977
      %2234 = vmatpush.msra.mxu0 %v1969
      %2235 = vmatpush.msra.mxu0 %v1961
      %2236 = vmatpush.msra.mxu0 %v1953
      %2237 = vmatpush.msra.mxu0 %v1945
      %2238 = vmatpush.msra.mxu0 %v1937
      %2239 = vmatpush.msra.mxu0 %v1929
      %2240 = vmatpush.msra.mxu0 %v1921
      %2241 = vmatmul.f32.gmra.mxu0 %v1917
      %v2242 = vpop.f32.mrf.mxu0
      %v2243 = vadd.f32 %v2139, %v2242
      %2244 = vdwg.mxu0
      %2245 = vmatpush.msra.mxu0 0.0
      %2246 = vmatpush.msra.mxu0 0.0
      %2247 = vmatpush.msra.mxu0 0.0
      %2248 = vmatpush.msra.mxu0 0.0
      %2249 = vmatpush.msra.mxu0 0.0
      %2250 = vmatpush.msra.mxu0 %v2129
      %2251 = vmatpush.msra.mxu0 %v2121
      %2252 = vmatpush.msra.mxu0 %v2113
      %2253 = vmatpush.msra.mxu0 %v2105
      %2254 = vmatpush.msra.mxu0 %v2097
      %2255 = vmatpush.msra.mxu0 %v2089
      %2256 = vmatpush.msra.mxu0 %v2081
      %2257 = vmatpush.msra.mxu0 %v2073
      %2258 = vmatpush.msra.mxu0 %v2065
      %2259 = vmatpush.msra.mxu0 %v2057
      %2260 = vmatpush.msra.mxu0 %v2049
      %2261 = vmatmul.f32.gmra.mxu0 %v2143
      %v2262 = vpop.f32.mrf.mxu0
      %v2263 = vadd.f32 %v2243, %v2262
      %2264 = vdwg.mxu0
      %2265 = vmatpush.msra.mxu0 %v2042
      %2266 = vmatpush.msra.mxu0 %v2034
      %2267 = vmatpush.msra.mxu0 %v2026
      %2268 = vmatpush.msra.mxu0 %v2018
      %2269 = vmatpush.msra.mxu0 %v2010
      %2270 = vmatpush.msra.mxu0 %v2002
      %2271 = vmatpush.msra.mxu0 %v1994
      %2272 = vmatpush.msra.mxu0 %v1986
      %2273 = vmatpush.msra.mxu0 %v1978
      %2274 = vmatpush.msra.mxu0 %v1970
      %2275 = vmatpush.msra.mxu0 %v1962
      %2276 = vmatpush.msra.mxu0 %v1954
      %2277 = vmatpush.msra.mxu0 %v1946
      %2278 = vmatpush.msra.mxu0 %v1938
      %2279 = vmatpush.msra.mxu0 %v1930
      %2280 = vmatpush.msra.mxu0 %v1922
      %2281 = vmatmul.f32.gmra.mxu0 %v1917
      %v2282 = vpop.f32.mrf.mxu0
      %v2283 = vadd.f32 %v2139, %v2282
      %2284 = vdwg.mxu0
      %2285 = vmatpush.msra.mxu0 0.0
      %2286 = vmatpush.msra.mxu0 0.0
      %2287 = vmatpush.msra.mxu0 0.0
      %2288 = vmatpush.msra.mxu0 0.0
      %2289 = vmatpush.msra.mxu0 0.0
      %2290 = vmatpush.msra.mxu0 %v2130
      %2291 = vmatpush.msra.mxu0 %v2122
      %2292 = vmatpush.msra.mxu0 %v2114
      %2293 = vmatpush.msra.mxu0 %v2106
      %2294 = vmatpush.msra.mxu0 %v2098
      %2295 = vmatpush.msra.mxu0 %v2090
      %2296 = vmatpush.msra.mxu0 %v2082
      %2297 = vmatpush.msra.mxu0 %v2074
      %2298 = vmatpush.msra.mxu0 %v2066
      %2299 = vmatpush.msra.mxu0 %v2058
      %2300 = vmatpush.msra.mxu0 %v2050
      %2301 = vmatmul.f32.gmra.mxu0 %v2143
      %v2302 = vpop.f32.mrf.mxu0
      %v2303 = vadd.f32 %v2283, %v2302
      %2304 = vdwg.mxu0
      %2305 = vmatpush.msra.mxu0 %v2043
      %2306 = vmatpush.msra.mxu0 %v2035
      %2307 = vmatpush.msra.mxu0 %v2027
      %2308 = vmatpush.msra.mxu0 %v2019
      %2309 = vmatpush.msra.mxu0 %v2011
      %2310 = vmatpush.msra.mxu0 %v2003
      %2311 = vmatpush.msra.mxu0 %v1995
      %2312 = vmatpush.msra.mxu0 %v1987
      %2313 = vmatpush.msra.mxu0 %v1979
      %2314 = vmatpush.msra.mxu0 %v1971
      %2315 = vmatpush.msra.mxu0 %v1963
      %2316 = vmatpush.msra.mxu0 %v1955
      %2317 = vmatpush.msra.mxu0 %v1947
      %2318 = vmatpush.msra.mxu0 %v1939
      %2319 = vmatpush.msra.mxu0 %v1931
      %2320 = vmatpush.msra.mxu0 %v1923
      %2321 = vmatmul.f32.gmra.mxu0 %v1917
      %v2322 = vpop.f32.mrf.mxu0
      %v2323 = vadd.f32 %v2139, %v2322
      %2324 = vdwg.mxu0
      %2325 = vmatpush.msra.mxu0 0.0
      %2326 = vmatpush.msra.mxu0 0.0
      %2327 = vmatpush.msra.mxu0 0.0
      %2328 = vmatpush.msra.mxu0 0.0
      %2329 = vmatpush.msra.mxu0 0.0
      %2330 = vmatpush.msra.mxu0 %v2131
      %2331 = vmatpush.msra.mxu0 %v2123
      %2332 = vmatpush.msra.mxu0 %v2115
      %2333 = vmatpush.msra.mxu0 %v2107
      %2334 = vmatpush.msra.mxu0 %v2099
      %2335 = vmatpush.msra.mxu0 %v2091
      %2336 = vmatpush.msra.mxu0 %v2083
      %2337 = vmatpush.msra.mxu0 %v2075
      %2338 = vmatpush.msra.mxu0 %v2067
      %2339 = vmatpush.msra.mxu0 %v2059
      %2340 = vmatpush.msra.mxu0 %v2051
      %2341 = vmatmul.f32.gmra.mxu0 %v2143
      %v2342 = vpop.f32.mrf.mxu0
      %v2343 = vadd.f32 %v2323, %v2342
      %2344 = vdwg.mxu0
      %2345 = vmatpush.msra.mxu0 %v2044
      %2346 = vmatpush.msra.mxu0 %v2036
      %2347 = vmatpush.msra.mxu0 %v2028
      %2348 = vmatpush.msra.mxu0 %v2020
      %2349 = vmatpush.msra.mxu0 %v2012
      %2350 = vmatpush.msra.mxu0 %v2004
      %2351 = vmatpush.msra.mxu0 %v1996
      %2352 = vmatpush.msra.mxu0 %v1988
      %2353 = vmatpush.msra.mxu0 %v1980
      %2354 = vmatpush.msra.mxu0 %v1972
      %2355 = vmatpush.msra.mxu0 %v1964
      %2356 = vmatpush.msra.mxu0 %v1956
      %2357 = vmatpush.msra.mxu0 %v1948
      %2358 = vmatpush.msra.mxu0 %v1940
      %2359 = vmatpush.msra.mxu0 %v1932
      %2360 = vmatpush.msra.mxu0 %v1924
      %2361 = vmatmul.f32.gmra.mxu0 %v1917
      %v2362 = vpop.f32.mrf.mxu0
      %v2363 = vadd.f32 %v2139, %v2362
      %2364 = vdwg.mxu0
      %2365 = vmatpush.msra.mxu0 0.0
      %2366 = vmatpush.msra.mxu0 0.0
      %2367 = vmatpush.msra.mxu0 0.0
      %2368 = vmatpush.msra.mxu0 0.0
      %2369 = vmatpush.msra.mxu0 0.0
      %2370 = vmatpush.msra.mxu0 %v2132
      %2371 = vmatpush.msra.mxu0 %v2124
      %2372 = vmatpush.msra.mxu0 %v2116
      %2373 = vmatpush.msra.mxu0 %v2108
      %2374 = vmatpush.msra.mxu0 %v2100
      %2375 = vmatpush.msra.mxu0 %v2092
      %2376 = vmatpush.msra.mxu0 %v2084
      %2377 = vmatpush.msra.mxu0 %v2076
      %2378 = vmatpush.msra.mxu0 %v2068
      %2379 = vmatpush.msra.mxu0 %v2060
      %2380 = vmatpush.msra.mxu0 %v2052
      %2381 = vmatmul.f32.gmra.mxu0 %v2143
      %v2382 = vpop.f32.mrf.mxu0
      %v2383 = vadd.f32 %v2363, %v2382
      %2384 = vdwg.mxu0
      %2385 = vmatpush.msra.mxu0 %v2045
      %2386 = vmatpush.msra.mxu0 %v2037
      %2387 = vmatpush.msra.mxu0 %v2029
      %2388 = vmatpush.msra.mxu0 %v2021
      %2389 = vmatpush.msra.mxu0 %v2013
      %2390 = vmatpush.msra.mxu0 %v2005
      %2391 = vmatpush.msra.mxu0 %v1997
      %2392 = vmatpush.msra.mxu0 %v1989
      %2393 = vmatpush.msra.mxu0 %v1981
      %2394 = vmatpush.msra.mxu0 %v1973
      %2395 = vmatpush.msra.mxu0 %v1965
      %2396 = vmatpush.msra.mxu0 %v1957
      %2397 = vmatpush.msra.mxu0 %v1949
      %2398 = vmatpush.msra.mxu0 %v1941
      %2399 = vmatpush.msra.mxu0 %v1933
      %2400 = vmatpush.msra.mxu0 %v1925
      %2401 = vmatmul.f32.gmra.mxu0 %v1917
      %v2402 = vpop.f32.mrf.mxu0
      %v2403 = vadd.f32 %v2139, %v2402
      %2404 = vdwg.mxu0
      %2405 = vmatpush.msra.mxu0 0.0
      %2406 = vmatpush.msra.mxu0 0.0
      %2407 = vmatpush.msra.mxu0 0.0
      %2408 = vmatpush.msra.mxu0 0.0
      %2409 = vmatpush.msra.mxu0 0.0
      %2410 = vmatpush.msra.mxu0 %v2133
      %2411 = vmatpush.msra.mxu0 %v2125
      %2412 = vmatpush.msra.mxu0 %v2117
      %2413 = vmatpush.msra.mxu0 %v2109
      %2414 = vmatpush.msra.mxu0 %v2101
      %2415 = vmatpush.msra.mxu0 %v2093
      %2416 = vmatpush.msra.mxu0 %v2085
      %2417 = vmatpush.msra.mxu0 %v2077
      %2418 = vmatpush.msra.mxu0 %v2069
      %2419 = vmatpush.msra.mxu0 %v2061
      %2420 = vmatpush.msra.mxu0 %v2053
      %2421 = vmatmul.f32.gmra.mxu0 %v2143
      %v2422 = vpop.f32.mrf.mxu0
      %v2423 = vadd.f32 %v2403, %v2422
      %2424 = vdwg.mxu0
      %2425 = vmatpush.msra.mxu0 %v2046
      %2426 = vmatpush.msra.mxu0 %v2038
      %2427 = vmatpush.msra.mxu0 %v2030
      %2428 = vmatpush.msra.mxu0 %v2022
      %2429 = vmatpush.msra.mxu0 %v2014
      %2430 = vmatpush.msra.mxu0 %v2006
      %2431 = vmatpush.msra.mxu0 %v1998
      %2432 = vmatpush.msra.mxu0 %v1990
      %2433 = vmatpush.msra.mxu0 %v1982
      %2434 = vmatpush.msra.mxu0 %v1974
      %2435 = vmatpush.msra.mxu0 %v1966
      %2436 = vmatpush.msra.mxu0 %v1958
      %2437 = vmatpush.msra.mxu0 %v1950
      %2438 = vmatpush.msra.mxu0 %v1942
      %2439 = vmatpush.msra.mxu0 %v1934
      %2440 = vmatpush.msra.mxu0 %v1926
      %2441 = vmatmul.f32.gmra.mxu0 %v1917
      %v2442 = vpop.f32.mrf.mxu0
      %v2443 = vadd.f32 %v2139, %v2442
      %2444 = vdwg.mxu0
      %2445 = vmatpush.msra.mxu0 0.0
      %2446 = vmatpush.msra.mxu0 0.0
      %2447 = vmatpush.msra.mxu0 0.0
      %2448 = vmatpush.msra.mxu0 0.0
      %2449 = vmatpush.msra.mxu0 0.0
      %2450 = vmatpush.msra.mxu0 %v2134
      %2451 = vmatpush.msra.mxu0 %v2126
      %2452 = vmatpush.msra.mxu0 %v2118
      %2453 = vmatpush.msra.mxu0 %v2110
      %2454 = vmatpush.msra.mxu0 %v2102
      %2455 = vmatpush.msra.mxu0 %v2094
      %2456 = vmatpush.msra.mxu0 %v2086
      %2457 = vmatpush.msra.mxu0 %v2078
      %2458 = vmatpush.msra.mxu0 %v2070
      %2459 = vmatpush.msra.mxu0 %v2062
      %2460 = vmatpush.msra.mxu0 %v2054
      %2461 = vmatmul.f32.gmra.mxu0 %v2143
      %v2462 = vpop.f32.mrf.mxu0
      %v2463 = vadd.f32 %v2443, %v2462
      %2464 = vdwg.mxu0
      %2465 = vst [vmem:[%s229] sm:$0xff] %v2183
      %2466 = vst [vmem:[%s229 + $0x8] sm:$0xff] %v2223
      %2467 = vst [vmem:[%s229 + $0x10] sm:$0xff] %v2263
      %2468 = vst [vmem:[%s229 + $0x18] sm:$0xff] %v2303
      %2469 = vst [vmem:[%s229 + $0x20] sm:$0xff] %v2343
      %2470 = vst [vmem:[%s229 + $0x28] sm:$0xff] %v2383
      %2471 = vst [vmem:[%s229 + $0x30] sm:$0xff] %v2423
      %2472 = vst [vmem:[%s229 + $0x38] sm:$0xff] %v2463
      %s2473 = smul.u32 8, %s20
      %p2474 = scmp.lt.s32.totalorder %s19, 1
      %s2475 = scalar_select %p2474, %s19, 1
      %p2476 = scmp.lt.s32.totalorder %s2473, 7
      %s2477 = scalar_select %p2476, %s2473, 7
      %s2478 = smul.addr %s2475, 8
      %s2479 = sadd.s32 %s2477, %s2478
      %s2480 = smul.addr %s2479, 8
      %s2481 = scalar_lea.vmem %s4, %s2480
      // Predicated region
      $region52: #{conv3d_pallas.1} parent=31 // pred_check
        %p2482 = pneg %p117
      $region53: #{conv3d_pallas.1} parent=31 // pred_check_branch
        %2484 = sbr.rel (%p2482) target = $region55
      $region54: #{conv3d_pallas.1} parent=31 // pred_region
        %s2485 = smul.u32 8, %s20
      $region55: #{conv3d_pallas.1} parent=31 // pred_fallthru
        _
    $region32: #{conv3d_pallas.1} parent=5 // pred_fallthru
      _
    %p2486 = scmp.le.s32.totalorder 2, %s10
    // Predicated region
    $region56: #{conv3d_pallas.1} parent=5 // pred_check
      %p2487 = pneg %p2486
    $region57: #{conv3d_pallas.1} parent=5 // pred_check_branch
      %2489 = sbr.rel (%p2487) target = $region59
    $region58: #{conv3d_pallas.1} parent=5 // pred_region
      %s2490 = ssub.s32 %s10, 2
      // Predicated region
      $region60: #{conv3d_pallas.1} parent=58 // pred_check
        %p2491 = pneg %p123
      $region61: #{conv3d_pallas.1} parent=58 // pred_check_branch
        %2493 = sbr.rel (%p2491) target = $region63
      $region62: #{conv3d_pallas.1} parent=58 // pred_region
        %s2494 = smul.u32 8, %s22
        %p2495 = scmp.lt.s32.totalorder %s21, 1
        %s2496 = scalar_select %p2495, %s21, 1
        %p2497 = scmp.lt.s32.totalorder %s2494, 7
        %s2498 = scalar_select %p2497, %s2494, 7
        %s2499 = smul.addr %s2496, 8
        %s2500 = sadd.s32 %s2498, %s2499
        %s2501 = smul.addr %s2500, 8
        %s2502 = scalar_lea.vmem %s4, %s2501
      $region63: #{conv3d_pallas.1} parent=58 // pred_fallthru
        _
    $region59: #{conv3d_pallas.1} parent=5 // pred_fallthru
      _
  $region6: #{conv3d_pallas.1} parent=0 // loop_footer
    %s14 = sadd.s32 1, %s10
  $region7: #{conv3d_pallas.1} parent=0 // loop_footer_branch
    %9 = sbr.rel target = $region3
  $region8: #{conv3d_pallas.1} parent=0 // loop_exit
    _
  %2503 = vsyncmov [#allocation5]
  %s2504 = vpop.sfrf %2503
  %p2505 = scmp.eq.s32.totalorder %s2504, 0
  %p2506 = pneg %p2505
  %2508 = shalt.err (%p2506)

</llo_original>
